<compile_context>
chip_gen: v5e
topology: v5e:2x2
jax: 0.10.0
libtpu: 0.0.40
codegen_flags: <defaults>
</compile_context>

<pallas_src>
import functools

import jax
import jax.numpy as jnp
from jax.experimental import pallas as pl
from jax.experimental.pallas import tpu as pltpu

_VMEM_LIMIT = 48 * 1024 * 1024        # safe on v5e/v6e (128 MiB) and v7x (64 MiB)
_TILE_BUDGET = 20 * 1024 * 1024       # per-call tile budget (double-buffered)


# ----------------------------------------------------------------------------
# Kernel A: fused matmul (1x1 conv) + per-channel affine (+ residual) (+ ReLU)
# ----------------------------------------------------------------------------
def _mm_affine_kernel(x_ref, w_ref, scale_ref, shift_ref, *rest, relu, has_residual):
    if has_residual:
        res_ref, o_ref = rest
    else:
        (o_ref,) = rest
    acc = jnp.dot(x_ref[...], w_ref[...], preferred_element_type=jnp.float32)
    out = acc * scale_ref[...] + shift_ref[...]
    if has_residual:
        out = out + res_ref[...]
    if relu:
        out = jnp.maximum(out, 0.0)
    o_ref[...] = out.astype(o_ref.dtype)


def _pick_tile_m(m, cin, cout, has_residual):
    """Largest row tile whose double-buffered VMEM footprint fits the budget."""
    bytes_per_row = 4 * (cin + cout + (cout if has_residual else 0))
    fixed = 4 * (cin * cout + 4 * cout)          # weights + scale/shift (approx)
    for tm in (1024, 512, 256, 128, 64, 32, 16, 8):
        if tm > max(m, 8):
            continue
        if 2 * tm * bytes_per_row + 2 * fixed <= _TILE_BUDGET:
            return tm
    return 8


def conv1x1_fused(x, w, scale, shift, residual=None, relu=False):
    """out = maybe_relu((x @ w) * scale + shift [+ residual]); x:(M,Cin), w:(Cin,Cout)."""
    M, Cin = x.shape
    Cout = w.shape[1]
    has_res = residual is not None

    tm = _pick_tile_m(M, Cin, Cout, has_res)
    Mp = pl.cdiv(M, tm) * tm
    if Mp != M:                                   # pad rows -> (8,128) safe tiling
        x = jnp.pad(x, ((0, Mp - M), (0, 0)))
        if has_res:
            residual = jnp.pad(residual, ((0, Mp - M), (0, 0)))

    inputs = [x, w, scale.reshape(1, -1), shift.reshape(1, -1)]
    in_specs = [
        pl.BlockSpec((tm, Cin), lambda i: (i, 0)),
        pl.BlockSpec((Cin, Cout), lambda i: (0, 0)),
        pl.BlockSpec((1, Cout), lambda i: (0, 0)),
        pl.BlockSpec((1, Cout), lambda i: (0, 0)),
    ]
    if has_res:
        inputs.append(residual)
        in_specs.append(pl.BlockSpec((tm, Cout), lambda i: (i, 0)))

    out = pl.pallas_call(
        functools.partial(_mm_affine_kernel, relu=relu, has_residual=has_res),
        out_shape=jax.ShapeDtypeStruct((Mp, Cout), x.dtype),
        grid_spec=pltpu.PrefetchScalarGridSpec(
            num_scalar_prefetch=0,
            grid=(Mp // tm,),
            in_specs=in_specs,
            out_specs=pl.BlockSpec((tm, Cout), lambda i: (i, 0)),
        ),
        compiler_params=pltpu.CompilerParams(
            dimension_semantics=("parallel",), vmem_limit_bytes=_VMEM_LIMIT),
    )(*inputs)
    return out[:M] if Mp != M else out


# ----------------------------------------------------------------------------
# Kernel A2: fused g|theta|phi projection.  x is read from HBM once, one wide
# (C, 3*Ci) matmul, and the three projections are written as separate outputs
# so downstream kernels get them with no extra slicing pass in HBM.
# ----------------------------------------------------------------------------
def _proj_gtp_kernel(x_ref, w_ref, b_ref, g_ref, th_ref, ph_ref, *, ci):
    acc = jnp.dot(x_ref[...], w_ref[...], preferred_element_type=jnp.float32)
    acc = acc + b_ref[...]
    g_ref[...] = acc[:, :ci].astype(g_ref.dtype)
    th_ref[...] = acc[:, ci:2 * ci].astype(th_ref.dtype)
    ph_ref[...] = acc[:, 2 * ci:].astype(ph_ref.dtype)


def project_gtp(x, w, b, ci):
    """x:(M,C) @ w:(C,3Ci) + b  ->  (g, theta, phi), each (M, Ci)."""
    M, Cin = x.shape
    tm = _pick_tile_m(M, Cin, 2 * 3 * ci, False)   # 3 narrow outputs ~ one wide one
    Mp = pl.cdiv(M, tm) * tm
    if Mp != M:
        x = jnp.pad(x, ((0, Mp - M), (0, 0)))

    outs = pl.pallas_call(
        functools.partial(_proj_gtp_kernel, ci=ci),
        out_shape=tuple(jax.ShapeDtypeStruct((Mp, ci), x.dtype) for _ in range(3)),
        grid_spec=pltpu.PrefetchScalarGridSpec(
            num_scalar_prefetch=0,
            grid=(Mp // tm,),
            in_specs=[
                pl.BlockSpec((tm, Cin), lambda i: (i, 0)),
                pl.BlockSpec((Cin, 3 * ci), lambda i: (0, 0)),
                pl.BlockSpec((1, 3 * ci), lambda i: (0, 0)),
            ],
            out_specs=[pl.BlockSpec((tm, ci), lambda i: (i, 0)) for _ in range(3)],
        ),
        compiler_params=pltpu.CompilerParams(
            dimension_semantics=("parallel",), vmem_limit_bytes=_VMEM_LIMIT),
    )(x, w, b)
    g_o, th_o, ph_o = outs
    if Mp != M:
        g_o, th_o, ph_o = g_o[:M], th_o[:M], ph_o[:M]
    return g_o, th_o, ph_o


# ----------------------------------------------------------------------------
# Kernel B: grouped non-local attention (flash-style online softmax over kv)
# fused with the W 1x1 conv + folded BN + residual(+x) + ReLU.
#   theta, phi, g : (B, N, Ci)   x : (B, N, C)   W : (Ci, C)  ->  z : (B, N, C)
# Groups are contiguous Cg-channel slices (matches torch.split channel order).
# ----------------------------------------------------------------------------
def _attn_w_kernel(th_ref, ph_ref, g_ref, x_ref, w_ref, scale_ref, shift_ref,
                   o_ref, m_sc, l_sc, acc_sc, *, num_group, cg):
    ki = pl.program_id(2)

    @pl.when(ki == 0)
    def _():
        m_sc[...] = jnp.full_like(m_sc, -jnp.inf)
        l_sc[...] = jnp.zeros_like(l_sc)
        acc_sc[...] = jnp.zeros_like(acc_sc)

    tx = th_ref[0]                         # (tq,  Ci)
    px = ph_ref[0]                         # (tkv, Ci)
    gx = g_ref[0]                          # (tkv, Ci)

    for g in range(num_group):             # static loop; Cg-channel slices
        c0, c1 = g * cg, (g + 1) * cg
        # scores_g = theta_g . phi_g^T  (contract the Cg channel dim)
        s = jax.lax.dot_general(tx[:, c0:c1], px[:, c0:c1],
                                (((1,), (1,)), ((), ())),
                                preferred_element_type=jnp.float32)    # (tq, tkv)
        m_prev = m_sc[:, g:g + 1]                                      # (tq, 1)
        m_new = jnp.maximum(m_prev, jnp.max(s, axis=-1, keepdims=True))
        alpha = jnp.exp(m_prev - m_new)
        p = jnp.exp(s - m_new)
        # l is stored replicated across the group's Cg columns so the finalize
        # normalization is a single elementwise multiply (no lane repeat).
        l_sc[:, c0:c1] = alpha * l_sc[:, c0:c1] + jnp.sum(p, axis=-1, keepdims=True)
        acc_sc[:, c0:c1] = alpha * acc_sc[:, c0:c1] + jnp.dot(
            p, gx[:, c0:c1], preferred_element_type=jnp.float32)
        m_sc[:, g:g + 1] = m_new

    @pl.when(ki == pl.num_programs(2) - 1)
    def _():
        y = acc_sc[...] * pl.reciprocal(l_sc[...], approx=True)          # (tq, Ci)
        z = jnp.dot(y, w_ref[...], preferred_element_type=jnp.float32)   # (tq, C)
        z = z * scale_ref[...] + shift_ref[...] + x_ref[0]
        o_ref[0] = jnp.maximum(z, 0.0).astype(o_ref.dtype)


def _pick_seq_tile(n, cap):
    t = cap
    while t >= 8:
        if n % t == 0:
            return t
        t //= 2
    return n        # N not a multiple of 8 -> use the full (legal) extent
    # TODO(synk): add masked ragged-tail handling instead of full-N fallback.


def attention_w_fused(theta, phi, gx, x_res, w, scale, shift, num_group):
    """z = relu(BN(W @ grouped_attention(theta, phi, g)) + x);  all (B, N, *)."""
    B, N, Ci = theta.shape
    C = w.shape[1]
    cg = Ci // num_group

    tq = _pick_seq_tile(N, 256)
    tkv = _pick_seq_tile(N, 512)

    def est(tq_, tkv_):                      # rough padded-VMEM estimate (bytes)
        lane = lambda c: max(c, 128)
        per_step = tq_ * lane(Ci) + 2 * tkv_ * lane(Ci) + 2 * tq_ * lane(C)
        fixed = Ci * lane(C) + 2 * lane(C)
        scratch = tq_ * (lane(num_group) + 2 * lane(Ci))
        return 4 * (2 * (per_step + fixed) + scratch)

    while est(tq, tkv) > _TILE_BUDGET and tkv > 8 and N % (tkv // 2) == 0:
        tkv //= 2
    while est(tq, tkv) > _TILE_BUDGET and tq > 8 and N % (tq // 2) == 0:
        tq //= 2

    grid = (B, N // tq, N // tkv)
    return pl.pallas_call(
        functools.partial(_attn_w_kernel, num_group=num_group, cg=cg),
        out_shape=jax.ShapeDtypeStruct((B, N, C), theta.dtype),
        grid_spec=pltpu.PrefetchScalarGridSpec(
            num_scalar_prefetch=0,
            grid=grid,
            in_specs=[
                pl.BlockSpec((1, tq, Ci), lambda b, qi, ki: (b, qi, 0)),   # theta
                pl.BlockSpec((1, tkv, Ci), lambda b, qi, ki: (b, ki, 0)),  # phi
                pl.BlockSpec((1, tkv, Ci), lambda b, qi, ki: (b, ki, 0)),  # g
                pl.BlockSpec((1, tq, C), lambda b, qi, ki: (b, qi, 0)),    # x residual
                pl.BlockSpec((Ci, C), lambda b, qi, ki: (0, 0)),           # W
                pl.BlockSpec((1, C), lambda b, qi, ki: (0, 0)),            # BN scale
                pl.BlockSpec((1, C), lambda b, qi, ki: (0, 0)),            # BN shift
            ],
            out_specs=pl.BlockSpec((1, tq, C), lambda b, qi, ki: (b, qi, 0)),
            scratch_shapes=[pltpu.VMEM((tq, num_group), jnp.float32),   # m
                            pltpu.VMEM((tq, Ci), jnp.float32),          # l (replicated)
                            pltpu.VMEM((tq, Ci), jnp.float32)],         # acc (unnormalized y)
        ),
        compiler_params=pltpu.CompilerParams(
            dimension_semantics=("parallel", "parallel", "arbitrary"),
            vmem_limit_bytes=_VMEM_LIMIT),
    )(theta, phi, gx, x_res, w, scale, shift)


# ----------------------------------------------------------------------------
# Kernel C: haloed 3x3 conv (pad=1) + BN affine + ReLU, one batch per grid step.
# The padded image is flattened to (P, Cf) rows; the 9 taps are shifted
# (H*Wp, Cf) windows of that flat buffer (contiguous), accumulated in f32.
# Two garbage columns per output row (from the width wrap) are sliced off in
# the wrapper.
# ----------------------------------------------------------------------------
def _conv3x3_kernel(x_ref, w_ref, scale_ref, shift_ref, o_ref, *, H, Wp):
    L = H * Wp
    co = w_ref.shape[2]
    acc = jnp.zeros((L, co), jnp.float32)
    for dy in range(3):
        for dx in range(3):
            off = dy * Wp + dx
            patch = x_ref[0, off:off + L, :]                 # (L, Cf), shifted window
            acc = acc + jnp.dot(patch, w_ref[dy * 3 + dx],
                                preferred_element_type=jnp.float32)
    out = jnp.maximum(acc * scale_ref[...] + shift_ref[...], 0.0)
    o_ref[0] = out.astype(o_ref.dtype)


def conv3x3_bn_relu(x_nhwc, w_hwio, scale, shift):
    """3x3 'SAME' conv + folded BN + ReLU.  x:(B,H,W,Cf), w:(3,3,Cf,Co) -> (B*H*W, Co)."""
    B, H, W, Cf = x_nhwc.shape
    Co = w_hwio.shape[-1]
    Wp = W + 2
    # 1 pad row on top, 2 on the bottom (the extra row only feeds the discarded
    # garbage columns and keeps the last shifted windows in bounds), 1 col each side.
    xp = jnp.pad(x_nhwc, ((0, 0), (1, 2), (1, 1), (0, 0)))
    P = (H + 3) * Wp
    L = H * Wp
    x_flat = xp.reshape(B, P, Cf)
    w9 = w_hwio.reshape(9, Cf, Co)

    out = pl.pallas_call(
        functools.partial(_conv3x3_kernel, H=H, Wp=Wp),
        out_shape=jax.ShapeDtypeStruct((B, L, Co), x_nhwc.dtype),
        grid_spec=pltpu.PrefetchScalarGridSpec(
            num_scalar_prefetch=0,
            grid=(B,),
            in_specs=[
                pl.BlockSpec((1, P, Cf), lambda b: (b, 0, 0)),
                pl.BlockSpec((9, Cf, Co), lambda b: (0, 0, 0)),
                pl.BlockSpec((1, Co), lambda b: (0, 0)),
                pl.BlockSpec((1, Co), lambda b: (0, 0)),
            ],
            out_specs=pl.BlockSpec((1, L, Co), lambda b: (b, 0, 0)),
        ),
        compiler_params=pltpu.CompilerParams(
            dimension_semantics=("parallel",), vmem_limit_bytes=_VMEM_LIMIT),
    )(x_flat, w9, scale.reshape(1, -1), shift.reshape(1, -1))
    # TODO(synk): row-tile with manual halo DMA when (H+3)*(W+2)*Cf no longer fits VMEM.
    return out.reshape(B, H, Wp, Co)[:, :, :W, :].reshape(B * H * W, Co)


# ----------------------------------------------------------------------------
# Parameters (deterministic, synthetic)
# ----------------------------------------------------------------------------
def _bn_fold(d, eps=1e-5):
    s = d["gamma"] / jnp.sqrt(d["var"] + eps)
    t = d["beta"] - d["mean"] * s
    return s, t


def make_params(key, in_channels):
    ci = in_channels // 2          # inter_channels
    cf = in_channels // 4          # FPNFFConv inter_channels
    ks = jax.random.split(key, 16)

    def rnd(k, shape, s=0.1):
        return s * jax.random.normal(k, shape, dtype=jnp.float32)

    def bn_rand(k, c):
        k1, k2, k3, k4 = jax.random.split(k, 4)
        return dict(gamma=1.0 + 0.1 * jax.random.normal(k1, (c,), jnp.float32),
                    beta=0.1 * jax.random.normal(k2, (c,), jnp.float32),
                    mean=0.1 * jax.random.normal(k3, (c,), jnp.float32),
                    var=1.0 + 0.1 * jnp.abs(jax.random.normal(k4, (c,), jnp.float32)))

    p = {}
    p["g_w"] = rnd(ks[0], (in_channels, ci));     p["g_b"] = rnd(ks[1], (ci,))
    p["theta_w"] = rnd(ks[2], (in_channels, ci)); p["theta_b"] = rnd(ks[3], (ci,))
    p["phi_w"] = rnd(ks[4], (in_channels, ci));   p["phi_b"] = rnd(ks[5], (ci,))
    # PyTorch __init__ zero-inits W; we use non-zero weights so the test also
    # exercises the attention path (forward semantics are parameter-independent).
    p["W_w"] = rnd(ks[6], (ci, in_channels));     p["W_b"] = rnd(ks[7], (in_channels,))
    p["W_bn"] = bn_rand(ks[8], in_channels)
    # FPNFFConv (all convs bias-free)
    p["ff1_w"] = rnd(ks[9], (in_channels, cf));   p["ff1_bn"] = bn_rand(ks[10], cf)
    p["ff2_w"] = rnd(ks[11], (3, 3, cf, cf));     p["ff2_bn"] = bn_rand(ks[12], cf)  # HWIO
    p["ff3_w"] = rnd(ks[13], (cf, in_channels));  p["ff3_bn"] = bn_rand(ks[14], in_channels)
    return p


# ----------------------------------------------------------------------------
# Forward (composition of Pallas kernels; reshapes are free glue — no HBM
# transposes between the projection, attention and FFConv stages)
# ----------------------------------------------------------------------------
def nonlocal_block_forward(x_nchw, params, num_group):
    B, C, H, W = x_nchw.shape
    Ci = C // 2
    N = H * W
    M = B * N

    x_flat = jnp.transpose(x_nchw, (0, 2, 3, 1)).reshape(M, C)

    # fused g|theta|phi projection: x read once, one wide matmul, 3 outputs
    gtp_w = jnp.concatenate([params["g_w"], params["theta_w"], params["phi_w"]], axis=1)
    gtp_b = jnp.concatenate([params["g_b"], params["theta_b"], params["phi_b"]]).reshape(1, -1)
    g_flat, th_flat, ph_flat = project_gtp(x_flat, gtp_w, gtp_b, Ci)

    # grouped attention + W 1x1 conv + BN + residual(+x) + ReLU, fully fused
    ws, wt = _bn_fold(params["W_bn"])
    w_shift = params["W_b"] * ws + wt
    z_bnc = attention_w_fused(
        th_flat.reshape(B, N, Ci), ph_flat.reshape(B, N, Ci), g_flat.reshape(B, N, Ci),
        x_flat.reshape(B, N, C), params["W_w"],
        ws.reshape(1, -1), w_shift.reshape(1, -1), num_group)
    z_flat = z_bnc.reshape(M, C)

    # FPNFFConv bottleneck
    Cf = C // 4
    s1, t1 = _bn_fold(params["ff1_bn"])
    h1 = conv1x1_fused(z_flat, params["ff1_w"], s1, t1, residual=None, relu=True)   # (M, Cf)

    s2, t2 = _bn_fold(params["ff2_bn"])
    h2 = conv3x3_bn_relu(h1.reshape(B, H, W, Cf), params["ff2_w"], s2, t2)          # (M, Cf)

    s3, t3 = _bn_fold(params["ff3_bn"])
    out_flat = conv1x1_fused(h2, params["ff3_w"], s3, t3, residual=z_flat, relu=True)

    return out_flat.reshape(B, H, W, C).transpose(0, 3, 1, 2)


# ----------------------------------------------------------------------------
# Pure-JAX reference (mirrors the PyTorch forward, NCHW)
# ----------------------------------------------------------------------------
def reference_forward(x_nchw, p, num_group):
    B, C, H, W = x_nchw.shape
    Ci = C // 2
    Cg = Ci // num_group
    N = H * W
    hp = jax.lax.Precision.HIGHEST

    def conv1(x, w, b=None):
        y = jnp.einsum('bchw,cd->bdhw', x, w, precision=hp)
        if b is not None:
            y = y + b[None, :, None, None]
        return y

    def bn(x, d):
        s, t = _bn_fold(d)
        return x * s[None, :, None, None] + t[None, :, None, None]

    gx = conv1(x_nchw, p["g_w"], p["g_b"]).reshape(B, Ci, N).transpose(0, 2, 1)
    tx = conv1(x_nchw, p["theta_w"], p["theta_b"]).reshape(B, Ci, N).transpose(0, 2, 1)
    px = conv1(x_nchw, p["phi_w"], p["phi_b"]).reshape(B, Ci, N)

    ys = []
    for g in range(num_group):
        tg = tx[:, :, g * Cg:(g + 1) * Cg]
        pg = px[:, g * Cg:(g + 1) * Cg, :]
        gg = gx[:, :, g * Cg:(g + 1) * Cg]
        f = jnp.einsum('bnc,bcm->bnm', tg, pg, precision=hp)
        f = jax.nn.softmax(f, axis=2)
        yy = jnp.einsum('bnm,bmc->bnc', f, gg, precision=hp).transpose(0, 2, 1)
        ys.append(yy)
    y = jnp.concatenate(ys, axis=1).reshape(B, Ci, H, W)

    Wy = bn(conv1(y, p["W_w"], p["W_b"]), p["W_bn"])
    z = jax.nn.relu(Wy + x_nchw)

    h1 = jax.nn.relu(bn(conv1(z, p["ff1_w"]), p["ff1_bn"]))
    h2 = jax.lax.conv_general_dilated(
        h1, p["ff2_w"], window_strides=(1, 1), padding='SAME',
        dimension_numbers=('NCHW', 'HWIO', 'NCHW'), precision=hp)
    h2 = jax.nn.relu(bn(h2, p["ff2_bn"]))
    out = bn(conv1(h2, p["ff3_w"]), p["ff3_bn"])
    return jax.nn.relu(out + z)


if __name__ == "__main__":
    key = jax.random.PRNGKey(0)
    B, C, H, W = 2, 8, 8, 8      # in_channels=8 -> inter_channels=4
    num_group = 2                # inter_channels_group=2
    kx, kp = jax.random.split(key)
    x = jax.random.normal(kx, (B, C, H, W), dtype=jnp.float32)
    params = make_params(kp, C)

    fwd = jax.jit(functools.partial(nonlocal_block_forward, num_group=num_group))
    out = jax.block_until_ready(fwd(x, params))

    ref = reference_forward(x, params, num_group)
    assert out.shape == x.shape
    err = float(jnp.max(jnp.abs(out - ref)))
    assert jnp.allclose(out, ref, atol=5e-3, rtol=5e-3), err
    print("KERNEL_OK")
</pallas_src>

<mosaic_0001>
module attributes {stable_mosaic.version = 11 : i64} {
  func.func @_mm_affine_kernel(%arg0: i32, %arg1: memref<128x8xf32, #tpu.memory_space<vmem>>, %arg2: memref<8x2xf32, #tpu.memory_space<vmem>>, %arg3: memref<1x2xf32, #tpu.memory_space<vmem>>, %arg4: memref<1x2xf32, #tpu.memory_space<vmem>>, %arg5: memref<128x2xf32, #tpu.memory_space<vmem>>) attributes {dimension_semantics = [#tpu.dimension_semantics<parallel>], iteration_bounds = array<i64: 1>, scalar_prefetch = 0 : i64, scratch_operands = 0 : i64, tpu.core_type = #tpu.core_type<tc>, window_params = [{transform_indices = @transform_0, window_bounds = array<i64: 128, 8>}, {pipeline_mode = #tpu.pipeline_mode<synchronous>, transform_indices = @transform_1, window_bounds = array<i64: 8, 2>}, {pipeline_mode = #tpu.pipeline_mode<synchronous>, transform_indices = @transform_2, window_bounds = array<i64: 1, 2>}, {pipeline_mode = #tpu.pipeline_mode<synchronous>, transform_indices = @transform_3, window_bounds = array<i64: 1, 2>}, {transform_indices = @transform_4, window_bounds = array<i64: 128, 2>}]} {
    %c0 = arith.constant 0 : index
    %c0_0 = arith.constant 0 : index
    %0 = vector.load %arg1[%c0, %c0_0] : memref<128x8xf32, #tpu.memory_space<vmem>>, vector<128x8xf32>
    %c0_1 = arith.constant 0 : index
    %c0_2 = arith.constant 0 : index
    %1 = vector.load %arg2[%c0_1, %c0_2] : memref<8x2xf32, #tpu.memory_space<vmem>>, vector<8x2xf32>
    %cst = arith.constant dense<0.000000e+00> : vector<128x2xf32>
    %2 = tpu.matmul %0, %1, %cst {dimension_numbers = #tpu.dot_dimension_numbers<[1], [0], [0], [1], [0, 0, 1, 1], [], []>} : vector<128x8xf32>, vector<8x2xf32>, vector<128x2xf32> -> vector<128x2xf32>
    %c0_3 = arith.constant 0 : index
    %c0_4 = arith.constant 0 : index
    %3 = vector.load %arg3[%c0_3, %c0_4] : memref<1x2xf32, #tpu.memory_space<vmem>>, vector<1x2xf32>
    %4 = vector.broadcast %3 : vector<1x2xf32> to vector<128x2xf32>
    %5 = arith.mulf %2, %4 : vector<128x2xf32>
    %c0_5 = arith.constant 0 : index
    %c0_6 = arith.constant 0 : index
    %6 = vector.load %arg4[%c0_5, %c0_6] : memref<1x2xf32, #tpu.memory_space<vmem>>, vector<1x2xf32>
    %7 = vector.broadcast %6 : vector<1x2xf32> to vector<128x2xf32>
    %8 = arith.addf %5, %7 : vector<128x2xf32>
    %cst_7 = arith.constant 0.000000e+00 : f32
    %9 = vector.broadcast %cst_7 : f32 to vector<128x2xf32>
    %10 = arith.maximumf %8, %9 : vector<128x2xf32>
    %c0_8 = arith.constant 0 : index
    %c0_9 = arith.constant 0 : index
    %11 = vector.load %arg5[%c0_8, %c0_9] : memref<128x2xf32, #tpu.memory_space<vmem>>, vector<128x2xf32>
    tpu.vector_store %arg5[%c0_8, %c0_9], %10 {strides = array<i32>} : memref<128x2xf32, #tpu.memory_space<vmem>>, vector<128x2xf32>,
    return
  }
  func.func @transform_0(%arg0: i32) -> (i32, i32) {
    %c0_i32 = arith.constant 0 : i32
    %c0_i32_0 = arith.constant 0 : i32
    return %arg0, %c0_i32 : i32, i32
  }
  func.func @transform_1(%arg0: i32) -> (i32, i32) {
    %c0_i32 = arith.constant 0 : i32
    %c0_i32_0 = arith.constant 0 : i32
    %c0_i32_1 = arith.constant 0 : i32
    return %c0_i32, %c0_i32_0 : i32, i32
  }
  func.func @transform_2(%arg0: i32) -> (i32, i32) {
    %c0_i32 = arith.constant 0 : i32
    %c0_i32_0 = arith.constant 0 : i32
    %c0_i32_1 = arith.constant 0 : i32
    return %c0_i32, %c0_i32_0 : i32, i32
  }
  func.func @transform_3(%arg0: i32) -> (i32, i32) {
    %c0_i32 = arith.constant 0 : i32
    %c0_i32_0 = arith.constant 0 : i32
    %c0_i32_1 = arith.constant 0 : i32
    return %c0_i32, %c0_i32_0 : i32, i32
  }
  func.func @transform_4(%arg0: i32) -> (i32, i32) {
    %c0_i32 = arith.constant 0 : i32
    %c0_i32_0 = arith.constant 0 : i32
    return %arg0, %c0_i32 : i32, i32
  }
}

module attributes {stable_mosaic.version = 11 : i64} {
  func.func @_proj_gtp_kernel(%arg0: i32, %arg1: memref<128x8xf32, #tpu.memory_space<vmem>>, %arg2: memref<8x12xf32, #tpu.memory_space<vmem>>, %arg3: memref<1x12xf32, #tpu.memory_space<vmem>>, %arg4: memref<128x4xf32, #tpu.memory_space<vmem>>, %arg5: memref<128x4xf32, #tpu.memory_space<vmem>>, %arg6: memref<128x4xf32, #tpu.memory_space<vmem>>) attributes {dimension_semantics = [#tpu.dimension_semantics<parallel>], iteration_bounds = array<i64: 1>, scalar_prefetch = 0 : i64, scratch_operands = 0 : i64, tpu.core_type = #tpu.core_type<tc>, window_params = [{transform_indices = @transform_0, window_bounds = array<i64: 128, 8>}, {pipeline_mode = #tpu.pipeline_mode<synchronous>, transform_indices = @transform_1, window_bounds = array<i64: 8, 12>}, {pipeline_mode = #tpu.pipeline_mode<synchronous>, transform_indices = @transform_2, window_bounds = array<i64: 1, 12>}, {transform_indices = @transform_3, window_bounds = array<i64: 128, 4>}, {transform_indices = @transform_4, window_bounds = array<i64: 128, 4>}, {transform_indices = @transform_5, window_bounds = array<i64: 128, 4>}]} {
    %c0 = arith.constant 0 : index
    %c0_0 = arith.constant 0 : index
    %0 = vector.load %arg1[%c0, %c0_0] : memref<128x8xf32, #tpu.memory_space<vmem>>, vector<128x8xf32>
    %c0_1 = arith.constant 0 : index
    %c0_2 = arith.constant 0 : index
    %1 = vector.load %arg2[%c0_1, %c0_2] : memref<8x12xf32, #tpu.memory_space<vmem>>, vector<8x12xf32>
    %cst = arith.constant dense<0.000000e+00> : vector<128x12xf32>
    %2 = tpu.matmul %0, %1, %cst {dimension_numbers = #tpu.dot_dimension_numbers<[1], [0], [0], [1], [0, 0, 1, 1], [], []>} : vector<128x8xf32>, vector<8x12xf32>, vector<128x12xf32> -> vector<128x12xf32>
    %c0_3 = arith.constant 0 : index
    %c0_4 = arith.constant 0 : index
    %3 = vector.load %arg3[%c0_3, %c0_4] : memref<1x12xf32, #tpu.memory_space<vmem>>, vector<1x12xf32>
    %4 = vector.broadcast %3 : vector<1x12xf32> to vector<128x12xf32>
    %5 = arith.addf %2, %4 : vector<128x12xf32>
    %6 = vector.extract_strided_slice %5 {offsets = [0, 0], sizes = [128, 4], strides = [1, 1]} : vector<128x12xf32> to vector<128x4xf32>
    %c0_5 = arith.constant 0 : index
    %c0_6 = arith.constant 0 : index
    %7 = vector.load %arg4[%c0_5, %c0_6] : memref<128x4xf32, #tpu.memory_space<vmem>>, vector<128x4xf32>
    tpu.vector_store %arg4[%c0_5, %c0_6], %6 {strides = array<i32>} : memref<128x4xf32, #tpu.memory_space<vmem>>, vector<128x4xf32>,
    %8 = vector.extract_strided_slice %5 {offsets = [0, 4], sizes = [128, 4], strides = [1, 1]} : vector<128x12xf32> to vector<128x4xf32>
    %c0_7 = arith.constant 0 : index
    %c0_8 = arith.constant 0 : index
    %9 = vector.load %arg5[%c0_7, %c0_8] : memref<128x4xf32, #tpu.memory_space<vmem>>, vector<128x4xf32>
    tpu.vector_store %arg5[%c0_7, %c0_8], %8 {strides = array<i32>} : memref<128x4xf32, #tpu.memory_space<vmem>>, vector<128x4xf32>,
    %10 = vector.extract_strided_slice %5 {offsets = [0, 8], sizes = [128, 4], strides = [1, 1]} : vector<128x12xf32> to vector<128x4xf32>
    %c0_9 = arith.constant 0 : index
    %c0_10 = arith.constant 0 : index
    %11 = vector.load %arg6[%c0_9, %c0_10] : memref<128x4xf32, #tpu.memory_space<vmem>>, vector<128x4xf32>
    tpu.vector_store %arg6[%c0_9, %c0_10], %10 {strides = array<i32>} : memref<128x4xf32, #tpu.memory_space<vmem>>, vector<128x4xf32>,
    return
  }
  func.func @transform_0(%arg0: i32) -> (i32, i32) {
    %c0_i32 = arith.constant 0 : i32
    %c0_i32_0 = arith.constant 0 : i32
    return %arg0, %c0_i32 : i32, i32
  }
  func.func @transform_1(%arg0: i32) -> (i32, i32) {
    %c0_i32 = arith.constant 0 : i32
    %c0_i32_0 = arith.constant 0 : i32
    %c0_i32_1 = arith.constant 0 : i32
    return %c0_i32, %c0_i32_0 : i32, i32
  }
  func.func @transform_2(%arg0: i32) -> (i32, i32) {
    %c0_i32 = arith.constant 0 : i32
    %c0_i32_0 = arith.constant 0 : i32
    %c0_i32_1 = arith.constant 0 : i32
    return %c0_i32, %c0_i32_0 : i32, i32
  }
  func.func @transform_3(%arg0: i32) -> (i32, i32) {
    %c0_i32 = arith.constant 0 : i32
    %c0_i32_0 = arith.constant 0 : i32
    return %arg0, %c0_i32 : i32, i32
  }
  func.func @transform_4(%arg0: i32) -> (i32, i32) {
    %c0_i32 = arith.constant 0 : i32
    %c0_i32_0 = arith.constant 0 : i32
    return %arg0, %c0_i32 : i32, i32
  }
  func.func @transform_5(%arg0: i32) -> (i32, i32) {
    %c0_i32 = arith.constant 0 : i32
    %c0_i32_0 = arith.constant 0 : i32
    return %arg0, %c0_i32 : i32, i32
  }
}

module attributes {stable_mosaic.version = 11 : i64} {
  func.func @_attn_w_kernel(%arg0: i32, %arg1: i32, %arg2: i32, %arg3: memref<1x64x4xf32, #tpu.memory_space<vmem>>, %arg4: memref<1x64x4xf32, #tpu.memory_space<vmem>>, %arg5: memref<1x64x4xf32, #tpu.memory_space<vmem>>, %arg6: memref<1x64x8xf32, #tpu.memory_space<vmem>>, %arg7: memref<4x8xf32, #tpu.memory_space<vmem>>, %arg8: memref<1x8xf32, #tpu.memory_space<vmem>>, %arg9: memref<1x8xf32, #tpu.memory_space<vmem>>, %arg10: memref<1x64x8xf32, #tpu.memory_space<vmem>>, %arg11: memref<64x2xf32, #tpu.memory_space<vmem>>, %arg12: memref<64x4xf32, #tpu.memory_space<vmem>>, %arg13: memref<64x4xf32, #tpu.memory_space<vmem>>) attributes {dimension_semantics = [#tpu.dimension_semantics<parallel>, #tpu.dimension_semantics<parallel>, #tpu.dimension_semantics<arbitrary>], iteration_bounds = array<i64: 2, 1, 1>, scalar_prefetch = 0 : i64, scratch_operands = 3 : i64, tpu.core_type = #tpu.core_type<tc>, window_params = [{transform_indices = @transform_0, window_bounds = array<i64: 1, 64, 4>}, {transform_indices = @transform_1, window_bounds = array<i64: 1, 64, 4>}, {transform_indices = @transform_2, window_bounds = array<i64: 1, 64, 4>}, {transform_indices = @transform_3, window_bounds = array<i64: 1, 64, 8>}, {pipeline_mode = #tpu.pipeline_mode<synchronous>, transform_indices = @transform_4, window_bounds = array<i64: 4, 8>}, {pipeline_mode = #tpu.pipeline_mode<synchronous>, transform_indices = @transform_5, window_bounds = array<i64: 1, 8>}, {pipeline_mode = #tpu.pipeline_mode<synchronous>, transform_indices = @transform_6, window_bounds = array<i64: 1, 8>}, {transform_indices = @transform_7, window_bounds = array<i64: 1, 64, 8>}]} {
    %c0_i32 = arith.constant 0 : i32
    %0 = arith.cmpi eq, %arg2, %c0_i32 : i32
    %1 = arith.extui %0 : i1 to i32
    %c0_i32_0 = arith.constant 0 : i32
    %2 = arith.cmpi ne, %1, %c0_i32_0 : i32
    scf.if %2 {
      %cst_40 = arith.constant 0xFF800000 : f32
      %68 = vector.broadcast %cst_40 : f32 to vector<64x2xf32>
      %c0_41 = arith.constant 0 : index
      %c0_42 = arith.constant 0 : index
      %69 = vector.load %arg11[%c0_41, %c0_42] : memref<64x2xf32, #tpu.memory_space<vmem>>, vector<64x2xf32>
      tpu.vector_store %arg11[%c0_41, %c0_42], %68 {strides = array<i32>} : memref<64x2xf32, #tpu.memory_space<vmem>>, vector<64x2xf32>,
      %cst_43 = arith.constant 0.000000e+00 : f32
      %70 = vector.broadcast %cst_43 : f32 to vector<64x4xf32>
      %c0_44 = arith.constant 0 : index
      %c0_45 = arith.constant 0 : index
      %71 = vector.load %arg12[%c0_44, %c0_45] : memref<64x4xf32, #tpu.memory_space<vmem>>, vector<64x4xf32>
      tpu.vector_store %arg12[%c0_44, %c0_45], %70 {strides = array<i32>} : memref<64x4xf32, #tpu.memory_space<vmem>>, vector<64x4xf32>,
      %cst_46 = arith.constant 0.000000e+00 : f32
      %72 = vector.broadcast %cst_46 : f32 to vector<64x4xf32>
      %c0_47 = arith.constant 0 : index
      %c0_48 = arith.constant 0 : index
      %73 = vector.load %arg13[%c0_47, %c0_48] : memref<64x4xf32, #tpu.memory_space<vmem>>, vector<64x4xf32>
      tpu.vector_store %arg13[%c0_47, %c0_48], %72 {strides = array<i32>} : memref<64x4xf32, #tpu.memory_space<vmem>>, vector<64x4xf32>,
    } else {
    }
    %c0 = arith.constant 0 : index
    %c0_1 = arith.constant 0 : index
    %c0_2 = arith.constant 0 : index
    %3 = vector.load %arg3[%c0, %c0_1, %c0_2] : memref<1x64x4xf32, #tpu.memory_space<vmem>>, vector<1x64x4xf32>
    %4 = vector.shape_cast %3 : vector<1x64x4xf32> to vector<64x4xf32>
    %c0_3 = arith.constant 0 : index
    %c0_4 = arith.constant 0 : index
    %c0_5 = arith.constant 0 : index
    %5 = vector.load %arg4[%c0_3, %c0_4, %c0_5] : memref<1x64x4xf32, #tpu.memory_space<vmem>>, vector<1x64x4xf32>
    %6 = vector.shape_cast %5 : vector<1x64x4xf32> to vector<64x4xf32>
    %c0_6 = arith.constant 0 : index
    %c0_7 = arith.constant 0 : index
    %c0_8 = arith.constant 0 : index
    %7 = vector.load %arg5[%c0_6, %c0_7, %c0_8] : memref<1x64x4xf32, #tpu.memory_space<vmem>>, vector<1x64x4xf32>
    %8 = vector.shape_cast %7 : vector<1x64x4xf32> to vector<64x4xf32>
    %9 = vector.extract_strided_slice %4 {offsets = [0, 0], sizes = [64, 2], strides = [1, 1]} : vector<64x4xf32> to vector<64x2xf32>
    %10 = vector.extract_strided_slice %6 {offsets = [0, 0], sizes = [64, 2], strides = [1, 1]} : vector<64x4xf32> to vector<64x2xf32>
    %cst = arith.constant dense<0.000000e+00> : vector<64x64xf32>
    %11 = tpu.matmul %9, %10, %cst {dimension_numbers = #tpu.dot_dimension_numbers<[1], [1], [0], [0], [0, 0, 1, 0], [], []>} : vector<64x2xf32>, vector<64x2xf32>, vector<64x64xf32> -> vector<64x64xf32>
    %c0_9 = arith.constant 0 : index
    %c0_10 = arith.constant 0 : index
    %12 = vector.load %arg11[%c0_9, %c0_10] : memref<64x2xf32, #tpu.memory_space<vmem>>, vector<64x1xf32>
    %cst_11 = arith.constant dense<0xFF800000> : vector<64xf32>
    %13 = vector.multi_reduction <maximumf>, %11, %cst_11 [1] : vector<64x64xf32> to vector<64xf32>
    %14 = vector.shape_cast %13 : vector<64xf32> to vector<64x1xf32>
    %15 = arith.maximumf %12, %14 : vector<64x1xf32>
    %16 = arith.subf %12, %15 : vector<64x1xf32>
    %17 = math.exp %16 : vector<64x1xf32>
    %18 = vector.broadcast %15 : vector<64x1xf32> to vector<64x64xf32>
    %19 = arith.subf %11, %18 : vector<64x64xf32>
    %20 = math.exp %19 : vector<64x64xf32>
    %c0_12 = arith.constant 0 : index
    %c0_13 = arith.constant 0 : index
    %21 = vector.load %arg12[%c0_12, %c0_13] : memref<64x4xf32, #tpu.memory_space<vmem>>, vector<64x2xf32>
    %22 = vector.broadcast %17 : vector<64x1xf32> to vector<64x2xf32>
    %23 = arith.mulf %22, %21 : vector<64x2xf32>
    %cst_14 = arith.constant dense<0.000000e+00> : vector<64xf32>
    %24 = vector.multi_reduction <add>, %20, %cst_14 [1] : vector<64x64xf32> to vector<64xf32>
    %25 = vector.shape_cast %24 : vector<64xf32> to vector<64x1xf32>
    %26 = vector.broadcast %25 : vector<64x1xf32> to vector<64x2xf32>
    %27 = arith.addf %23, %26 : vector<64x2xf32>
    %c0_15 = arith.constant 0 : index
    %c0_16 = arith.constant 0 : index
    %28 = vector.load %arg12[%c0_15, %c0_16] : memref<64x4xf32, #tpu.memory_space<vmem>>, vector<64x2xf32>
    tpu.vector_store %arg12[%c0_15, %c0_16], %27 {strides = array<i32>} : memref<64x4xf32, #tpu.memory_space<vmem>>, vector<64x2xf32>,
    %c0_17 = arith.constant 0 : index
    %c0_18 = arith.constant 0 : index
    %29 = vector.load %arg13[%c0_17, %c0_18] : memref<64x4xf32, #tpu.memory_space<vmem>>, vector<64x2xf32>
    %30 = vector.broadcast %17 : vector<64x1xf32> to vector<64x2xf32>
    %31 = arith.mulf %30, %29 : vector<64x2xf32>
    %32 = vector.extract_strided_slice %8 {offsets = [0, 0], sizes = [64, 2], strides = [1, 1]} : vector<64x4xf32> to vector<64x2xf32>
    %cst_19 = arith.constant dense<0.000000e+00> : vector<64x2xf32>
    %33 = tpu.matmul %20, %32, %cst_19 {dimension_numbers = #tpu.dot_dimension_numbers<[1], [0], [0], [1], [0, 0, 1, 1], [], []>} : vector<64x64xf32>, vector<64x2xf32>, vector<64x2xf32> -> vector<64x2xf32>
    %34 = arith.addf %31, %33 : vector<64x2xf32>
    %c0_20 = arith.constant 0 : index
    %c0_21 = arith.constant 0 : index
    %35 = vector.load %arg13[%c0_20, %c0_21] : memref<64x4xf32, #tpu.memory_space<vmem>>, vector<64x2xf32>
    tpu.vector_store %arg13[%c0_20, %c0_21], %34 {strides = array<i32>} : memref<64x4xf32, #tpu.memory_space<vmem>>, vector<64x2xf32>,
    %c0_22 = arith.constant 0 : index
    %c0_23 = arith.constant 0 : index
    %36 = vector.load %arg11[%c0_22, %c0_23] : memref<64x2xf32, #tpu.memory_space<vmem>>, vector<64x1xf32>
    tpu.vector_store %arg11[%c0_22, %c0_23], %15 {strides = array<i32>} : memref<64x2xf32, #tpu.memory_space<vmem>>, vector<64x1xf32>,
    %37 = vector.extract_strided_slice %4 {offsets = [0, 2], sizes = [64, 2], strides = [1, 1]} : vector<64x4xf32> to vector<64x2xf32>
    %38 = vector.extract_strided_slice %6 {offsets = [0, 2], sizes = [64, 2], strides = [1, 1]} : vector<64x4xf32> to vector<64x2xf32>
    %cst_24 = arith.constant dense<0.000000e+00> : vector<64x64xf32>
    %39 = tpu.matmul %37, %38, %cst_24 {dimension_numbers = #tpu.dot_dimension_numbers<[1], [1], [0], [0], [0, 0, 1, 0], [], []>} : vector<64x2xf32>, vector<64x2xf32>, vector<64x64xf32> -> vector<64x64xf32>
    %c0_25 = arith.constant 0 : index
    %c1 = arith.constant 1 : index
    %40 = vector.load %arg11[%c0_25, %c1] : memref<64x2xf32, #tpu.memory_space<vmem>>, vector<64x1xf32>
    %cst_26 = arith.constant dense<0xFF800000> : vector<64xf32>
    %41 = vector.multi_reduction <maximumf>, %39, %cst_26 [1] : vector<64x64xf32> to vector<64xf32>
    %42 = vector.shape_cast %41 : vector<64xf32> to vector<64x1xf32>
    %43 = arith.maximumf %40, %42 : vector<64x1xf32>
    %44 = arith.subf %40, %43 : vector<64x1xf32>
    %45 = math.exp %44 : vector<64x1xf32>
    %46 = vector.broadcast %43 : vector<64x1xf32> to vector<64x64xf32>
    %47 = arith.subf %39, %46 : vector<64x64xf32>
    %48 = math.exp %47 : vector<64x64xf32>
    %c0_27 = arith.constant 0 : index
    %c2 = arith.constant 2 : index
    %49 = vector.load %arg12[%c0_27, %c2] : memref<64x4xf32, #tpu.memory_space<vmem>>, vector<64x2xf32>
    %50 = vector.broadcast %45 : vector<64x1xf32> to vector<64x2xf32>
    %51 = arith.mulf %50, %49 : vector<64x2xf32>
    %cst_28 = arith.constant dense<0.000000e+00> : vector<64xf32>
    %52 = vector.multi_reduction <add>, %48, %cst_28 [1] : vector<64x64xf32> to vector<64xf32>
    %53 = vector.shape_cast %52 : vector<64xf32> to vector<64x1xf32>
    %54 = vector.broadcast %53 : vector<64x1xf32> to vector<64x2xf32>
    %55 = arith.addf %51, %54 : vector<64x2xf32>
    %c0_29 = arith.constant 0 : index
    %c2_30 = arith.constant 2 : index
    %56 = vector.load %arg12[%c0_29, %c2_30] : memref<64x4xf32, #tpu.memory_space<vmem>>, vector<64x2xf32>
    tpu.vector_store %arg12[%c0_29, %c2_30], %55 {strides = array<i32>} : memref<64x4xf32, #tpu.memory_space<vmem>>, vector<64x2xf32>,
    %c0_31 = arith.constant 0 : index
    %c2_32 = arith.constant 2 : index
    %57 = vector.load %arg13[%c0_31, %c2_32] : memref<64x4xf32, #tpu.memory_space<vmem>>, vector<64x2xf32>
    %58 = vector.broadcast %45 : vector<64x1xf32> to vector<64x2xf32>
    %59 = arith.mulf %58, %57 : vector<64x2xf32>
    %60 = vector.extract_strided_slice %8 {offsets = [0, 2], sizes = [64, 2], strides = [1, 1]} : vector<64x4xf32> to vector<64x2xf32>
    %cst_33 = arith.constant dense<0.000000e+00> : vector<64x2xf32>
    %61 = tpu.matmul %48, %60, %cst_33 {dimension_numbers = #tpu.dot_dimension_numbers<[1], [0], [0], [1], [0, 0, 1, 1], [], []>} : vector<64x64xf32>, vector<64x2xf32>, vector<64x2xf32> -> vector<64x2xf32>
    %62 = arith.addf %59, %61 : vector<64x2xf32>
    %c0_34 = arith.constant 0 : index
    %c2_35 = arith.constant 2 : index
    %63 = vector.load %arg13[%c0_34, %c2_35] : memref<64x4xf32, #tpu.memory_space<vmem>>, vector<64x2xf32>
    tpu.vector_store %arg13[%c0_34, %c2_35], %62 {strides = array<i32>} : memref<64x4xf32, #tpu.memory_space<vmem>>, vector<64x2xf32>,
    %c0_36 = arith.constant 0 : index
    %c1_37 = arith.constant 1 : index
    %64 = vector.load %arg11[%c0_36, %c1_37] : memref<64x2xf32, #tpu.memory_space<vmem>>, vector<64x1xf32>
    tpu.vector_store %arg11[%c0_36, %c1_37], %43 {strides = array<i32>} : memref<64x2xf32, #tpu.memory_space<vmem>>, vector<64x1xf32>,
    %c0_i32_38 = arith.constant 0 : i32
    %65 = arith.cmpi eq, %arg2, %c0_i32_38 : i32
    %66 = arith.extui %65 : i1 to i32
    %c0_i32_39 = arith.constant 0 : i32
    %67 = arith.cmpi ne, %66, %c0_i32_39 : i32
    scf.if %67 {
      %c0_40 = arith.constant 0 : index
      %c0_41 = arith.constant 0 : index
      %68 = vector.load %arg13[%c0_40, %c0_41] : memref<64x4xf32, #tpu.memory_space<vmem>>, vector<64x4xf32>
      %c0_42 = arith.constant 0 : index
      %c0_43 = arith.constant 0 : index
      %69 = vector.load %arg12[%c0_42, %c0_43] : memref<64x4xf32, #tpu.memory_space<vmem>>, vector<64x4xf32>
      %70 = tpu.reciprocal %69 {approx = true} : vector<64x4xf32> -> vector<64x4xf32>
      %71 = arith.mulf %68, %70 : vector<64x4xf32>
      %c0_44 = arith.constant 0 : index
      %c0_45 = arith.constant 0 : index
      %72 = vector.load %arg7[%c0_44, %c0_45] : memref<4x8xf32, #tpu.memory_space<vmem>>, vector<4x8xf32>
      %cst_46 = arith.constant dense<0.000000e+00> : vector<64x8xf32>
      %73 = tpu.matmul %71, %72, %cst_46 {dimension_numbers = #tpu.dot_dimension_numbers<[1], [0], [0], [1], [0, 0, 1, 1], [], []>} : vector<64x4xf32>, vector<4x8xf32>, vector<64x8xf32> -> vector<64x8xf32>
      %c0_47 = arith.constant 0 : index
      %c0_48 = arith.constant 0 : index
      %74 = vector.load %arg8[%c0_47, %c0_48] : memref<1x8xf32, #tpu.memory_space<vmem>>, vector<1x8xf32>
      %75 = vector.broadcast %74 : vector<1x8xf32> to vector<64x8xf32>
      %76 = arith.mulf %73, %75 : vector<64x8xf32>
      %c0_49 = arith.constant 0 : index
      %c0_50 = arith.constant 0 : index
      %77 = vector.load %arg9[%c0_49, %c0_50] : memref<1x8xf32, #tpu.memory_space<vmem>>, vector<1x8xf32>
      %78 = vector.broadcast %77 : vector<1x8xf32> to vector<64x8xf32>
      %79 = arith.addf %76, %78 : vector<64x8xf32>
      %c0_51 = arith.constant 0 : index
      %c0_52 = arith.constant 0 : index
      %c0_53 = arith.constant 0 : index
      %80 = vector.load %arg6[%c0_51, %c0_52, %c0_53] : memref<1x64x8xf32, #tpu.memory_space<vmem>>, vector<1x64x8xf32>
      %81 = vector.shape_cast %80 : vector<1x64x8xf32> to vector<64x8xf32>
      %82 = arith.addf %79, %81 : vector<64x8xf32>
      %cst_54 = arith.constant 0.000000e+00 : f32
      %83 = vector.broadcast %cst_54 : f32 to vector<64x8xf32>
      %84 = arith.maximumf %82, %83 : vector<64x8xf32>
      %c0_55 = arith.constant 0 : index
      %c0_56 = arith.constant 0 : index
      %c0_57 = arith.constant 0 : index
      %85 = vector.load %arg10[%c0_55, %c0_56, %c0_57] : memref<1x64x8xf32, #tpu.memory_space<vmem>>, vector<1x64x8xf32>
      %86 = vector.shape_cast %85 : vector<1x64x8xf32> to vector<64x8xf32>
      %87 = vector.shape_cast %84 : vector<64x8xf32> to vector<1x64x8xf32>
      tpu.vector_store %arg10[%c0_55, %c0_56, %c0_57], %87 {strides = array<i32>} : memref<1x64x8xf32, #tpu.memory_space<vmem>>, vector<1x64x8xf32>,
    } else {
    }
    return
  }
  func.func @transform_0(%arg0: i32, %arg1: i32, %arg2: i32) -> (i32, i32, i32) {
    %c0_i32 = arith.constant 0 : i32
    %c0_i32_0 = arith.constant 0 : i32
    return %arg0, %arg1, %c0_i32 : i32, i32, i32
  }
  func.func @transform_1(%arg0: i32, %arg1: i32, %arg2: i32) -> (i32, i32, i32) {
    %c0_i32 = arith.constant 0 : i32
    %c0_i32_0 = arith.constant 0 : i32
    return %arg0, %arg2, %c0_i32 : i32, i32, i32
  }
  func.func @transform_2(%arg0: i32, %arg1: i32, %arg2: i32) -> (i32, i32, i32) {
    %c0_i32 = arith.constant 0 : i32
    %c0_i32_0 = arith.constant 0 : i32
    return %arg0, %arg2, %c0_i32 : i32, i32, i32
  }
  func.func @transform_3(%arg0: i32, %arg1: i32, %arg2: i32) -> (i32, i32, i32) {
    %c0_i32 = arith.constant 0 : i32
    %c0_i32_0 = arith.constant 0 : i32
    return %arg0, %arg1, %c0_i32 : i32, i32, i32
  }
  func.func @transform_4(%arg0: i32, %arg1: i32, %arg2: i32) -> (i32, i32) {
    %c0_i32 = arith.constant 0 : i32
    %c0_i32_0 = arith.constant 0 : i32
    %c0_i32_1 = arith.constant 0 : i32
    return %c0_i32, %c0_i32_0 : i32, i32
  }
  func.func @transform_5(%arg0: i32, %arg1: i32, %arg2: i32) -> (i32, i32) {
    %c0_i32 = arith.constant 0 : i32
    %c0_i32_0 = arith.constant 0 : i32
    %c0_i32_1 = arith.constant 0 : i32
    return %c0_i32, %c0_i32_0 : i32, i32
  }
  func.func @transform_6(%arg0: i32, %arg1: i32, %arg2: i32) -> (i32, i32) {
    %c0_i32 = arith.constant 0 : i32
    %c0_i32_0 = arith.constant 0 : i32
    %c0_i32_1 = arith.constant 0 : i32
    return %c0_i32, %c0_i32_0 : i32, i32
  }
  func.func @transform_7(%arg0: i32, %arg1: i32, %arg2: i32) -> (i32, i32, i32) {
    %c0_i32 = arith.constant 0 : i32
    %c0_i32_0 = arith.constant 0 : i32
    return %arg0, %arg1, %c0_i32 : i32, i32, i32
  }
}

module attributes {stable_mosaic.version = 11 : i64} {
  func.func @_conv3x3_kernel(%arg0: i32, %arg1: memref<1x110x2xf32, #tpu.memory_space<vmem>>, %arg2: memref<9x2x2xf32, #tpu.memory_space<vmem>>, %arg3: memref<1x2xf32, #tpu.memory_space<vmem>>, %arg4: memref<1x2xf32, #tpu.memory_space<vmem>>, %arg5: memref<1x80x2xf32, #tpu.memory_space<vmem>>) attributes {dimension_semantics = [#tpu.dimension_semantics<parallel>], iteration_bounds = array<i64: 2>, scalar_prefetch = 0 : i64, scratch_operands = 0 : i64, tpu.core_type = #tpu.core_type<tc>, window_params = [{transform_indices = @transform_0, window_bounds = array<i64: 1, 110, 2>}, {pipeline_mode = #tpu.pipeline_mode<synchronous>, transform_indices = @transform_1, window_bounds = array<i64: 9, 2, 2>}, {pipeline_mode = #tpu.pipeline_mode<synchronous>, transform_indices = @transform_2, window_bounds = array<i64: 1, 2>}, {pipeline_mode = #tpu.pipeline_mode<synchronous>, transform_indices = @transform_3, window_bounds = array<i64: 1, 2>}, {transform_indices = @transform_4, window_bounds = array<i64: 1, 80, 2>}]} {
    %cst = arith.constant 0.000000e+00 : f32
    %0 = vector.broadcast %cst : f32 to vector<80x2xf32>
    %c0 = arith.constant 0 : index
    %c0_0 = arith.constant 0 : index
    %c0_1 = arith.constant 0 : index
    %1 = vector.load %arg1[%c0, %c0_0, %c0_1] : memref<1x110x2xf32, #tpu.memory_space<vmem>>, vector<1x80x2xf32>
    %2 = vector.shape_cast %1 : vector<1x80x2xf32> to vector<80x2xf32>
    %c0_2 = arith.constant 0 : index
    %c0_3 = arith.constant 0 : index
    %c0_4 = arith.constant 0 : index
    %3 = vector.load %arg2[%c0_2, %c0_3, %c0_4] : memref<9x2x2xf32, #tpu.memory_space<vmem>>, vector<1x2x2xf32>
    %4 = vector.shape_cast %3 : vector<1x2x2xf32> to vector<2x2xf32>
    %cst_5 = arith.constant dense<0.000000e+00> : vector<80x2xf32>
    %5 = tpu.matmul %2, %4, %cst_5 {dimension_numbers = #tpu.dot_dimension_numbers<[1], [0], [0], [1], [0, 0, 1, 1], [], []>} : vector<80x2xf32>, vector<2x2xf32>, vector<80x2xf32> -> vector<80x2xf32>
    %6 = arith.addf %0, %5 : vector<80x2xf32>
    %c0_6 = arith.constant 0 : index
    %c1 = arith.constant 1 : index
    %c0_7 = arith.constant 0 : index
    %7 = vector.load %arg1[%c0_6, %c1, %c0_7] : memref<1x110x2xf32, #tpu.memory_space<vmem>>, vector<1x80x2xf32>
    %8 = vector.shape_cast %7 : vector<1x80x2xf32> to vector<80x2xf32>
    %c1_8 = arith.constant 1 : index
    %c0_9 = arith.constant 0 : index
    %c0_10 = arith.constant 0 : index
    %9 = vector.load %arg2[%c1_8, %c0_9, %c0_10] : memref<9x2x2xf32, #tpu.memory_space<vmem>>, vector<1x2x2xf32>
    %10 = vector.shape_cast %9 : vector<1x2x2xf32> to vector<2x2xf32>
    %cst_11 = arith.constant dense<0.000000e+00> : vector<80x2xf32>
    %11 = tpu.matmul %8, %10, %cst_11 {dimension_numbers = #tpu.dot_dimension_numbers<[1], [0], [0], [1], [0, 0, 1, 1], [], []>} : vector<80x2xf32>, vector<2x2xf32>, vector<80x2xf32> -> vector<80x2xf32>
    %12 = arith.addf %6, %11 : vector<80x2xf32>
    %c0_12 = arith.constant 0 : index
    %c2 = arith.constant 2 : index
    %c0_13 = arith.constant 0 : index
    %13 = vector.load %arg1[%c0_12, %c2, %c0_13] : memref<1x110x2xf32, #tpu.memory_space<vmem>>, vector<1x80x2xf32>
    %14 = vector.shape_cast %13 : vector<1x80x2xf32> to vector<80x2xf32>
    %c2_14 = arith.constant 2 : index
    %c0_15 = arith.constant 0 : index
    %c0_16 = arith.constant 0 : index
    %15 = vector.load %arg2[%c2_14, %c0_15, %c0_16] : memref<9x2x2xf32, #tpu.memory_space<vmem>>, vector<1x2x2xf32>
    %16 = vector.shape_cast %15 : vector<1x2x2xf32> to vector<2x2xf32>
    %cst_17 = arith.constant dense<0.000000e+00> : vector<80x2xf32>
    %17 = tpu.matmul %14, %16, %cst_17 {dimension_numbers = #tpu.dot_dimension_numbers<[1], [0], [0], [1], [0, 0, 1, 1], [], []>} : vector<80x2xf32>, vector<2x2xf32>, vector<80x2xf32> -> vector<80x2xf32>
    %18 = arith.addf %12, %17 : vector<80x2xf32>
    %c0_18 = arith.constant 0 : index
    %c10 = arith.constant 10 : index
    %c0_19 = arith.constant 0 : index
    %19 = vector.load %arg1[%c0_18, %c10, %c0_19] : memref<1x110x2xf32, #tpu.memory_space<vmem>>, vector<1x80x2xf32>
    %20 = vector.shape_cast %19 : vector<1x80x2xf32> to vector<80x2xf32>
    %c3 = arith.constant 3 : index
    %c0_20 = arith.constant 0 : index
    %c0_21 = arith.constant 0 : index
    %21 = vector.load %arg2[%c3, %c0_20, %c0_21] : memref<9x2x2xf32, #tpu.memory_space<vmem>>, vector<1x2x2xf32>
    %22 = vector.shape_cast %21 : vector<1x2x2xf32> to vector<2x2xf32>
    %cst_22 = arith.constant dense<0.000000e+00> : vector<80x2xf32>
    %23 = tpu.matmul %20, %22, %cst_22 {dimension_numbers = #tpu.dot_dimension_numbers<[1], [0], [0], [1], [0, 0, 1, 1], [], []>} : vector<80x2xf32>, vector<2x2xf32>, vector<80x2xf32> -> vector<80x2xf32>
    %24 = arith.addf %18, %23 : vector<80x2xf32>
    %c0_23 = arith.constant 0 : index
    %c11 = arith.constant 11 : index
    %c0_24 = arith.constant 0 : index
    %25 = vector.load %arg1[%c0_23, %c11, %c0_24] : memref<1x110x2xf32, #tpu.memory_space<vmem>>, vector<1x80x2xf32>
    %26 = vector.shape_cast %25 : vector<1x80x2xf32> to vector<80x2xf32>
    %c4 = arith.constant 4 : index
    %c0_25 = arith.constant 0 : index
    %c0_26 = arith.constant 0 : index
    %27 = vector.load %arg2[%c4, %c0_25, %c0_26] : memref<9x2x2xf32, #tpu.memory_space<vmem>>, vector<1x2x2xf32>
    %28 = vector.shape_cast %27 : vector<1x2x2xf32> to vector<2x2xf32>
    %cst_27 = arith.constant dense<0.000000e+00> : vector<80x2xf32>
    %29 = tpu.matmul %26, %28, %cst_27 {dimension_numbers = #tpu.dot_dimension_numbers<[1], [0], [0], [1], [0, 0, 1, 1], [], []>} : vector<80x2xf32>, vector<2x2xf32>, vector<80x2xf32> -> vector<80x2xf32>
    %30 = arith.addf %24, %29 : vector<80x2xf32>
    %c0_28 = arith.constant 0 : index
    %c12 = arith.constant 12 : index
    %c0_29 = arith.constant 0 : index
    %31 = vector.load %arg1[%c0_28, %c12, %c0_29] : memref<1x110x2xf32, #tpu.memory_space<vmem>>, vector<1x80x2xf32>
    %32 = vector.shape_cast %31 : vector<1x80x2xf32> to vector<80x2xf32>
    %c5 = arith.constant 5 : index
    %c0_30 = arith.constant 0 : index
    %c0_31 = arith.constant 0 : index
    %33 = vector.load %arg2[%c5, %c0_30, %c0_31] : memref<9x2x2xf32, #tpu.memory_space<vmem>>, vector<1x2x2xf32>
    %34 = vector.shape_cast %33 : vector<1x2x2xf32> to vector<2x2xf32>
    %cst_32 = arith.constant dense<0.000000e+00> : vector<80x2xf32>
    %35 = tpu.matmul %32, %34, %cst_32 {dimension_numbers = #tpu.dot_dimension_numbers<[1], [0], [0], [1], [0, 0, 1, 1], [], []>} : vector<80x2xf32>, vector<2x2xf32>, vector<80x2xf32> -> vector<80x2xf32>
    %36 = arith.addf %30, %35 : vector<80x2xf32>
    %c0_33 = arith.constant 0 : index
    %c20 = arith.constant 20 : index
    %c0_34 = arith.constant 0 : index
    %37 = vector.load %arg1[%c0_33, %c20, %c0_34] : memref<1x110x2xf32, #tpu.memory_space<vmem>>, vector<1x80x2xf32>
    %38 = vector.shape_cast %37 : vector<1x80x2xf32> to vector<80x2xf32>
    %c6 = arith.constant 6 : index
    %c0_35 = arith.constant 0 : index
    %c0_36 = arith.constant 0 : index
    %39 = vector.load %arg2[%c6, %c0_35, %c0_36] : memref<9x2x2xf32, #tpu.memory_space<vmem>>, vector<1x2x2xf32>
    %40 = vector.shape_cast %39 : vector<1x2x2xf32> to vector<2x2xf32>
    %cst_37 = arith.constant dense<0.000000e+00> : vector<80x2xf32>
    %41 = tpu.matmul %38, %40, %cst_37 {dimension_numbers = #tpu.dot_dimension_numbers<[1], [0], [0], [1], [0, 0, 1, 1], [], []>} : vector<80x2xf32>, vector<2x2xf32>, vector<80x2xf32> -> vector<80x2xf32>
    %42 = arith.addf %36, %41 : vector<80x2xf32>
    %c0_38 = arith.constant 0 : index
    %c21 = arith.constant 21 : index
    %c0_39 = arith.constant 0 : index
    %43 = vector.load %arg1[%c0_38, %c21, %c0_39] : memref<1x110x2xf32, #tpu.memory_space<vmem>>, vector<1x80x2xf32>
    %44 = vector.shape_cast %43 : vector<1x80x2xf32> to vector<80x2xf32>
    %c7 = arith.constant 7 : index
    %c0_40 = arith.constant 0 : index
    %c0_41 = arith.constant 0 : index
    %45 = vector.load %arg2[%c7, %c0_40, %c0_41] : memref<9x2x2xf32, #tpu.memory_space<vmem>>, vector<1x2x2xf32>
    %46 = vector.shape_cast %45 : vector<1x2x2xf32> to vector<2x2xf32>
    %cst_42 = arith.constant dense<0.000000e+00> : vector<80x2xf32>
    %47 = tpu.matmul %44, %46, %cst_42 {dimension_numbers = #tpu.dot_dimension_numbers<[1], [0], [0], [1], [0, 0, 1, 1], [], []>} : vector<80x2xf32>, vector<2x2xf32>, vector<80x2xf32> -> vector<80x2xf32>
    %48 = arith.addf %42, %47 : vector<80x2xf32>
    %c0_43 = arith.constant 0 : index
    %c22 = arith.constant 22 : index
    %c0_44 = arith.constant 0 : index
    %49 = vector.load %arg1[%c0_43, %c22, %c0_44] : memref<1x110x2xf32, #tpu.memory_space<vmem>>, vector<1x80x2xf32>
    %50 = vector.shape_cast %49 : vector<1x80x2xf32> to vector<80x2xf32>
    %c8 = arith.constant 8 : index
    %c0_45 = arith.constant 0 : index
    %c0_46 = arith.constant 0 : index
    %51 = vector.load %arg2[%c8, %c0_45, %c0_46] : memref<9x2x2xf32, #tpu.memory_space<vmem>>, vector<1x2x2xf32>
    %52 = vector.shape_cast %51 : vector<1x2x2xf32> to vector<2x2xf32>
    %cst_47 = arith.constant dense<0.000000e+00> : vector<80x2xf32>
    %53 = tpu.matmul %50, %52, %cst_47 {dimension_numbers = #tpu.dot_dimension_numbers<[1], [0], [0], [1], [0, 0, 1, 1], [], []>} : vector<80x2xf32>, vector<2x2xf32>, vector<80x2xf32> -> vector<80x2xf32>
    %54 = arith.addf %48, %53 : vector<80x2xf32>
    %c0_48 = arith.constant 0 : index
    %c0_49 = arith.constant 0 : index
    %55 = vector.load %arg3[%c0_48, %c0_49] : memref<1x2xf32, #tpu.memory_space<vmem>>, vector<1x2xf32>
    %56 = vector.broadcast %55 : vector<1x2xf32> to vector<80x2xf32>
    %57 = arith.mulf %54, %56 : vector<80x2xf32>
    %c0_50 = arith.constant 0 : index
    %c0_51 = arith.constant 0 : index
    %58 = vector.load %arg4[%c0_50, %c0_51] : memref<1x2xf32, #tpu.memory_space<vmem>>, vector<1x2xf32>
    %59 = vector.broadcast %58 : vector<1x2xf32> to vector<80x2xf32>
    %60 = arith.addf %57, %59 : vector<80x2xf32>
    %cst_52 = arith.constant 0.000000e+00 : f32
    %61 = vector.broadcast %cst_52 : f32 to vector<80x2xf32>
    %62 = arith.maximumf %60, %61 : vector<80x2xf32>
    %c0_53 = arith.constant 0 : index
    %c0_54 = arith.constant 0 : index
    %c0_55 = arith.constant 0 : index
    %63 = vector.load %arg5[%c0_53, %c0_54, %c0_55] : memref<1x80x2xf32, #tpu.memory_space<vmem>>, vector<1x80x2xf32>
    %64 = vector.shape_cast %63 : vector<1x80x2xf32> to vector<80x2xf32>
    %65 = vector.shape_cast %62 : vector<80x2xf32> to vector<1x80x2xf32>
    tpu.vector_store %arg5[%c0_53, %c0_54, %c0_55], %65 {strides = array<i32>} : memref<1x80x2xf32, #tpu.memory_space<vmem>>, vector<1x80x2xf32>,
    return
  }
  func.func @transform_0(%arg0: i32) -> (i32, i32, i32) {
    %c0_i32 = arith.constant 0 : i32
    %c0_i32_0 = arith.constant 0 : i32
    %c0_i32_1 = arith.constant 0 : i32
    return %arg0, %c0_i32, %c0_i32_0 : i32, i32, i32
  }
  func.func @transform_1(%arg0: i32) -> (i32, i32, i32) {
    %c0_i32 = arith.constant 0 : i32
    %c0_i32_0 = arith.constant 0 : i32
    %c0_i32_1 = arith.constant 0 : i32
    %c0_i32_2 = arith.constant 0 : i32
    return %c0_i32, %c0_i32_0, %c0_i32_1 : i32, i32, i32
  }
  func.func @transform_2(%arg0: i32) -> (i32, i32) {
    %c0_i32 = arith.constant 0 : i32
    %c0_i32_0 = arith.constant 0 : i32
    %c0_i32_1 = arith.constant 0 : i32
    return %c0_i32, %c0_i32_0 : i32, i32
  }
  func.func @transform_3(%arg0: i32) -> (i32, i32) {
    %c0_i32 = arith.constant 0 : i32
    %c0_i32_0 = arith.constant 0 : i32
    %c0_i32_1 = arith.constant 0 : i32
    return %c0_i32, %c0_i32_0 : i32, i32
  }
  func.func @transform_4(%arg0: i32) -> (i32, i32, i32) {
    %c0_i32 = arith.constant 0 : i32
    %c0_i32_0 = arith.constant 0 : i32
    %c0_i32_1 = arith.constant 0 : i32
    return %arg0, %c0_i32, %c0_i32_0 : i32, i32, i32
  }
}

module attributes {stable_mosaic.version = 11 : i64} {
  func.func @_mm_affine_kernel(%arg0: i32, %arg1: memref<128x2xf32, #tpu.memory_space<vmem>>, %arg2: memref<2x8xf32, #tpu.memory_space<vmem>>, %arg3: memref<1x8xf32, #tpu.memory_space<vmem>>, %arg4: memref<1x8xf32, #tpu.memory_space<vmem>>, %arg5: memref<128x8xf32, #tpu.memory_space<vmem>>, %arg6: memref<128x8xf32, #tpu.memory_space<vmem>>) attributes {dimension_semantics = [#tpu.dimension_semantics<parallel>], iteration_bounds = array<i64: 1>, scalar_prefetch = 0 : i64, scratch_operands = 0 : i64, tpu.core_type = #tpu.core_type<tc>, window_params = [{transform_indices = @transform_0, window_bounds = array<i64: 128, 2>}, {pipeline_mode = #tpu.pipeline_mode<synchronous>, transform_indices = @transform_1, window_bounds = array<i64: 2, 8>}, {pipeline_mode = #tpu.pipeline_mode<synchronous>, transform_indices = @transform_2, window_bounds = array<i64: 1, 8>}, {pipeline_mode = #tpu.pipeline_mode<synchronous>, transform_indices = @transform_3, window_bounds = array<i64: 1, 8>}, {transform_indices = @transform_4, window_bounds = array<i64: 128, 8>}, {transform_indices = @transform_5, window_bounds = array<i64: 128, 8>}]} {
    %c0 = arith.constant 0 : index
    %c0_0 = arith.constant 0 : index
    %0 = vector.load %arg1[%c0, %c0_0] : memref<128x2xf32, #tpu.memory_space<vmem>>, vector<128x2xf32>
    %c0_1 = arith.constant 0 : index
    %c0_2 = arith.constant 0 : index
    %1 = vector.load %arg2[%c0_1, %c0_2] : memref<2x8xf32, #tpu.memory_space<vmem>>, vector<2x8xf32>
    %cst = arith.constant dense<0.000000e+00> : vector<128x8xf32>
    %2 = tpu.matmul %0, %1, %cst {dimension_numbers = #tpu.dot_dimension_numbers<[1], [0], [0], [1], [0, 0, 1, 1], [], []>} : vector<128x2xf32>, vector<2x8xf32>, vector<128x8xf32> -> vector<128x8xf32>
    %c0_3 = arith.constant 0 : index
    %c0_4 = arith.constant 0 : index
    %3 = vector.load %arg3[%c0_3, %c0_4] : memref<1x8xf32, #tpu.memory_space<vmem>>, vector<1x8xf32>
    %4 = vector.broadcast %3 : vector<1x8xf32> to vector<128x8xf32>
    %5 = arith.mulf %2, %4 : vector<128x8xf32>
    %c0_5 = arith.constant 0 : index
    %c0_6 = arith.constant 0 : index
    %6 = vector.load %arg4[%c0_5, %c0_6] : memref<1x8xf32, #tpu.memory_space<vmem>>, vector<1x8xf32>
    %7 = vector.broadcast %6 : vector<1x8xf32> to vector<128x8xf32>
    %8 = arith.addf %5, %7 : vector<128x8xf32>
    %c0_7 = arith.constant 0 : index
    %c0_8 = arith.constant 0 : index
    %9 = vector.load %arg5[%c0_7, %c0_8] : memref<128x8xf32, #tpu.memory_space<vmem>>, vector<128x8xf32>
    %10 = arith.addf %8, %9 : vector<128x8xf32>
    %cst_9 = arith.constant 0.000000e+00 : f32
    %11 = vector.broadcast %cst_9 : f32 to vector<128x8xf32>
    %12 = arith.maximumf %10, %11 : vector<128x8xf32>
    %c0_10 = arith.constant 0 : index
    %c0_11 = arith.constant 0 : index
    %13 = vector.load %arg6[%c0_10, %c0_11] : memref<128x8xf32, #tpu.memory_space<vmem>>, vector<128x8xf32>
    tpu.vector_store %arg6[%c0_10, %c0_11], %12 {strides = array<i32>} : memref<128x8xf32, #tpu.memory_space<vmem>>, vector<128x8xf32>,
    return
  }
  func.func @transform_0(%arg0: i32) -> (i32, i32) {
    %c0_i32 = arith.constant 0 : i32
    %c0_i32_0 = arith.constant 0 : i32
    return %arg0, %c0_i32 : i32, i32
  }
  func.func @transform_1(%arg0: i32) -> (i32, i32) {
    %c0_i32 = arith.constant 0 : i32
    %c0_i32_0 = arith.constant 0 : i32
    %c0_i32_1 = arith.constant 0 : i32
    return %c0_i32, %c0_i32_0 : i32, i32
  }
  func.func @transform_2(%arg0: i32) -> (i32, i32) {
    %c0_i32 = arith.constant 0 : i32
    %c0_i32_0 = arith.constant 0 : i32
    %c0_i32_1 = arith.constant 0 : i32
    return %c0_i32, %c0_i32_0 : i32, i32
  }
  func.func @transform_3(%arg0: i32) -> (i32, i32) {
    %c0_i32 = arith.constant 0 : i32
    %c0_i32_0 = arith.constant 0 : i32
    %c0_i32_1 = arith.constant 0 : i32
    return %c0_i32, %c0_i32_0 : i32, i32
  }
  func.func @transform_4(%arg0: i32) -> (i32, i32) {
    %c0_i32 = arith.constant 0 : i32
    %c0_i32_0 = arith.constant 0 : i32
    return %arg0, %c0_i32 : i32, i32
  }
  func.func @transform_5(%arg0: i32) -> (i32, i32) {
    %c0_i32 = arith.constant 0 : i32
    %c0_i32_0 = arith.constant 0 : i32
    return %arg0, %c0_i32 : i32, i32
  }
}

</mosaic_0001>

<llo_original>
// kernel: nonlocal_block_forward.7
$region0: #{nonlocal_block_forward.7}
  #allocation0 [shape = 'u32[]', space=smem, size = 0x4, offset = 0x4, fixed_abs, tag = 'smem constant byte address 0x4 - core index']
  #allocation1 [shape = 'u32[72,128]{1,0:T(1,128)}', space=vmem, size = 0x9000, scoped, tag = 'internal scratch']
  %s0 = inlined_call_operand.vmem [shape: f32[128,8], index: 0, kind: input, shape index: {}]
  %s1 = inlined_call_operand.vmem [shape: f32[8,2], index: 1, kind: input, shape index: {}]
  %s2 = inlined_call_operand.vmem [shape: f32[1,2], index: 2, kind: input, shape index: {}]
  %s3 = inlined_call_operand.vmem [shape: f32[1,2], index: 3, kind: input, shape index: {}]
  %s4 = inlined_call_operand.vmem [shape: f32[128,2], index: 4, kind: output, shape index: {}]
  %s5 = sld [smem:[#allocation0]]
  $region26: #{nonlocal_block_forward.7} parent=0
    _
  %s7 = ssub.s32 1, %s5
  %s8 = scalar_select 0, %s7, %s5
  // Predicated region
  $region2: #{nonlocal_block_forward.7} parent=0 // pred_check
    _
  $region3: #{nonlocal_block_forward.7} parent=0 // pred_check_branch
    %10 = sbr.rel (0) target = $region5
  $region4: #{nonlocal_block_forward.7} parent=0 // pred_region
    _
  $region5: #{nonlocal_block_forward.7} parent=0 // pred_fallthru
    _
  // Predicated region
  $region6: #{nonlocal_block_forward.7} parent=0 // pred_check
    _
  $region7: #{nonlocal_block_forward.7} parent=0 // pred_check_branch
    %12 = sbr.rel (0) target = $region9
  $region8: #{nonlocal_block_forward.7} parent=0 // pred_region
    _
  $region9: #{nonlocal_block_forward.7} parent=0 // pred_fallthru
    _
  // Predicated region
  $region10: #{nonlocal_block_forward.7} parent=0 // pred_check
    _
  $region11: #{nonlocal_block_forward.7} parent=0 // pred_check_branch
    %14 = sbr.rel (0) target = $region13
  $region12: #{nonlocal_block_forward.7} parent=0 // pred_region
    _
  $region13: #{nonlocal_block_forward.7} parent=0 // pred_fallthru
    _
  // Predicated region
  $region14: #{nonlocal_block_forward.7} parent=0 // pred_check
    _
  $region15: #{nonlocal_block_forward.7} parent=0 // pred_check_branch
    %16 = sbr.rel (0) target = $region17
  $region16: #{nonlocal_block_forward.7} parent=0 // pred_region
    _
  $region17: #{nonlocal_block_forward.7} parent=0 // pred_fallthru
    _
  %v17 = vld [vmem:[%s0] sm:$0xff]
  %v18 = vld [vmem:[%s0 + $0x8] sm:$0xff]
  %v19 = vld [vmem:[%s0 + $0x10] sm:$0xff]
  %v20 = vld [vmem:[%s0 + $0x18] sm:$0xff]
  %v21 = vld [vmem:[%s0 + $0x20] sm:$0xff]
  %v22 = vld [vmem:[%s0 + $0x28] sm:$0xff]
  %v23 = vld [vmem:[%s0 + $0x30] sm:$0xff]
  %v24 = vld [vmem:[%s0 + $0x38] sm:$0xff]
  %v25 = vld [vmem:[%s0 + $0x40] sm:$0xff]
  %v26 = vld [vmem:[%s0 + $0x48] sm:$0xff]
  %v27 = vld [vmem:[%s0 + $0x50] sm:$0xff]
  %v28 = vld [vmem:[%s0 + $0x58] sm:$0xff]
  %v29 = vld [vmem:[%s0 + $0x60] sm:$0xff]
  %v30 = vld [vmem:[%s0 + $0x68] sm:$0xff]
  %v31 = vld [vmem:[%s0 + $0x70] sm:$0xff]
  %v32 = vld [vmem:[%s0 + $0x78] sm:$0xff]
  %v33 = vld [vmem:[%s1] sm:$0xff]
  %vm34 = vcmask 64512
  %v36 = vsel %vm34, %v17, 0
  %v39 = vsel %vm34, %v18, 0
  %v42 = vsel %vm34, %v19, 0
  %v45 = vsel %vm34, %v20, 0
  %v48 = vsel %vm34, %v21, 0
  %v51 = vsel %vm34, %v22, 0
  %v54 = vsel %vm34, %v23, 0
  %v57 = vsel %vm34, %v24, 0
  %v60 = vsel %vm34, %v25, 0
  %v63 = vsel %vm34, %v26, 0
  %v66 = vsel %vm34, %v27, 0
  %v69 = vsel %vm34, %v28, 0
  %v72 = vsel %vm34, %v29, 0
  %v75 = vsel %vm34, %v30, 0
  %v78 = vsel %vm34, %v31, 0
  %v81 = vsel %vm34, %v32, 0
  %83 = vmatpush.msra.mxu0 0.0
  %84 = vmatpush.msra.mxu0 0.0
  %85 = vmatpush.msra.mxu0 0.0
  %86 = vmatpush.msra.mxu0 0.0
  %87 = vmatpush.msra.mxu0 0.0
  %88 = vmatpush.msra.mxu0 0.0
  %89 = vmatpush.msra.mxu0 0.0
  %90 = vmatpush.msra.mxu0 0.0
  %91 = vmatpush.msra.mxu0 0.0
  %92 = vmatpush.msra.mxu0 0.0
  %93 = vmatpush.msra.mxu0 0.0
  %94 = vmatpush.msra.mxu0 0.0
  %95 = vmatpush.msra.mxu0 0.0
  %96 = vmatpush.msra.mxu0 0.0
  %97 = vmatpush.msra.mxu0 0.0
  %98 = vmatpush.msra.mxu0 %v33
  %99 = vmatmul.f32.gmra.mxu0 %v36
  %v100 = vpop.f32.mrf.mxu0
  %v101 = vadd.f32 0.0, %v100
  %102 = vmatmul.f32.gmra.mxu0 %v39
  %v103 = vpop.f32.mrf.mxu0
  %v104 = vadd.f32 0.0, %v103
  %105 = vmatmul.f32.gmra.mxu0 %v42
  %v106 = vpop.f32.mrf.mxu0
  %v107 = vadd.f32 0.0, %v106
  %108 = vmatmul.f32.gmra.mxu0 %v45
  %v109 = vpop.f32.mrf.mxu0
  %v110 = vadd.f32 0.0, %v109
  %111 = vmatmul.f32.gmra.mxu0 %v48
  %v112 = vpop.f32.mrf.mxu0
  %v113 = vadd.f32 0.0, %v112
  %114 = vmatmul.f32.gmra.mxu0 %v51
  %v115 = vpop.f32.mrf.mxu0
  %v116 = vadd.f32 0.0, %v115
  %117 = vmatmul.f32.gmra.mxu0 %v54
  %v118 = vpop.f32.mrf.mxu0
  %v119 = vadd.f32 0.0, %v118
  %120 = vmatmul.f32.gmra.mxu0 %v57
  %v121 = vpop.f32.mrf.mxu0
  %v122 = vadd.f32 0.0, %v121
  %123 = vmatmul.f32.gmra.mxu0 %v60
  %v124 = vpop.f32.mrf.mxu0
  %v125 = vadd.f32 0.0, %v124
  %126 = vmatmul.f32.gmra.mxu0 %v63
  %v127 = vpop.f32.mrf.mxu0
  %v128 = vadd.f32 0.0, %v127
  %129 = vmatmul.f32.gmra.mxu0 %v66
  %v130 = vpop.f32.mrf.mxu0
  %v131 = vadd.f32 0.0, %v130
  %132 = vmatmul.f32.gmra.mxu0 %v69
  %v133 = vpop.f32.mrf.mxu0
  %v134 = vadd.f32 0.0, %v133
  %135 = vmatmul.f32.gmra.mxu0 %v72
  %v136 = vpop.f32.mrf.mxu0
  %v137 = vadd.f32 0.0, %v136
  %138 = vmatmul.f32.gmra.mxu0 %v75
  %v139 = vpop.f32.mrf.mxu0
  %v140 = vadd.f32 0.0, %v139
  %141 = vmatmul.f32.gmra.mxu0 %v78
  %v142 = vpop.f32.mrf.mxu0
  %v143 = vadd.f32 0.0, %v142
  %144 = vmatmul.f32.gmra.mxu0 %v81
  %v145 = vpop.f32.mrf.mxu0
  %v146 = vadd.f32 0.0, %v145
  %147 = vdwg.mxu0
  %v148 = vld [vmem:[%s2] sm:$0x1]
  %v150 = vperm.slane %v148, 0
  %v152 = vmul.f32 %v101, %v150
  %v153 = vmul.f32 %v104, %v150
  %v154 = vmul.f32 %v107, %v150
  %v155 = vmul.f32 %v110, %v150
  %v156 = vmul.f32 %v113, %v150
  %v157 = vmul.f32 %v116, %v150
  %v158 = vmul.f32 %v119, %v150
  %v159 = vmul.f32 %v122, %v150
  %v160 = vmul.f32 %v125, %v150
  %v161 = vmul.f32 %v128, %v150
  %v162 = vmul.f32 %v131, %v150
  %v163 = vmul.f32 %v134, %v150
  %v164 = vmul.f32 %v137, %v150
  %v165 = vmul.f32 %v140, %v150
  %v166 = vmul.f32 %v143, %v150
  %v167 = vmul.f32 %v146, %v150
  %v168 = vld [vmem:[%s3] sm:$0x1]
  %v170 = vperm.slane %v168, 0
  %v172 = vadd.f32 %v152, %v170
  %v173 = vadd.f32 %v153, %v170
  %v174 = vadd.f32 %v154, %v170
  %v175 = vadd.f32 %v155, %v170
  %v176 = vadd.f32 %v156, %v170
  %v177 = vadd.f32 %v157, %v170
  %v178 = vadd.f32 %v158, %v170
  %v179 = vadd.f32 %v159, %v170
  %v180 = vadd.f32 %v160, %v170
  %v181 = vadd.f32 %v161, %v170
  %v182 = vadd.f32 %v162, %v170
  %v183 = vadd.f32 %v163, %v170
  %v184 = vadd.f32 %v164, %v170
  %v185 = vadd.f32 %v165, %v170
  %v186 = vadd.f32 %v166, %v170
  %v187 = vadd.f32 %v167, %v170
  %v188 = vmax.f32 %v172, 0.0
  %v189 = vmax.f32 %v173, 0.0
  %v190 = vmax.f32 %v174, 0.0
  %v191 = vmax.f32 %v175, 0.0
  %v192 = vmax.f32 %v176, 0.0
  %v193 = vmax.f32 %v177, 0.0
  %v194 = vmax.f32 %v178, 0.0
  %v195 = vmax.f32 %v179, 0.0
  %v196 = vmax.f32 %v180, 0.0
  %v197 = vmax.f32 %v181, 0.0
  %v198 = vmax.f32 %v182, 0.0
  %v199 = vmax.f32 %v183, 0.0
  %v200 = vmax.f32 %v184, 0.0
  %v201 = vmax.f32 %v185, 0.0
  %v202 = vmax.f32 %v186, 0.0
  %v203 = vmax.f32 %v187, 0.0
  %vm204 = vcmask 15360
  %205 = vst.msk [vmem:[%s4] sm:$0xff] %vm204, %v188
  %206 = vst.msk [vmem:[%s4 + $0x8] sm:$0xff] %vm204, %v189
  %207 = vst.msk [vmem:[%s4 + $0x10] sm:$0xff] %vm204, %v190
  %208 = vst.msk [vmem:[%s4 + $0x18] sm:$0xff] %vm204, %v191
  %209 = vst.msk [vmem:[%s4 + $0x20] sm:$0xff] %vm204, %v192
  %210 = vst.msk [vmem:[%s4 + $0x28] sm:$0xff] %vm204, %v193
  %211 = vst.msk [vmem:[%s4 + $0x30] sm:$0xff] %vm204, %v194
  %212 = vst.msk [vmem:[%s4 + $0x38] sm:$0xff] %vm204, %v195
  %213 = vst.msk [vmem:[%s4 + $0x40] sm:$0xff] %vm204, %v196
  %214 = vst.msk [vmem:[%s4 + $0x48] sm:$0xff] %vm204, %v197
  %215 = vst.msk [vmem:[%s4 + $0x50] sm:$0xff] %vm204, %v198
  %216 = vst.msk [vmem:[%s4 + $0x58] sm:$0xff] %vm204, %v199
  %217 = vst.msk [vmem:[%s4 + $0x60] sm:$0xff] %vm204, %v200
  %218 = vst.msk [vmem:[%s4 + $0x68] sm:$0xff] %vm204, %v201
  %219 = vst.msk [vmem:[%s4 + $0x70] sm:$0xff] %vm204, %v202
  %220 = vst.msk [vmem:[%s4 + $0x78] sm:$0xff] %vm204, %v203
  // Predicated region
  $region18: #{nonlocal_block_forward.7} parent=0 // pred_check
    _
  $region19: #{nonlocal_block_forward.7} parent=0 // pred_check_branch
    %222 = sbr.rel (0) target = $region21
  $region20: #{nonlocal_block_forward.7} parent=0 // pred_region
    _
  $region21: #{nonlocal_block_forward.7} parent=0 // pred_fallthru
    _
  // Predicated region
  $region22: #{nonlocal_block_forward.7} parent=0 // pred_check
    _
  $region23: #{nonlocal_block_forward.7} parent=0 // pred_check_branch
    %224 = sbr.rel (0) target = $region25
  $region24: #{nonlocal_block_forward.7} parent=0 // pred_region
    _
  $region25: #{nonlocal_block_forward.7} parent=0 // pred_fallthru
    _

// kernel: nonlocal_block_forward.5
$region0: #{nonlocal_block_forward.5}
  #allocation0 [shape = 'u32[]', space=smem, size = 0x4, offset = 0x4, fixed_abs, tag = 'smem constant byte address 0x4 - core index']
  #allocation1 [shape = 'u32[72,128]{1,0:T(1,128)}', space=vmem, size = 0x9000, scoped, tag = 'internal scratch']
  %s0 = inlined_call_operand.vmem [shape: f32[128,8], index: 0, kind: input, shape index: {}]
  %s1 = inlined_call_operand.vmem [shape: f32[8,12], index: 1, kind: input, shape index: {}]
  %s2 = inlined_call_operand.vmem [shape: f32[1,12], index: 2, kind: input, shape index: {}]
  %s3 = inlined_call_operand.vmem [shape: f32[128,4], index: 3, kind: output, shape index: {0}]
  %s4 = inlined_call_operand.vmem [shape: f32[128,4], index: 4, kind: output, shape index: {1}]
  %s5 = inlined_call_operand.vmem [shape: f32[128,4], index: 5, kind: output, shape index: {2}]
  %6 = xla_tuple %s3, %s4, %s5
  %s7 = sld [smem:[#allocation0]]
  $region38: #{nonlocal_block_forward.5} parent=0
    _
  %s9 = ssub.s32 1, %s7
  %s10 = scalar_select 0, %s9, %s7
  // Predicated region
  $region2: #{nonlocal_block_forward.5} parent=0 // pred_check
    _
  $region3: #{nonlocal_block_forward.5} parent=0 // pred_check_branch
    %12 = sbr.rel (0) target = $region5
  $region4: #{nonlocal_block_forward.5} parent=0 // pred_region
    _
  $region5: #{nonlocal_block_forward.5} parent=0 // pred_fallthru
    _
  // Predicated region
  $region6: #{nonlocal_block_forward.5} parent=0 // pred_check
    _
  $region7: #{nonlocal_block_forward.5} parent=0 // pred_check_branch
    %14 = sbr.rel (0) target = $region9
  $region8: #{nonlocal_block_forward.5} parent=0 // pred_region
    _
  $region9: #{nonlocal_block_forward.5} parent=0 // pred_fallthru
    _
  // Predicated region
  $region10: #{nonlocal_block_forward.5} parent=0 // pred_check
    _
  $region11: #{nonlocal_block_forward.5} parent=0 // pred_check_branch
    %16 = sbr.rel (0) target = $region13
  $region12: #{nonlocal_block_forward.5} parent=0 // pred_region
    _
  $region13: #{nonlocal_block_forward.5} parent=0 // pred_fallthru
    _
  %v17 = vld [vmem:[%s0] sm:$0xff]
  %v18 = vld [vmem:[%s0 + $0x8] sm:$0xff]
  %v19 = vld [vmem:[%s0 + $0x10] sm:$0xff]
  %v20 = vld [vmem:[%s0 + $0x18] sm:$0xff]
  %v21 = vld [vmem:[%s0 + $0x20] sm:$0xff]
  %v22 = vld [vmem:[%s0 + $0x28] sm:$0xff]
  %v23 = vld [vmem:[%s0 + $0x30] sm:$0xff]
  %v24 = vld [vmem:[%s0 + $0x38] sm:$0xff]
  %v25 = vld [vmem:[%s0 + $0x40] sm:$0xff]
  %v26 = vld [vmem:[%s0 + $0x48] sm:$0xff]
  %v27 = vld [vmem:[%s0 + $0x50] sm:$0xff]
  %v28 = vld [vmem:[%s0 + $0x58] sm:$0xff]
  %v29 = vld [vmem:[%s0 + $0x60] sm:$0xff]
  %v30 = vld [vmem:[%s0 + $0x68] sm:$0xff]
  %v31 = vld [vmem:[%s0 + $0x70] sm:$0xff]
  %v32 = vld [vmem:[%s0 + $0x78] sm:$0xff]
  %v33 = vld [vmem:[%s1] sm:$0xff]
  %v34 = vld [vmem:[%s2] sm:$0x1]
  %v36 = vperm.slane %v34, 0
  %vm38 = vcmask 64512
  %v40 = vsel %vm38, %v17, 0
  %v43 = vsel %vm38, %v18, 0
  %v46 = vsel %vm38, %v19, 0
  %v49 = vsel %vm38, %v20, 0
  %v52 = vsel %vm38, %v21, 0
  %v55 = vsel %vm38, %v22, 0
  %v58 = vsel %vm38, %v23, 0
  %v61 = vsel %vm38, %v24, 0
  %v64 = vsel %vm38, %v25, 0
  %v67 = vsel %vm38, %v26, 0
  %v70 = vsel %vm38, %v27, 0
  %v73 = vsel %vm38, %v28, 0
  %v76 = vsel %vm38, %v29, 0
  %v79 = vsel %vm38, %v30, 0
  %v82 = vsel %vm38, %v31, 0
  %v85 = vsel %vm38, %v32, 0
  %87 = vmatpush.msra.mxu0 0.0
  %88 = vmatpush.msra.mxu0 0.0
  %89 = vmatpush.msra.mxu0 0.0
  %90 = vmatpush.msra.mxu0 0.0
  %91 = vmatpush.msra.mxu0 0.0
  %92 = vmatpush.msra.mxu0 0.0
  %93 = vmatpush.msra.mxu0 0.0
  %94 = vmatpush.msra.mxu0 0.0
  %95 = vmatpush.msra.mxu0 0.0
  %96 = vmatpush.msra.mxu0 0.0
  %97 = vmatpush.msra.mxu0 0.0
  %98 = vmatpush.msra.mxu0 0.0
  %99 = vmatpush.msra.mxu0 0.0
  %100 = vmatpush.msra.mxu0 0.0
  %101 = vmatpush.msra.mxu0 0.0
  %102 = vmatpush.msra.mxu0 %v33
  %103 = vmatmul.f32.gmra.mxu0 %v40
  %v104 = vpop.f32.mrf.mxu0
  %v105 = vadd.f32 %v36, %v104
  %106 = vmatmul.f32.gmra.mxu0 %v43
  %v107 = vpop.f32.mrf.mxu0
  %v108 = vadd.f32 %v36, %v107
  %109 = vmatmul.f32.gmra.mxu0 %v46
  %v110 = vpop.f32.mrf.mxu0
  %v111 = vadd.f32 %v36, %v110
  %112 = vmatmul.f32.gmra.mxu0 %v49
  %v113 = vpop.f32.mrf.mxu0
  %v114 = vadd.f32 %v36, %v113
  %115 = vmatmul.f32.gmra.mxu0 %v52
  %v116 = vpop.f32.mrf.mxu0
  %v117 = vadd.f32 %v36, %v116
  %118 = vmatmul.f32.gmra.mxu0 %v55
  %v119 = vpop.f32.mrf.mxu0
  %v120 = vadd.f32 %v36, %v119
  %121 = vmatmul.f32.gmra.mxu0 %v58
  %v122 = vpop.f32.mrf.mxu0
  %v123 = vadd.f32 %v36, %v122
  %124 = vmatmul.f32.gmra.mxu0 %v61
  %v125 = vpop.f32.mrf.mxu0
  %v126 = vadd.f32 %v36, %v125
  %127 = vmatmul.f32.gmra.mxu0 %v64
  %v128 = vpop.f32.mrf.mxu0
  %v129 = vadd.f32 %v36, %v128
  %130 = vmatmul.f32.gmra.mxu0 %v67
  %v131 = vpop.f32.mrf.mxu0
  %v132 = vadd.f32 %v36, %v131
  %133 = vmatmul.f32.gmra.mxu0 %v70
  %v134 = vpop.f32.mrf.mxu0
  %v135 = vadd.f32 %v36, %v134
  %136 = vmatmul.f32.gmra.mxu0 %v73
  %v137 = vpop.f32.mrf.mxu0
  %v138 = vadd.f32 %v36, %v137
  %139 = vmatmul.f32.gmra.mxu0 %v76
  %v140 = vpop.f32.mrf.mxu0
  %v141 = vadd.f32 %v36, %v140
  %142 = vmatmul.f32.gmra.mxu0 %v79
  %v143 = vpop.f32.mrf.mxu0
  %v144 = vadd.f32 %v36, %v143
  %145 = vmatmul.f32.gmra.mxu0 %v82
  %v146 = vpop.f32.mrf.mxu0
  %v147 = vadd.f32 %v36, %v146
  %148 = vmatmul.f32.gmra.mxu0 %v85
  %v149 = vpop.f32.mrf.mxu0
  %v150 = vadd.f32 %v36, %v149
  %151 = vdwg.mxu0
  %vm152 = vcmask 31744
  %153 = vst.msk [vmem:[%s3] sm:$0xff] %vm152, %v105
  %154 = vst.msk [vmem:[%s3 + $0x8] sm:$0xff] %vm152, %v108
  %155 = vst.msk [vmem:[%s3 + $0x10] sm:$0xff] %vm152, %v111
  %156 = vst.msk [vmem:[%s3 + $0x18] sm:$0xff] %vm152, %v114
  %157 = vst.msk [vmem:[%s3 + $0x20] sm:$0xff] %vm152, %v117
  %158 = vst.msk [vmem:[%s3 + $0x28] sm:$0xff] %vm152, %v120
  %159 = vst.msk [vmem:[%s3 + $0x30] sm:$0xff] %vm152, %v123
  %160 = vst.msk [vmem:[%s3 + $0x38] sm:$0xff] %vm152, %v126
  %161 = vst.msk [vmem:[%s3 + $0x40] sm:$0xff] %vm152, %v129
  %162 = vst.msk [vmem:[%s3 + $0x48] sm:$0xff] %vm152, %v132
  %163 = vst.msk [vmem:[%s3 + $0x50] sm:$0xff] %vm152, %v135
  %164 = vst.msk [vmem:[%s3 + $0x58] sm:$0xff] %vm152, %v138
  %165 = vst.msk [vmem:[%s3 + $0x60] sm:$0xff] %vm152, %v141
  %166 = vst.msk [vmem:[%s3 + $0x68] sm:$0xff] %vm152, %v144
  %167 = vst.msk [vmem:[%s3 + $0x70] sm:$0xff] %vm152, %v147
  %168 = vst.msk [vmem:[%s3 + $0x78] sm:$0xff] %vm152, %v150
  %185 = vrot.lane.b32.xlu0 %v105, 124
  %v186 = vpop.permute.xlu0 %185
  %187 = vrot.lane.b32.xlu0 %v108, 124
  %v188 = vpop.permute.xlu0 %187
  %189 = vrot.lane.b32.xlu0 %v111, 124
  %v190 = vpop.permute.xlu0 %189
  %191 = vrot.lane.b32.xlu0 %v114, 124
  %v192 = vpop.permute.xlu0 %191
  %193 = vrot.lane.b32.xlu0 %v117, 124
  %v194 = vpop.permute.xlu0 %193
  %195 = vrot.lane.b32.xlu0 %v120, 124
  %v196 = vpop.permute.xlu0 %195
  %197 = vrot.lane.b32.xlu0 %v123, 124
  %v198 = vpop.permute.xlu0 %197
  %199 = vrot.lane.b32.xlu0 %v126, 124
  %v200 = vpop.permute.xlu0 %199
  %201 = vrot.lane.b32.xlu0 %v129, 124
  %v202 = vpop.permute.xlu0 %201
  %203 = vrot.lane.b32.xlu0 %v132, 124
  %v204 = vpop.permute.xlu0 %203
  %205 = vrot.lane.b32.xlu0 %v135, 124
  %v206 = vpop.permute.xlu0 %205
  %207 = vrot.lane.b32.xlu0 %v138, 124
  %v208 = vpop.permute.xlu0 %207
  %209 = vrot.lane.b32.xlu0 %v141, 124
  %v210 = vpop.permute.xlu0 %209
  %211 = vrot.lane.b32.xlu0 %v144, 124
  %v212 = vpop.permute.xlu0 %211
  %213 = vrot.lane.b32.xlu0 %v147, 124
  %v214 = vpop.permute.xlu0 %213
  %215 = vrot.lane.b32.xlu0 %v150, 124
  %v216 = vpop.permute.xlu0 %215
  %233 = vst.msk [vmem:[%s4] sm:$0xff] %vm152, %v186
  %234 = vst.msk [vmem:[%s4 + $0x8] sm:$0xff] %vm152, %v188
  %235 = vst.msk [vmem:[%s4 + $0x10] sm:$0xff] %vm152, %v190
  %236 = vst.msk [vmem:[%s4 + $0x18] sm:$0xff] %vm152, %v192
  %237 = vst.msk [vmem:[%s4 + $0x20] sm:$0xff] %vm152, %v194
  %238 = vst.msk [vmem:[%s4 + $0x28] sm:$0xff] %vm152, %v196
  %239 = vst.msk [vmem:[%s4 + $0x30] sm:$0xff] %vm152, %v198
  %240 = vst.msk [vmem:[%s4 + $0x38] sm:$0xff] %vm152, %v200
  %241 = vst.msk [vmem:[%s4 + $0x40] sm:$0xff] %vm152, %v202
  %242 = vst.msk [vmem:[%s4 + $0x48] sm:$0xff] %vm152, %v204
  %243 = vst.msk [vmem:[%s4 + $0x50] sm:$0xff] %vm152, %v206
  %244 = vst.msk [vmem:[%s4 + $0x58] sm:$0xff] %vm152, %v208
  %245 = vst.msk [vmem:[%s4 + $0x60] sm:$0xff] %vm152, %v210
  %246 = vst.msk [vmem:[%s4 + $0x68] sm:$0xff] %vm152, %v212
  %247 = vst.msk [vmem:[%s4 + $0x70] sm:$0xff] %vm152, %v214
  %248 = vst.msk [vmem:[%s4 + $0x78] sm:$0xff] %vm152, %v216
  %249 = vrot.lane.b32.xlu0 %v105, 120
  %v250 = vpop.permute.xlu0 %249
  %251 = vrot.lane.b32.xlu0 %v108, 120
  %v252 = vpop.permute.xlu0 %251
  %253 = vrot.lane.b32.xlu0 %v111, 120
  %v254 = vpop.permute.xlu0 %253
  %255 = vrot.lane.b32.xlu0 %v114, 120
  %v256 = vpop.permute.xlu0 %255
  %257 = vrot.lane.b32.xlu0 %v117, 120
  %v258 = vpop.permute.xlu0 %257
  %259 = vrot.lane.b32.xlu0 %v120, 120
  %v260 = vpop.permute.xlu0 %259
  %261 = vrot.lane.b32.xlu0 %v123, 120
  %v262 = vpop.permute.xlu0 %261
  %263 = vrot.lane.b32.xlu0 %v126, 120
  %v264 = vpop.permute.xlu0 %263
  %265 = vrot.lane.b32.xlu0 %v129, 120
  %v266 = vpop.permute.xlu0 %265
  %267 = vrot.lane.b32.xlu0 %v132, 120
  %v268 = vpop.permute.xlu0 %267
  %269 = vrot.lane.b32.xlu0 %v135, 120
  %v270 = vpop.permute.xlu0 %269
  %271 = vrot.lane.b32.xlu0 %v138, 120
  %v272 = vpop.permute.xlu0 %271
  %273 = vrot.lane.b32.xlu0 %v141, 120
  %v274 = vpop.permute.xlu0 %273
  %275 = vrot.lane.b32.xlu0 %v144, 120
  %v276 = vpop.permute.xlu0 %275
  %277 = vrot.lane.b32.xlu0 %v147, 120
  %v278 = vpop.permute.xlu0 %277
  %279 = vrot.lane.b32.xlu0 %v150, 120
  %v280 = vpop.permute.xlu0 %279
  %297 = vst.msk [vmem:[%s5] sm:$0xff] %vm152, %v250
  %298 = vst.msk [vmem:[%s5 + $0x8] sm:$0xff] %vm152, %v252
  %299 = vst.msk [vmem:[%s5 + $0x10] sm:$0xff] %vm152, %v254
  %300 = vst.msk [vmem:[%s5 + $0x18] sm:$0xff] %vm152, %v256
  %301 = vst.msk [vmem:[%s5 + $0x20] sm:$0xff] %vm152, %v258
  %302 = vst.msk [vmem:[%s5 + $0x28] sm:$0xff] %vm152, %v260
  %303 = vst.msk [vmem:[%s5 + $0x30] sm:$0xff] %vm152, %v262
  %304 = vst.msk [vmem:[%s5 + $0x38] sm:$0xff] %vm152, %v264
  %305 = vst.msk [vmem:[%s5 + $0x40] sm:$0xff] %vm152, %v266
  %306 = vst.msk [vmem:[%s5 + $0x48] sm:$0xff] %vm152, %v268
  %307 = vst.msk [vmem:[%s5 + $0x50] sm:$0xff] %vm152, %v270
  %308 = vst.msk [vmem:[%s5 + $0x58] sm:$0xff] %vm152, %v272
  %309 = vst.msk [vmem:[%s5 + $0x60] sm:$0xff] %vm152, %v274
  %310 = vst.msk [vmem:[%s5 + $0x68] sm:$0xff] %vm152, %v276
  %311 = vst.msk [vmem:[%s5 + $0x70] sm:$0xff] %vm152, %v278
  %312 = vst.msk [vmem:[%s5 + $0x78] sm:$0xff] %vm152, %v280
  // Predicated region
  $region14: #{nonlocal_block_forward.5} parent=0 // pred_check
    _
  $region15: #{nonlocal_block_forward.5} parent=0 // pred_check_branch
    %314 = sbr.rel (0) target = $region17
  $region16: #{nonlocal_block_forward.5} parent=0 // pred_region
    _
  $region17: #{nonlocal_block_forward.5} parent=0 // pred_fallthru
    _
  // Predicated region
  $region18: #{nonlocal_block_forward.5} parent=0 // pred_check
    _
  $region19: #{nonlocal_block_forward.5} parent=0 // pred_check_branch
    %316 = sbr.rel (0) target = $region21
  $region20: #{nonlocal_block_forward.5} parent=0 // pred_region
    _
  $region21: #{nonlocal_block_forward.5} parent=0 // pred_fallthru
    _
  // Predicated region
  $region22: #{nonlocal_block_forward.5} parent=0 // pred_check
    _
  $region23: #{nonlocal_block_forward.5} parent=0 // pred_check_branch
    %318 = sbr.rel (0) target = $region25
  $region24: #{nonlocal_block_forward.5} parent=0 // pred_region
    _
  $region25: #{nonlocal_block_forward.5} parent=0 // pred_fallthru
    _
  // Predicated region
  $region26: #{nonlocal_block_forward.5} parent=0 // pred_check
    _
  $region27: #{nonlocal_block_forward.5} parent=0 // pred_check_branch
    %320 = sbr.rel (0) target = $region29
  $region28: #{nonlocal_block_forward.5} parent=0 // pred_region
    _
  $region29: #{nonlocal_block_forward.5} parent=0 // pred_fallthru
    _
  // Predicated region
  $region30: #{nonlocal_block_forward.5} parent=0 // pred_check
    _
  $region31: #{nonlocal_block_forward.5} parent=0 // pred_check_branch
    %322 = sbr.rel (0) target = $region33
  $region32: #{nonlocal_block_forward.5} parent=0 // pred_region
    _
  $region33: #{nonlocal_block_forward.5} parent=0 // pred_fallthru
    _
  // Predicated region
  $region34: #{nonlocal_block_forward.5} parent=0 // pred_check
    _
  $region35: #{nonlocal_block_forward.5} parent=0 // pred_check_branch
    %324 = sbr.rel (0) target = $region37
  $region36: #{nonlocal_block_forward.5} parent=0 // pred_region
    _
  $region37: #{nonlocal_block_forward.5} parent=0 // pred_fallthru
    _

// kernel: nonlocal_block_forward.6
$region0: #{nonlocal_block_forward.6}
  #allocation0 [shape = 'u32[]', space=smem, size = 0x4, offset = 0x4, fixed_abs, tag = 'smem constant byte address 0x4 - core index']
  #allocation1 [shape = 'u32[72,128]{1,0:T(1,128)}', space=vmem, size = 0x9000, scoped, tag = 'internal scratch']
  #allocation2 [shape = 'f32[64,2]{1,0:T(8,128)}', space=vmem, size = 0x8000, scoped, tag = 'scratch operand']
  #allocation3 [shape = 'f32[64,4]{1,0:T(8,128)}', space=vmem, size = 0x8000, scoped, tag = 'scratch operand']
  #allocation4 [shape = 'f32[64,4]{1,0:T(8,128)}', space=vmem, size = 0x8000, scoped, tag = 'scratch operand']
  %s0 = inlined_call_operand.vmem [shape: f32[2,64,4], index: 0, kind: input, shape index: {}]
  %s1 = inlined_call_operand.vmem [shape: f32[2,64,4], index: 1, kind: input, shape index: {}]
  %s2 = inlined_call_operand.vmem [shape: f32[2,64,4], index: 2, kind: input, shape index: {}]
  %s3 = inlined_call_operand.vmem [shape: f32[2,64,8], index: 3, kind: input, shape index: {}]
  %s4 = inlined_call_operand.vmem [shape: f32[4,8], index: 4, kind: input, shape index: {}]
  %s5 = inlined_call_operand.vmem [shape: f32[1,8], index: 5, kind: input, shape index: {}]
  %s6 = inlined_call_operand.vmem [shape: f32[1,8], index: 6, kind: input, shape index: {}]
  %s7 = inlined_call_operand.vmem [shape: f32[2,64,8], index: 7, kind: output, shape index: {}]
  %s8 = sld [smem:[#allocation0]]
  $region69: #{nonlocal_block_forward.6} parent=0
    _
  %s10 = ssub.s32 1, %s8
  %s11 = scalar_select 0, %s10, %s8
  loop: start=0, step=1, limit=4
  $region2: #{nonlocal_block_forward.6} parent=0 // loop_pre_header
    _
  $region3: #{nonlocal_block_forward.6} parent=0 // loop_header
    %s13 = sphi 0, %s17
    %p14 = scmp.ge.s32.totalorder %s13, 4
    %s20 = sphi 0, %s39
    %s21 = sphi 0, %s35
    %s22 = sphi 0, %s31
    %s23 = sphi 0, %s20
    %s24 = sphi 0, %s21
    %s25 = sphi 0, %s22
    %s26 = sphi 0, %s23
    %s27 = sphi 0, %s24
    %s28 = sphi 0, %s25
    %s44 = sphi 0, %s46
    %s47 = sphi 0, %s44
    %s48 = sphi 0, %s47
    %s64 = sphi 0, %s48
    %s72 = sphi 0, %s74
    %s75 = sphi 0, %s72
    %s76 = sphi 0, %s75
    %s92 = sphi 0, %s76
    %s100 = sphi 0, %s102
    %s103 = sphi 0, %s100
    %s104 = sphi 0, %s103
    %s120 = sphi 0, %s104
    %s128 = sphi 0, %s130
    %s131 = sphi 0, %s128
    %s132 = sphi 0, %s131
    %s148 = sphi 0, %s132
    %s152 = sphi 0, %s152
    %s154 = sphi 0, %s152
    %s155 = sphi 0, %s154
    %s169 = sphi 0, %s155
    %s173 = sphi 0, %s173
    %s175 = sphi 0, %s173
    %s176 = sphi 0, %s175
    %s190 = sphi 0, %s176
    %s194 = sphi 0, %s194
    %s196 = sphi 0, %s194
    %s197 = sphi 0, %s196
    %s211 = sphi 0, %s197
    %s219 = sphi 0, %s221
    %s222 = sphi 0, %s219
    %s223 = sphi 0, %s222
    %s239 = sphi 0, %s223
  $region4: #{nonlocal_block_forward.6} parent=0 // loop_header_branch
    %16 = sbr.rel (%p14) target = $region8
  $region5: #{nonlocal_block_forward.6} parent=0 // loop_body
    %s18 = ssub.s32 %s13, 1
    %s19 = ssub.s32 %s13, 2
    %s29 = sadd.s32 1, %s22
    %p30 = scmp.ge.s32.totalorder %s29, 1
    %s31 = scalar_select %p30, 0, %s29
    %s32 = sadd.s32 1, %s21
    %s33 = scalar_select %p30, %s32, %s21
    %p34 = scmp.ge.s32.totalorder %s33, 1
    %s35 = scalar_select %p34, 0, %s33
    %s36 = sadd.s32 1, %s20
    %s37 = scalar_select %p34, %s36, %s20
    %p38 = scmp.ge.s32.totalorder %s37, 2
    %s39 = scalar_select %p38, 0, %s37
    %s40 = ssub.s32 %s20, %s39
    %s41 = ssub.s32 %s21, %s35
    %s42 = sor.u32 %s40, %s41
    %p43 = scmp.eq.s32.totalorder %s42, 0
    %s45 = sadd.s32 %s44, 1
    %s46 = scalar_select %p43, %s44, %s45
    %p49 = pneg %p43
    %p50 = scmp.eq.s32.totalorder %s13, 1
    %p51 = por %p49, %p50
    %p52 = scmp.ne.s32.totalorder %s44, %s47
    %p53 = scmp.eq.s32.totalorder %s13, 0
    %p54 = por %p52, %p53
    %p55 = scmp.ne.s32.totalorder %s44, %s47
    %p56 = scmp.eq.s32.totalorder %s18, 1
    %p57 = por %p55, %p56
    %p58 = scmp.ne.s32.totalorder %s47, %s48
    %p59 = scmp.eq.s32.totalorder %s18, 0
    %p60 = por %p58, %p59
    %p61 = scmp.ne.s32.totalorder %s47, %s48
    %p62 = scmp.eq.s32.totalorder %s19, 1
    %p63 = por %p61, %p62
    %p65 = scmp.ne.s32.totalorder %s48, %s64
    %p66 = scmp.eq.s32.totalorder %s19, 0
    %p67 = por %p65, %p66
    %s68 = ssub.s32 %s20, %s39
    %s69 = ssub.s32 %s22, %s31
    %s70 = sor.u32 %s68, %s69
    %p71 = scmp.eq.s32.totalorder %s70, 0
    %s73 = sadd.s32 %s72, 1
    %s74 = scalar_select %p71, %s72, %s73
    %p77 = pneg %p71
    %p78 = scmp.eq.s32.totalorder %s13, 1
    %p79 = por %p77, %p78
    %p80 = scmp.ne.s32.totalorder %s72, %s75
    %p81 = scmp.eq.s32.totalorder %s13, 0
    %p82 = por %p80, %p81
    %p83 = scmp.ne.s32.totalorder %s72, %s75
    %p84 = scmp.eq.s32.totalorder %s18, 1
    %p85 = por %p83, %p84
    %p86 = scmp.ne.s32.totalorder %s75, %s76
    %p87 = scmp.eq.s32.totalorder %s18, 0
    %p88 = por %p86, %p87
    %p89 = scmp.ne.s32.totalorder %s75, %s76
    %p90 = scmp.eq.s32.totalorder %s19, 1
    %p91 = por %p89, %p90
    %p93 = scmp.ne.s32.totalorder %s76, %s92
    %p94 = scmp.eq.s32.totalorder %s19, 0
    %p95 = por %p93, %p94
    %s96 = ssub.s32 %s20, %s39
    %s97 = ssub.s32 %s22, %s31
    %s98 = sor.u32 %s96, %s97
    %p99 = scmp.eq.s32.totalorder %s98, 0
    %s101 = sadd.s32 %s100, 1
    %s102 = scalar_select %p99, %s100, %s101
    %p105 = pneg %p99
    %p106 = scmp.eq.s32.totalorder %s13, 1
    %p107 = por %p105, %p106
    %p108 = scmp.ne.s32.totalorder %s100, %s103
    %p109 = scmp.eq.s32.totalorder %s13, 0
    %p110 = por %p108, %p109
    %p111 = scmp.ne.s32.totalorder %s100, %s103
    %p112 = scmp.eq.s32.totalorder %s18, 1
    %p113 = por %p111, %p112
    %p114 = scmp.ne.s32.totalorder %s103, %s104
    %p115 = scmp.eq.s32.totalorder %s18, 0
    %p116 = por %p114, %p115
    %p117 = scmp.ne.s32.totalorder %s103, %s104
    %p118 = scmp.eq.s32.totalorder %s19, 1
    %p119 = por %p117, %p118
    %p121 = scmp.ne.s32.totalorder %s104, %s120
    %p122 = scmp.eq.s32.totalorder %s19, 0
    %p123 = por %p121, %p122
    %s124 = ssub.s32 %s20, %s39
    %s125 = ssub.s32 %s21, %s35
    %s126 = sor.u32 %s124, %s125
    %p127 = scmp.eq.s32.totalorder %s126, 0
    %s129 = sadd.s32 %s128, 1
    %s130 = scalar_select %p127, %s128, %s129
    %p133 = pneg %p127
    %p134 = scmp.eq.s32.totalorder %s13, 1
    %p135 = por %p133, %p134
    %p136 = scmp.ne.s32.totalorder %s128, %s131
    %p137 = scmp.eq.s32.totalorder %s13, 0
    %p138 = por %p136, %p137
    %p139 = scmp.ne.s32.totalorder %s128, %s131
    %p140 = scmp.eq.s32.totalorder %s18, 1
    %p141 = por %p139, %p140
    %p142 = scmp.ne.s32.totalorder %s131, %s132
    %p143 = scmp.eq.s32.totalorder %s18, 0
    %p144 = por %p142, %p143
    %p145 = scmp.ne.s32.totalorder %s131, %s132
    %p146 = scmp.eq.s32.totalorder %s19, 1
    %p147 = por %p145, %p146
    %p149 = scmp.ne.s32.totalorder %s132, %s148
    %p150 = scmp.eq.s32.totalorder %s19, 0
    %p151 = por %p149, %p150
    %s153 = sadd.s32 %s152, 1
    %p156 = scmp.eq.s32.totalorder %s13, 1
    %p157 = scmp.ne.s32.totalorder %s152, %s154
    %p158 = scmp.eq.s32.totalorder %s13, 0
    %p159 = por %p157, %p158
    %p160 = scmp.ne.s32.totalorder %s152, %s154
    %p161 = scmp.eq.s32.totalorder %s18, 1
    %p162 = por %p160, %p161
    %p163 = scmp.ne.s32.totalorder %s154, %s155
    %p164 = scmp.eq.s32.totalorder %s18, 0
    %p165 = por %p163, %p164
    %p166 = scmp.ne.s32.totalorder %s154, %s155
    %p167 = scmp.eq.s32.totalorder %s19, 1
    %p168 = por %p166, %p167
    %p170 = scmp.ne.s32.totalorder %s155, %s169
    %p171 = scmp.eq.s32.totalorder %s19, 0
    %p172 = por %p170, %p171
    %s174 = sadd.s32 %s173, 1
    %p177 = scmp.eq.s32.totalorder %s13, 1
    %p178 = scmp.ne.s32.totalorder %s173, %s175
    %p179 = scmp.eq.s32.totalorder %s13, 0
    %p180 = por %p178, %p179
    %p181 = scmp.ne.s32.totalorder %s173, %s175
    %p182 = scmp.eq.s32.totalorder %s18, 1
    %p183 = por %p181, %p182
    %p184 = scmp.ne.s32.totalorder %s175, %s176
    %p185 = scmp.eq.s32.totalorder %s18, 0
    %p186 = por %p184, %p185
    %p187 = scmp.ne.s32.totalorder %s175, %s176
    %p188 = scmp.eq.s32.totalorder %s19, 1
    %p189 = por %p187, %p188
    %p191 = scmp.ne.s32.totalorder %s176, %s190
    %p192 = scmp.eq.s32.totalorder %s19, 0
    %p193 = por %p191, %p192
    %s195 = sadd.s32 %s194, 1
    %p198 = scmp.eq.s32.totalorder %s13, 1
    %p199 = scmp.ne.s32.totalorder %s194, %s196
    %p200 = scmp.eq.s32.totalorder %s13, 0
    %p201 = por %p199, %p200
    %p202 = scmp.ne.s32.totalorder %s194, %s196
    %p203 = scmp.eq.s32.totalorder %s18, 1
    %p204 = por %p202, %p203
    %p205 = scmp.ne.s32.totalorder %s196, %s197
    %p206 = scmp.eq.s32.totalorder %s18, 0
    %p207 = por %p205, %p206
    %p208 = scmp.ne.s32.totalorder %s196, %s197
    %p209 = scmp.eq.s32.totalorder %s19, 1
    %p210 = por %p208, %p209
    %p212 = scmp.ne.s32.totalorder %s197, %s211
    %p213 = scmp.eq.s32.totalorder %s19, 0
    %p214 = por %p212, %p213
    %s215 = ssub.s32 %s20, %s39
    %s216 = ssub.s32 %s21, %s35
    %s217 = sor.u32 %s215, %s216
    %p218 = scmp.eq.s32.totalorder %s217, 0
    %s220 = sadd.s32 %s219, 1
    %s221 = scalar_select %p218, %s219, %s220
    %p224 = pneg %p218
    %p225 = scmp.eq.s32.totalorder %s13, 1
    %p226 = por %p224, %p225
    %p227 = scmp.ne.s32.totalorder %s219, %s222
    %p228 = scmp.eq.s32.totalorder %s13, 0
    %p229 = por %p227, %p228
    %p230 = scmp.ne.s32.totalorder %s219, %s222
    %p231 = scmp.eq.s32.totalorder %s18, 1
    %p232 = por %p230, %p231
    %p233 = scmp.ne.s32.totalorder %s222, %s223
    %p234 = scmp.eq.s32.totalorder %s18, 0
    %p235 = por %p233, %p234
    %p236 = scmp.ne.s32.totalorder %s222, %s223
    %p237 = scmp.eq.s32.totalorder %s19, 1
    %p238 = por %p236, %p237
    %p240 = scmp.ne.s32.totalorder %s223, %s239
    %p241 = scmp.eq.s32.totalorder %s19, 0
    %p242 = por %p240, %p241
    %p243 = scmp.le.s32.totalorder 1, %s13
    %p244 = scmp.lt.s32.totalorder %s13, 3
    %p245 = pnand %p243, %p244
    %p246 = pneg %p245
    // Predicated region
    $region9: #{nonlocal_block_forward.6} parent=5 // pred_check
      _
    $region10: #{nonlocal_block_forward.6} parent=5 // pred_check_branch
      %248 = sbr.rel (%p245) target = $region12
    $region11: #{nonlocal_block_forward.6} parent=5 // pred_region
      %s249 = ssub.s32 %s13, 1
      // Predicated region
      $region13: #{nonlocal_block_forward.6} parent=11 // pred_check
        %p250 = pneg %p165
      $region14: #{nonlocal_block_forward.6} parent=11 // pred_check_branch
        %252 = sbr.rel (%p250) target = $region16
      $region15: #{nonlocal_block_forward.6} parent=11 // pred_region
        _
      $region16: #{nonlocal_block_forward.6} parent=11 // pred_fallthru
        _
      // Predicated region
      $region17: #{nonlocal_block_forward.6} parent=11 // pred_check
        %p253 = pneg %p186
      $region18: #{nonlocal_block_forward.6} parent=11 // pred_check_branch
        %255 = sbr.rel (%p253) target = $region20
      $region19: #{nonlocal_block_forward.6} parent=11 // pred_region
        _
      $region20: #{nonlocal_block_forward.6} parent=11 // pred_fallthru
        _
      // Predicated region
      $region21: #{nonlocal_block_forward.6} parent=11 // pred_check
        %p256 = pneg %p207
      $region22: #{nonlocal_block_forward.6} parent=11 // pred_check_branch
        %258 = sbr.rel (%p256) target = $region24
      $region23: #{nonlocal_block_forward.6} parent=11 // pred_region
        _
      $region24: #{nonlocal_block_forward.6} parent=11 // pred_fallthru
        _
    $region12: #{nonlocal_block_forward.6} parent=5 // pred_fallthru
      _
    %p259 = scmp.lt.s32.totalorder %s13, 2
    // Predicated region
    $region25: #{nonlocal_block_forward.6} parent=5 // pred_check
      %p260 = pneg %p259
    $region26: #{nonlocal_block_forward.6} parent=5 // pred_check_branch
      %262 = sbr.rel (%p260) target = $region28
    $region27: #{nonlocal_block_forward.6} parent=5 // pred_region
      // Predicated region
      $region29: #{nonlocal_block_forward.6} parent=27 // pred_check
        %p263 = pneg %p54
      $region30: #{nonlocal_block_forward.6} parent=27 // pred_check_branch
        %265 = sbr.rel (%p263) target = $region32
      $region31: #{nonlocal_block_forward.6} parent=27 // pred_region
        %s266 = smul.u32 8, %s21
        %p267 = scmp.lt.s32.totalorder %s20, 1
        %s268 = scalar_select %p267, %s20, 1
        %p269 = scmp.lt.s32.totalorder %s266, 7
        %s270 = scalar_select %p269, %s266, 7
        %s271 = smul.addr %s268, 8
        %s272 = sadd.s32 %s270, %s271
        %s273 = smul.addr %s272, 8
        %s274 = scalar_lea.vmem %s0, %s273
        %s275 = smul.u32 8, %s21
      $region32: #{nonlocal_block_forward.6} parent=27 // pred_fallthru
        _
      // Predicated region
      $region33: #{nonlocal_block_forward.6} parent=27 // pred_check
        %p276 = pneg %p82
      $region34: #{nonlocal_block_forward.6} parent=27 // pred_check_branch
        %278 = sbr.rel (%p276) target = $region36
      $region35: #{nonlocal_block_forward.6} parent=27 // pred_region
        %s279 = smul.u32 8, %s22
        %p280 = scmp.lt.s32.totalorder %s20, 1
        %s281 = scalar_select %p280, %s20, 1
        %p282 = scmp.lt.s32.totalorder %s279, 7
        %s283 = scalar_select %p282, %s279, 7
        %s284 = smul.addr %s281, 8
        %s285 = sadd.s32 %s283, %s284
        %s286 = smul.addr %s285, 8
        %s287 = scalar_lea.vmem %s1, %s286
        %s288 = smul.u32 8, %s22
      $region36: #{nonlocal_block_forward.6} parent=27 // pred_fallthru
        _
      // Predicated region
      $region37: #{nonlocal_block_forward.6} parent=27 // pred_check
        %p289 = pneg %p110
      $region38: #{nonlocal_block_forward.6} parent=27 // pred_check_branch
        %291 = sbr.rel (%p289) target = $region40
      $region39: #{nonlocal_block_forward.6} parent=27 // pred_region
        %s292 = smul.u32 8, %s22
        %p293 = scmp.lt.s32.totalorder %s20, 1
        %s294 = scalar_select %p293, %s20, 1
        %p295 = scmp.lt.s32.totalorder %s292, 7
        %s296 = scalar_select %p295, %s292, 7
        %s297 = smul.addr %s294, 8
        %s298 = sadd.s32 %s296, %s297
        %s299 = smul.addr %s298, 8
        %s300 = scalar_lea.vmem %s2, %s299
        %s301 = smul.u32 8, %s22
      $region40: #{nonlocal_block_forward.6} parent=27 // pred_fallthru
        _
      // Predicated region
      $region41: #{nonlocal_block_forward.6} parent=27 // pred_check
        %p302 = pneg %p138
      $region42: #{nonlocal_block_forward.6} parent=27 // pred_check_branch
        %304 = sbr.rel (%p302) target = $region44
      $region43: #{nonlocal_block_forward.6} parent=27 // pred_region
        %s305 = smul.u32 8, %s21
        %p306 = scmp.lt.s32.totalorder %s20, 1
        %s307 = scalar_select %p306, %s20, 1
        %p308 = scmp.lt.s32.totalorder %s305, 7
        %s309 = scalar_select %p308, %s305, 7
        %s310 = smul.addr %s307, 8
        %s311 = sadd.s32 %s309, %s310
        %s312 = smul.addr %s311, 8
        %s313 = scalar_lea.vmem %s3, %s312
        %s314 = smul.u32 8, %s21
      $region44: #{nonlocal_block_forward.6} parent=27 // pred_fallthru
        _
    $region28: #{nonlocal_block_forward.6} parent=5 // pred_fallthru
      _
    %p315 = scmp.le.s32.totalorder 1, %s13
    %p316 = scmp.lt.s32.totalorder %s13, 3
    %p317 = pnand %p315, %p316
    %p318 = pneg %p317
    // Predicated region
    $region45: #{nonlocal_block_forward.6} parent=5 // pred_check
      _
    $region46: #{nonlocal_block_forward.6} parent=5 // pred_check_branch
      %320 = sbr.rel (%p317) target = $region48
    $region47: #{nonlocal_block_forward.6} parent=5 // pred_region
      %s321 = ssub.s32 %s13, 1
      %s322 = smul.u32 8, %s24
      %p323 = scmp.lt.s32.totalorder %s23, 1
      %s324 = scalar_select %p323, %s23, 1
      %p325 = scmp.lt.s32.totalorder %s322, 7
      %s326 = scalar_select %p325, %s322, 7
      %s327 = smul.addr %s324, 8
      %s328 = sadd.s32 %s326, %s327
      %s329 = smul.addr %s328, 8
      %s330 = scalar_lea.vmem %s0, %s329
      %p331 = pneg %p60
      %p332 = pneg %p57
      %s333 = smul.u32 8, %s25
      %p334 = scmp.lt.s32.totalorder %s23, 1
      %s335 = scalar_select %p334, %s23, 1
      %p336 = scmp.lt.s32.totalorder %s333, 7
      %s337 = scalar_select %p336, %s333, 7
      %s338 = smul.addr %s335, 8
      %s339 = sadd.s32 %s337, %s338
      %s340 = smul.addr %s339, 8
      %s341 = scalar_lea.vmem %s1, %s340
      %p342 = pneg %p88
      %p343 = pneg %p85
      %s344 = smul.u32 8, %s25
      %p345 = scmp.lt.s32.totalorder %s23, 1
      %s346 = scalar_select %p345, %s23, 1
      %p347 = scmp.lt.s32.totalorder %s344, 7
      %s348 = scalar_select %p347, %s344, 7
      %s349 = smul.addr %s346, 8
      %s350 = sadd.s32 %s348, %s349
      %s351 = smul.addr %s350, 8
      %s352 = scalar_lea.vmem %s2, %s351
      %p353 = pneg %p116
      %p354 = pneg %p113
      %s355 = smul.u32 8, %s24
      %p356 = scmp.lt.s32.totalorder %s23, 1
      %s357 = scalar_select %p356, %s23, 1
      %p358 = scmp.lt.s32.totalorder %s355, 7
      %s359 = scalar_select %p358, %s355, 7
      %s360 = smul.addr %s357, 8
      %s361 = sadd.s32 %s359, %s360
      %s362 = smul.addr %s361, 8
      %s363 = scalar_lea.vmem %s3, %s362
      %p364 = pneg %p144
      %p365 = pneg %p141
      %p366 = pneg %p165
      %p367 = pneg %p162
      %p368 = pneg %p186
      %p369 = pneg %p183
      %p370 = pneg %p207
      %p371 = pneg %p204
      %p372 = pneg %p235
      %p373 = pneg %p232
      %s374 = smul.u32 8, %s24
      %p375 = scmp.lt.s32.totalorder %s23, 1
      %s376 = scalar_select %p375, %s23, 1
      %p377 = scmp.lt.s32.totalorder %s374, 7
      %s378 = scalar_select %p377, %s374, 7
      %s379 = smul.addr %s376, 8
      %s380 = sadd.s32 %s378, %s379
      %s381 = smul.addr %s380, 8
      %s382 = scalar_lea.vmem %s7, %s381
      %s383 = smul.u32 8, %s24
      %p384 = scmp.lt.s32.totalorder %s23, 1
      %s385 = scalar_select %p384, %s23, 1
      %p386 = scmp.lt.s32.totalorder %s383, 7
      %s387 = scalar_select %p386, %s383, 7
      %s388 = smul.addr %s385, 8
      %s389 = sadd.s32 %s387, %s388
      %s390 = smul.addr %s389, 8
      %s391 = scalar_lea.vmem %s0, %s390
      %s392 = smul.u32 8, %s24
      %s393 = smul.u32 8, %s25
      %p394 = scmp.lt.s32.totalorder %s23, 1
      %s395 = scalar_select %p394, %s23, 1
      %p396 = scmp.lt.s32.totalorder %s393, 7
      %s397 = scalar_select %p396, %s393, 7
      %s398 = smul.addr %s395, 8
      %s399 = sadd.s32 %s397, %s398
      %s400 = smul.addr %s399, 8
      %s401 = scalar_lea.vmem %s1, %s400
      %s402 = smul.u32 8, %s25
      %s403 = smul.u32 8, %s25
      %p404 = scmp.lt.s32.totalorder %s23, 1
      %s405 = scalar_select %p404, %s23, 1
      %p406 = scmp.lt.s32.totalorder %s403, 7
      %s407 = scalar_select %p406, %s403, 7
      %s408 = smul.addr %s405, 8
      %s409 = sadd.s32 %s407, %s408
      %s410 = smul.addr %s409, 8
      %s411 = scalar_lea.vmem %s2, %s410
      %s412 = smul.u32 8, %s25
      %s413 = smul.u32 8, %s24
      %p414 = scmp.lt.s32.totalorder %s23, 1
      %s415 = scalar_select %p414, %s23, 1
      %p416 = scmp.lt.s32.totalorder %s413, 7
      %s417 = scalar_select %p416, %s413, 7
      %s418 = smul.addr %s415, 8
      %s419 = sadd.s32 %s417, %s418
      %s420 = smul.addr %s419, 8
      %s421 = scalar_lea.vmem %s3, %s420
      %s422 = smul.u32 8, %s24
      %s423 = smul.u32 8, %s24
      %p424 = scmp.lt.s32.totalorder %s23, 1
      %s425 = scalar_select %p424, %s23, 1
      %p426 = scmp.lt.s32.totalorder %s423, 7
      %s427 = scalar_select %p426, %s423, 7
      %s428 = smul.addr %s425, 8
      %s429 = sadd.s32 %s427, %s428
      %s430 = smul.addr %s429, 8
      %s431 = scalar_lea.vmem %s7, %s430
      %s432 = smul.u32 8, %s24
      %p433 = scmp.eq.s32.totalorder %s25, 0
      // Predicated region
      $region49: #{nonlocal_block_forward.6} parent=47 // pred_check
        %p434 = pneg %p433
      $region50: #{nonlocal_block_forward.6} parent=47 // pred_check_branch
        %436 = sbr.rel (%p434) target = $region52
      $region51: #{nonlocal_block_forward.6} parent=47 // pred_region
        %vm437 = vcmask 15360
        %438 = vst.msk [vmem:[#allocation2] sm:$0xff] %vm437, -inf
        %439 = vst.msk [vmem:[#allocation2 + $0x8] sm:$0xff] %vm437, -inf
        %440 = vst.msk [vmem:[#allocation2 + $0x10] sm:$0xff] %vm437, -inf
        %441 = vst.msk [vmem:[#allocation2 + $0x18] sm:$0xff] %vm437, -inf
        %442 = vst.msk [vmem:[#allocation2 + $0x20] sm:$0xff] %vm437, -inf
        %443 = vst.msk [vmem:[#allocation2 + $0x28] sm:$0xff] %vm437, -inf
        %444 = vst.msk [vmem:[#allocation2 + $0x30] sm:$0xff] %vm437, -inf
        %445 = vst.msk [vmem:[#allocation2 + $0x38] sm:$0xff] %vm437, -inf
        %vm446 = vcmask 31744
        %447 = vst.msk [vmem:[#allocation3] sm:$0xff] %vm446, 0.0
        %448 = vst.msk [vmem:[#allocation3 + $0x8] sm:$0xff] %vm446, 0.0
        %449 = vst.msk [vmem:[#allocation3 + $0x10] sm:$0xff] %vm446, 0.0
        %450 = vst.msk [vmem:[#allocation3 + $0x18] sm:$0xff] %vm446, 0.0
        %451 = vst.msk [vmem:[#allocation3 + $0x20] sm:$0xff] %vm446, 0.0
        %452 = vst.msk [vmem:[#allocation3 + $0x28] sm:$0xff] %vm446, 0.0
        %453 = vst.msk [vmem:[#allocation3 + $0x30] sm:$0xff] %vm446, 0.0
        %454 = vst.msk [vmem:[#allocation3 + $0x38] sm:$0xff] %vm446, 0.0
        %455 = vst.msk [vmem:[#allocation4] sm:$0xff] %vm446, 0.0
        %456 = vst.msk [vmem:[#allocation4 + $0x8] sm:$0xff] %vm446, 0.0
        %457 = vst.msk [vmem:[#allocation4 + $0x10] sm:$0xff] %vm446, 0.0
        %458 = vst.msk [vmem:[#allocation4 + $0x18] sm:$0xff] %vm446, 0.0
        %459 = vst.msk [vmem:[#allocation4 + $0x20] sm:$0xff] %vm446, 0.0
        %460 = vst.msk [vmem:[#allocation4 + $0x28] sm:$0xff] %vm446, 0.0
        %461 = vst.msk [vmem:[#allocation4 + $0x30] sm:$0xff] %vm446, 0.0
        %462 = vst.msk [vmem:[#allocation4 + $0x38] sm:$0xff] %vm446, 0.0
      $region52: #{nonlocal_block_forward.6} parent=47 // pred_fallthru
        _
      %v463 = vld [vmem:[%s391] sm:$0xff]
      %v464 = vld [vmem:[%s391 + $0x8] sm:$0xff]
      %v465 = vld [vmem:[%s391 + $0x10] sm:$0xff]
      %v466 = vld [vmem:[%s391 + $0x18] sm:$0xff]
      %v467 = vld [vmem:[%s391 + $0x20] sm:$0xff]
      %v468 = vld [vmem:[%s391 + $0x28] sm:$0xff]
      %v469 = vld [vmem:[%s391 + $0x30] sm:$0xff]
      %v470 = vld [vmem:[%s391 + $0x38] sm:$0xff]
      %v471 = vld [vmem:[%s401] sm:$0xff]
      %v472 = vld [vmem:[%s401 + $0x8] sm:$0xff]
      %v473 = vld [vmem:[%s401 + $0x10] sm:$0xff]
      %v474 = vld [vmem:[%s401 + $0x18] sm:$0xff]
      %v475 = vld [vmem:[%s401 + $0x20] sm:$0xff]
      %v476 = vld [vmem:[%s401 + $0x28] sm:$0xff]
      %v477 = vld [vmem:[%s401 + $0x30] sm:$0xff]
      %v478 = vld [vmem:[%s401 + $0x38] sm:$0xff]
      %v479 = vld [vmem:[%s411] sm:$0xff]
      %v480 = vld [vmem:[%s411 + $0x8] sm:$0xff]
      %v481 = vld [vmem:[%s411 + $0x10] sm:$0xff]
      %v482 = vld [vmem:[%s411 + $0x18] sm:$0xff]
      %v483 = vld [vmem:[%s411 + $0x20] sm:$0xff]
      %v484 = vld [vmem:[%s411 + $0x28] sm:$0xff]
      %v485 = vld [vmem:[%s411 + $0x30] sm:$0xff]
      %v486 = vld [vmem:[%s411 + $0x38] sm:$0xff]
      %vm487 = vcmask 15360
      %v489 = vsel %vm487, %v463, 0
      %v492 = vsel %vm487, %v464, 0
      %v495 = vsel %vm487, %v465, 0
      %v498 = vsel %vm487, %v466, 0
      %v501 = vsel %vm487, %v467, 0
      %v504 = vsel %vm487, %v468, 0
      %v507 = vsel %vm487, %v469, 0
      %v510 = vsel %vm487, %v470, 0
      %v513 = vsel %vm487, %v471, 0
      %v516 = vsel %vm487, %v472, 0
      %v519 = vsel %vm487, %v473, 0
      %v522 = vsel %vm487, %v474, 0
      %v525 = vsel %vm487, %v475, 0
      %v528 = vsel %vm487, %v476, 0
      %v531 = vsel %vm487, %v477, 0
      %v534 = vsel %vm487, %v478, 0
      %536 = vmatpush.xpose.msra.mxu0 0.0
      %537 = vmatpush.xpose.msra.mxu0 0.0
      %538 = vmatpush.xpose.msra.mxu0 0.0
      %539 = vmatpush.xpose.msra.mxu0 0.0
      %540 = vmatpush.xpose.msra.mxu0 0.0
      %541 = vmatpush.xpose.msra.mxu0 0.0
      %542 = vmatpush.xpose.msra.mxu0 0.0
      %543 = vmatpush.xpose.msra.mxu0 0.0
      %544 = vmatpush.xpose.msra.mxu0 %v534
      %545 = vmatpush.xpose.msra.mxu0 %v531
      %546 = vmatpush.xpose.msra.mxu0 %v528
      %547 = vmatpush.xpose.msra.mxu0 %v525
      %548 = vmatpush.xpose.msra.mxu0 %v522
      %549 = vmatpush.xpose.msra.mxu0 %v519
      %550 = vmatpush.xpose.msra.mxu0 %v516
      %551 = vmatpush.xpose.msra.mxu0 %v513
      %552 = vmatmul.f32.gmra.mxu0 %v489
      %v553 = vpop.f32.mrf.mxu0
      %v554 = vadd.f32 0.0, %v553
      %555 = vmatmul.f32.gmra.mxu0 %v492
      %v556 = vpop.f32.mrf.mxu0
      %v557 = vadd.f32 0.0, %v556
      %558 = vmatmul.f32.gmra.mxu0 %v495
      %v559 = vpop.f32.mrf.mxu0
      %v560 = vadd.f32 0.0, %v559
      %561 = vmatmul.f32.gmra.mxu0 %v498
      %v562 = vpop.f32.mrf.mxu0
      %v563 = vadd.f32 0.0, %v562
      %564 = vmatmul.f32.gmra.mxu0 %v501
      %v565 = vpop.f32.mrf.mxu0
      %v566 = vadd.f32 0.0, %v565
      %567 = vmatmul.f32.gmra.mxu0 %v504
      %v568 = vpop.f32.mrf.mxu0
      %v569 = vadd.f32 0.0, %v568
      %570 = vmatmul.f32.gmra.mxu0 %v507
      %v571 = vpop.f32.mrf.mxu0
      %v572 = vadd.f32 0.0, %v571
      %573 = vmatmul.f32.gmra.mxu0 %v510
      %v574 = vpop.f32.mrf.mxu0
      %v575 = vadd.f32 0.0, %v574
      %576 = vdwg.mxu0
      %v577 = vld [vmem:[#allocation2] sm:$0xff]
      %v578 = vld [vmem:[#allocation2 + $0x8] sm:$0xff]
      %v579 = vld [vmem:[#allocation2 + $0x10] sm:$0xff]
      %v580 = vld [vmem:[#allocation2 + $0x18] sm:$0xff]
      %v581 = vld [vmem:[#allocation2 + $0x20] sm:$0xff]
      %v582 = vld [vmem:[#allocation2 + $0x28] sm:$0xff]
      %v583 = vld [vmem:[#allocation2 + $0x30] sm:$0xff]
      %v584 = vld [vmem:[#allocation2 + $0x38] sm:$0xff]
      %vm585 = vcmask 523264
      %v586 = vsel %vm585, %v554, -inf
      %587 = vmax.xlane.f32.xlu0 %v586
      %v588 = vpop.xlane.xlu0 %587
      %v589 = vsel %vm585, %v557, -inf
      %590 = vmax.xlane.f32.xlu0 %v589
      %v591 = vpop.xlane.xlu0 %590
      %v592 = vsel %vm585, %v560, -inf
      %593 = vmax.xlane.f32.xlu0 %v592
      %v594 = vpop.xlane.xlu0 %593
      %v595 = vsel %vm585, %v563, -inf
      %596 = vmax.xlane.f32.xlu0 %v595
      %v597 = vpop.xlane.xlu0 %596
      %v598 = vsel %vm585, %v566, -inf
      %599 = vmax.xlane.f32.xlu0 %v598
      %v600 = vpop.xlane.xlu0 %599
      %v601 = vsel %vm585, %v569, -inf
      %602 = vmax.xlane.f32.xlu0 %v601
      %v603 = vpop.xlane.xlu0 %602
      %v604 = vsel %vm585, %v572, -inf
      %605 = vmax.xlane.f32.xlu0 %v604
      %v606 = vpop.xlane.xlu0 %605
      %v607 = vsel %vm585, %v575, -inf
      %608 = vmax.xlane.f32.xlu0 %v607
      %v609 = vpop.xlane.xlu0 %608
      %v610 = vmax.f32 %v577, %v588
      %v611 = vmax.f32 %v578, %v591
      %v612 = vmax.f32 %v579, %v594
      %v613 = vmax.f32 %v580, %v597
      %v614 = vmax.f32 %v581, %v600
      %v615 = vmax.f32 %v582, %v603
      %v616 = vmax.f32 %v583, %v606
      %v617 = vmax.f32 %v584, %v609
      %v618 = vsub.f32 %v577, %v610
      %v619 = vsub.f32 %v578, %v611
      %v620 = vsub.f32 %v579, %v612
      %v621 = vsub.f32 %v580, %v613
      %v622 = vsub.f32 %v581, %v614
      %v623 = vsub.f32 %v582, %v615
      %v624 = vsub.f32 %v583, %v616
      %v625 = vsub.f32 %v584, %v617
      %v626 = vmul.f32 %v618, 1.442695
      %v627 = vpow.pop %v626
      %v628 = vmul.f32 %v619, 1.442695
      %v629 = vpow.pop %v628
      %v630 = vmul.f32 %v620, 1.442695
      %v631 = vpow.pop %v630
      %v632 = vmul.f32 %v621, 1.442695
      %v633 = vpow.pop %v632
      %v634 = vmul.f32 %v622, 1.442695
      %v635 = vpow.pop %v634
      %v636 = vmul.f32 %v623, 1.442695
      %v637 = vpow.pop %v636
      %v638 = vmul.f32 %v624, 1.442695
      %v639 = vpow.pop %v638
      %v640 = vmul.f32 %v625, 1.442695
      %v641 = vpow.pop %v640
      %643 = vset.pattern.permute.xlu0 0
      %644 = vperm.xlu0 %643, %v610
      %v645 = vpop.permute.xlu0 %644
      %648 = vset.pattern.permute.xlu0 0
      %649 = vperm.xlu0 %648, %v611
      %v650 = vpop.permute.xlu0 %649
      %653 = vset.pattern.permute.xlu0 0
      %654 = vperm.xlu0 %653, %v612
      %v655 = vpop.permute.xlu0 %654
      %658 = vset.pattern.permute.xlu0 0
      %659 = vperm.xlu0 %658, %v613
      %v660 = vpop.permute.xlu0 %659
      %663 = vset.pattern.permute.xlu0 0
      %664 = vperm.xlu0 %663, %v614
      %v665 = vpop.permute.xlu0 %664
      %668 = vset.pattern.permute.xlu0 0
      %669 = vperm.xlu0 %668, %v615
      %v670 = vpop.permute.xlu0 %669
      %673 = vset.pattern.permute.xlu0 0
      %674 = vperm.xlu0 %673, %v616
      %v675 = vpop.permute.xlu0 %674
      %678 = vset.pattern.permute.xlu0 0
      %679 = vperm.xlu0 %678, %v617
      %v680 = vpop.permute.xlu0 %679
      %v682 = vsub.f32 %v554, %v645
      %v683 = vsub.f32 %v557, %v650
      %v684 = vsub.f32 %v560, %v655
      %v685 = vsub.f32 %v563, %v660
      %v686 = vsub.f32 %v566, %v665
      %v687 = vsub.f32 %v569, %v670
      %v688 = vsub.f32 %v572, %v675
      %v689 = vsub.f32 %v575, %v680
      %v690 = vmul.f32 %v682, 1.442695
      %v691 = vpow.pop %v690
      %v692 = vmul.f32 %v683, 1.442695
      %v693 = vpow.pop %v692
      %v694 = vmul.f32 %v684, 1.442695
      %v695 = vpow.pop %v694
      %v696 = vmul.f32 %v685, 1.442695
      %v697 = vpow.pop %v696
      %v698 = vmul.f32 %v686, 1.442695
      %v699 = vpow.pop %v698
      %v700 = vmul.f32 %v687, 1.442695
      %v701 = vpow.pop %v700
      %v702 = vmul.f32 %v688, 1.442695
      %v703 = vpow.pop %v702
      %v704 = vmul.f32 %v689, 1.442695
      %v705 = vpow.pop %v704
      %v706 = vld [vmem:[#allocation3] sm:$0xff]
      %v707 = vld [vmem:[#allocation3 + $0x8] sm:$0xff]
      %v708 = vld [vmem:[#allocation3 + $0x10] sm:$0xff]
      %v709 = vld [vmem:[#allocation3 + $0x18] sm:$0xff]
      %v710 = vld [vmem:[#allocation3 + $0x20] sm:$0xff]
      %v711 = vld [vmem:[#allocation3 + $0x28] sm:$0xff]
      %v712 = vld [vmem:[#allocation3 + $0x30] sm:$0xff]
      %v713 = vld [vmem:[#allocation3 + $0x38] sm:$0xff]
      %715 = vset.pattern.permute.xlu0 0
      %716 = vperm.xlu0 %715, %v627
      %v717 = vpop.permute.xlu0 %716
      %720 = vset.pattern.permute.xlu0 0
      %721 = vperm.xlu0 %720, %v629
      %v722 = vpop.permute.xlu0 %721
      %725 = vset.pattern.permute.xlu0 0
      %726 = vperm.xlu0 %725, %v631
      %v727 = vpop.permute.xlu0 %726
      %730 = vset.pattern.permute.xlu0 0
      %731 = vperm.xlu0 %730, %v633
      %v732 = vpop.permute.xlu0 %731
      %735 = vset.pattern.permute.xlu0 0
      %736 = vperm.xlu0 %735, %v635
      %v737 = vpop.permute.xlu0 %736
      %740 = vset.pattern.permute.xlu0 0
      %741 = vperm.xlu0 %740, %v637
      %v742 = vpop.permute.xlu0 %741
      %745 = vset.pattern.permute.xlu0 0
      %746 = vperm.xlu0 %745, %v639
      %v747 = vpop.permute.xlu0 %746
      %750 = vset.pattern.permute.xlu0 0
      %751 = vperm.xlu0 %750, %v641
      %v752 = vpop.permute.xlu0 %751
      %v754 = vmul.f32 %v717, %v706
      %v755 = vmul.f32 %v722, %v707
      %v756 = vmul.f32 %v727, %v708
      %v757 = vmul.f32 %v732, %v709
      %v758 = vmul.f32 %v737, %v710
      %v759 = vmul.f32 %v742, %v711
      %v760 = vmul.f32 %v747, %v712
      %v761 = vmul.f32 %v752, %v713
      %v762 = vsel %vm585, %v691, 0.0
      %763 = vadd.xlane.f32.xlu0 %v762
      %v764 = vpop.xlane.xlu0 %763
      %v765 = vsel %vm585, %v693, 0.0
      %766 = vadd.xlane.f32.xlu0 %v765
      %v767 = vpop.xlane.xlu0 %766
      %v768 = vsel %vm585, %v695, 0.0
      %769 = vadd.xlane.f32.xlu0 %v768
      %v770 = vpop.xlane.xlu0 %769
      %v771 = vsel %vm585, %v697, 0.0
      %772 = vadd.xlane.f32.xlu0 %v771
      %v773 = vpop.xlane.xlu0 %772
      %v774 = vsel %vm585, %v699, 0.0
      %775 = vadd.xlane.f32.xlu0 %v774
      %v776 = vpop.xlane.xlu0 %775
      %v777 = vsel %vm585, %v701, 0.0
      %778 = vadd.xlane.f32.xlu0 %v777
      %v779 = vpop.xlane.xlu0 %778
      %v780 = vsel %vm585, %v703, 0.0
      %781 = vadd.xlane.f32.xlu0 %v780
      %v782 = vpop.xlane.xlu0 %781
      %v783 = vsel %vm585, %v705, 0.0
      %784 = vadd.xlane.f32.xlu0 %v783
      %v785 = vpop.xlane.xlu0 %784
      %v786 = vadd.f32 %v754, %v764
      %v787 = vadd.f32 %v755, %v767
      %v788 = vadd.f32 %v756, %v770
      %v789 = vadd.f32 %v757, %v773
      %v790 = vadd.f32 %v758, %v776
      %v791 = vadd.f32 %v759, %v779
      %v792 = vadd.f32 %v760, %v782
      %v793 = vadd.f32 %v761, %v785
      %794 = vst.msk [vmem:[#allocation3] sm:$0xff] %vm487, %v786
      %795 = vst.msk [vmem:[#allocation3 + $0x8] sm:$0xff] %vm487, %v787
      %796 = vst.msk [vmem:[#allocation3 + $0x10] sm:$0xff] %vm487, %v788
      %797 = vst.msk [vmem:[#allocation3 + $0x18] sm:$0xff] %vm487, %v789
      %798 = vst.msk [vmem:[#allocation3 + $0x20] sm:$0xff] %vm487, %v790
      %799 = vst.msk [vmem:[#allocation3 + $0x28] sm:$0xff] %vm487, %v791
      %800 = vst.msk [vmem:[#allocation3 + $0x30] sm:$0xff] %vm487, %v792
      %801 = vst.msk [vmem:[#allocation3 + $0x38] sm:$0xff] %vm487, %v793
      %v802 = vld [vmem:[#allocation4] sm:$0xff]
      %v803 = vld [vmem:[#allocation4 + $0x8] sm:$0xff]
      %v804 = vld [vmem:[#allocation4 + $0x10] sm:$0xff]
      %v805 = vld [vmem:[#allocation4 + $0x18] sm:$0xff]
      %v806 = vld [vmem:[#allocation4 + $0x20] sm:$0xff]
      %v807 = vld [vmem:[#allocation4 + $0x28] sm:$0xff]
      %v808 = vld [vmem:[#allocation4 + $0x30] sm:$0xff]
      %v809 = vld [vmem:[#allocation4 + $0x38] sm:$0xff]
      %v810 = vmul.f32 %v717, %v802
      %v811 = vmul.f32 %v722, %v803
      %v812 = vmul.f32 %v727, %v804
      %v813 = vmul.f32 %v732, %v805
      %v814 = vmul.f32 %v737, %v806
      %v815 = vmul.f32 %v742, %v807
      %v816 = vmul.f32 %v747, %v808
      %v817 = vmul.f32 %v752, %v809
      %v819 = vsel %vm585, %v691, 0
      %v822 = vsel %vm585, %v693, 0
      %v825 = vsel %vm585, %v695, 0
      %v828 = vsel %vm585, %v697, 0
      %v831 = vsel %vm585, %v699, 0
      %v834 = vsel %vm585, %v701, 0
      %v837 = vsel %vm585, %v703, 0
      %v840 = vsel %vm585, %v705, 0
      %842 = vmatpush.msra.mxu0 0.0
      %843 = vmatpush.msra.mxu0 0.0
      %844 = vmatpush.msra.mxu0 0.0
      %845 = vmatpush.msra.mxu0 0.0
      %846 = vmatpush.msra.mxu0 0.0
      %847 = vmatpush.msra.mxu0 0.0
      %848 = vmatpush.msra.mxu0 0.0
      %849 = vmatpush.msra.mxu0 0.0
      %850 = vmatpush.msra.mxu0 %v486
      %851 = vmatpush.msra.mxu0 %v485
      %852 = vmatpush.msra.mxu0 %v484
      %853 = vmatpush.msra.mxu0 %v483
      %854 = vmatpush.msra.mxu0 %v482
      %855 = vmatpush.msra.mxu0 %v481
      %856 = vmatpush.msra.mxu0 %v480
      %857 = vmatpush.msra.mxu0 %v479
      %858 = vmatmul.f32.gmra.mxu0 %v819
      %v859 = vpop.f32.mrf.mxu0
      %v860 = vadd.f32 0.0, %v859
      %861 = vmatmul.f32.gmra.mxu0 %v822
      %v862 = vpop.f32.mrf.mxu0
      %v863 = vadd.f32 0.0, %v862
      %864 = vmatmul.f32.gmra.mxu0 %v825
      %v865 = vpop.f32.mrf.mxu0
      %v866 = vadd.f32 0.0, %v865
      %867 = vmatmul.f32.gmra.mxu0 %v828
      %v868 = vpop.f32.mrf.mxu0
      %v869 = vadd.f32 0.0, %v868
      %870 = vmatmul.f32.gmra.mxu0 %v831
      %v871 = vpop.f32.mrf.mxu0
      %v872 = vadd.f32 0.0, %v871
      %873 = vmatmul.f32.gmra.mxu0 %v834
      %v874 = vpop.f32.mrf.mxu0
      %v875 = vadd.f32 0.0, %v874
      %876 = vmatmul.f32.gmra.mxu0 %v837
      %v877 = vpop.f32.mrf.mxu0
      %v878 = vadd.f32 0.0, %v877
      %879 = vmatmul.f32.gmra.mxu0 %v840
      %v880 = vpop.f32.mrf.mxu0
      %v881 = vadd.f32 0.0, %v880
      %882 = vdwg.mxu0
      %v883 = vadd.f32 %v810, %v860
      %v884 = vadd.f32 %v811, %v863
      %v885 = vadd.f32 %v812, %v866
      %v886 = vadd.f32 %v813, %v869
      %v887 = vadd.f32 %v814, %v872
      %v888 = vadd.f32 %v815, %v875
      %v889 = vadd.f32 %v816, %v878
      %v890 = vadd.f32 %v817, %v881
      %891 = vst.msk [vmem:[#allocation4] sm:$0xff] %vm487, %v883
      %892 = vst.msk [vmem:[#allocation4 + $0x8] sm:$0xff] %vm487, %v884
      %893 = vst.msk [vmem:[#allocation4 + $0x10] sm:$0xff] %vm487, %v885
      %894 = vst.msk [vmem:[#allocation4 + $0x18] sm:$0xff] %vm487, %v886
      %895 = vst.msk [vmem:[#allocation4 + $0x20] sm:$0xff] %vm487, %v887
      %896 = vst.msk [vmem:[#allocation4 + $0x28] sm:$0xff] %vm487, %v888
      %897 = vst.msk [vmem:[#allocation4 + $0x30] sm:$0xff] %vm487, %v889
      %898 = vst.msk [vmem:[#allocation4 + $0x38] sm:$0xff] %vm487, %v890
      %vm899 = vcmask 7168
      %900 = vst.msk [vmem:[#allocation2] sm:$0xff] %vm899, %v610
      %901 = vst.msk [vmem:[#allocation2 + $0x8] sm:$0xff] %vm899, %v611
      %902 = vst.msk [vmem:[#allocation2 + $0x10] sm:$0xff] %vm899, %v612
      %903 = vst.msk [vmem:[#allocation2 + $0x18] sm:$0xff] %vm899, %v613
      %904 = vst.msk [vmem:[#allocation2 + $0x20] sm:$0xff] %vm899, %v614
      %905 = vst.msk [vmem:[#allocation2 + $0x28] sm:$0xff] %vm899, %v615
      %906 = vst.msk [vmem:[#allocation2 + $0x30] sm:$0xff] %vm899, %v616
      %907 = vst.msk [vmem:[#allocation2 + $0x38] sm:$0xff] %vm899, %v617
      %908 = vrot.lane.b32.xlu0 %v463, 126
      %v909 = vpop.permute.xlu0 %908
      %910 = vrot.lane.b32.xlu0 %v464, 126
      %v911 = vpop.permute.xlu0 %910
      %912 = vrot.lane.b32.xlu0 %v465, 126
      %v913 = vpop.permute.xlu0 %912
      %914 = vrot.lane.b32.xlu0 %v466, 126
      %v915 = vpop.permute.xlu0 %914
      %916 = vrot.lane.b32.xlu0 %v467, 126
      %v917 = vpop.permute.xlu0 %916
      %918 = vrot.lane.b32.xlu0 %v468, 126
      %v919 = vpop.permute.xlu0 %918
      %920 = vrot.lane.b32.xlu0 %v469, 126
      %v921 = vpop.permute.xlu0 %920
      %922 = vrot.lane.b32.xlu0 %v470, 126
      %v923 = vpop.permute.xlu0 %922
      %924 = vrot.lane.b32.xlu0 %v471, 126
      %v925 = vpop.permute.xlu0 %924
      %926 = vrot.lane.b32.xlu0 %v472, 126
      %v927 = vpop.permute.xlu0 %926
      %928 = vrot.lane.b32.xlu0 %v473, 126
      %v929 = vpop.permute.xlu0 %928
      %930 = vrot.lane.b32.xlu0 %v474, 126
      %v931 = vpop.permute.xlu0 %930
      %932 = vrot.lane.b32.xlu0 %v475, 126
      %v933 = vpop.permute.xlu0 %932
      %934 = vrot.lane.b32.xlu0 %v476, 126
      %v935 = vpop.permute.xlu0 %934
      %936 = vrot.lane.b32.xlu0 %v477, 126
      %v937 = vpop.permute.xlu0 %936
      %938 = vrot.lane.b32.xlu0 %v478, 126
      %v939 = vpop.permute.xlu0 %938
      %v940 = vsel %vm487, %v909, 0
      %v942 = vsel %vm487, %v911, 0
      %v944 = vsel %vm487, %v913, 0
      %v946 = vsel %vm487, %v915, 0
      %v948 = vsel %vm487, %v917, 0
      %v950 = vsel %vm487, %v919, 0
      %v952 = vsel %vm487, %v921, 0
      %v954 = vsel %vm487, %v923, 0
      %v956 = vsel %vm487, %v925, 0
      %v958 = vsel %vm487, %v927, 0
      %v960 = vsel %vm487, %v929, 0
      %v962 = vsel %vm487, %v931, 0
      %v964 = vsel %vm487, %v933, 0
      %v966 = vsel %vm487, %v935, 0
      %v968 = vsel %vm487, %v937, 0
      %v970 = vsel %vm487, %v939, 0
      %972 = vmatpush.xpose.msra.mxu0 0.0
      %973 = vmatpush.xpose.msra.mxu0 0.0
      %974 = vmatpush.xpose.msra.mxu0 0.0
      %975 = vmatpush.xpose.msra.mxu0 0.0
      %976 = vmatpush.xpose.msra.mxu0 0.0
      %977 = vmatpush.xpose.msra.mxu0 0.0
      %978 = vmatpush.xpose.msra.mxu0 0.0
      %979 = vmatpush.xpose.msra.mxu0 0.0
      %980 = vmatpush.xpose.msra.mxu0 %v970
      %981 = vmatpush.xpose.msra.mxu0 %v968
      %982 = vmatpush.xpose.msra.mxu0 %v966
      %983 = vmatpush.xpose.msra.mxu0 %v964
      %984 = vmatpush.xpose.msra.mxu0 %v962
      %985 = vmatpush.xpose.msra.mxu0 %v960
      %986 = vmatpush.xpose.msra.mxu0 %v958
      %987 = vmatpush.xpose.msra.mxu0 %v956
      %988 = vmatmul.f32.gmra.mxu0 %v940
      %v989 = vpop.f32.mrf.mxu0
      %v990 = vadd.f32 0.0, %v989
      %991 = vmatmul.f32.gmra.mxu0 %v942
      %v992 = vpop.f32.mrf.mxu0
      %v993 = vadd.f32 0.0, %v992
      %994 = vmatmul.f32.gmra.mxu0 %v944
      %v995 = vpop.f32.mrf.mxu0
      %v996 = vadd.f32 0.0, %v995
      %997 = vmatmul.f32.gmra.mxu0 %v946
      %v998 = vpop.f32.mrf.mxu0
      %v999 = vadd.f32 0.0, %v998
      %1000 = vmatmul.f32.gmra.mxu0 %v948
      %v1001 = vpop.f32.mrf.mxu0
      %v1002 = vadd.f32 0.0, %v1001
      %1003 = vmatmul.f32.gmra.mxu0 %v950
      %v1004 = vpop.f32.mrf.mxu0
      %v1005 = vadd.f32 0.0, %v1004
      %1006 = vmatmul.f32.gmra.mxu0 %v952
      %v1007 = vpop.f32.mrf.mxu0
      %v1008 = vadd.f32 0.0, %v1007
      %1009 = vmatmul.f32.gmra.mxu0 %v954
      %v1010 = vpop.f32.mrf.mxu0
      %v1011 = vadd.f32 0.0, %v1010
      %1012 = vdwg.mxu0
      %v1013 = vld [vmem:[#allocation2] sm:$0xff]
      %v1014 = vld [vmem:[#allocation2 + $0x8] sm:$0xff]
      %v1015 = vld [vmem:[#allocation2 + $0x10] sm:$0xff]
      %v1016 = vld [vmem:[#allocation2 + $0x18] sm:$0xff]
      %v1017 = vld [vmem:[#allocation2 + $0x20] sm:$0xff]
      %v1018 = vld [vmem:[#allocation2 + $0x28] sm:$0xff]
      %v1019 = vld [vmem:[#allocation2 + $0x30] sm:$0xff]
      %v1020 = vld [vmem:[#allocation2 + $0x38] sm:$0xff]
      %v1021 = vsel %vm585, %v990, -inf
      %1022 = vmax.xlane.f32.xlu0 %v1021
      %v1023 = vpop.xlane.xlu0 %1022
      %v1024 = vsel %vm585, %v993, -inf
      %1025 = vmax.xlane.f32.xlu0 %v1024
      %v1026 = vpop.xlane.xlu0 %1025
      %v1027 = vsel %vm585, %v996, -inf
      %1028 = vmax.xlane.f32.xlu0 %v1027
      %v1029 = vpop.xlane.xlu0 %1028
      %v1030 = vsel %vm585, %v999, -inf
      %1031 = vmax.xlane.f32.xlu0 %v1030
      %v1032 = vpop.xlane.xlu0 %1031
      %v1033 = vsel %vm585, %v1002, -inf
      %1034 = vmax.xlane.f32.xlu0 %v1033
      %v1035 = vpop.xlane.xlu0 %1034
      %v1036 = vsel %vm585, %v1005, -inf
      %1037 = vmax.xlane.f32.xlu0 %v1036
      %v1038 = vpop.xlane.xlu0 %1037
      %v1039 = vsel %vm585, %v1008, -inf
      %1040 = vmax.xlane.f32.xlu0 %v1039
      %v1041 = vpop.xlane.xlu0 %1040
      %v1042 = vsel %vm585, %v1011, -inf
      %1043 = vmax.xlane.f32.xlu0 %v1042
      %v1044 = vpop.xlane.xlu0 %1043
      %v1045 = vmax.f32 %v1013, %v1023
      %v1046 = vmax.f32 %v1014, %v1026
      %v1047 = vmax.f32 %v1015, %v1029
      %v1048 = vmax.f32 %v1016, %v1032
      %v1049 = vmax.f32 %v1017, %v1035
      %v1050 = vmax.f32 %v1018, %v1038
      %v1051 = vmax.f32 %v1019, %v1041
      %v1052 = vmax.f32 %v1020, %v1044
      %v1053 = vsub.f32 %v1013, %v1045
      %v1054 = vsub.f32 %v1014, %v1046
      %v1055 = vsub.f32 %v1015, %v1047
      %v1056 = vsub.f32 %v1016, %v1048
      %v1057 = vsub.f32 %v1017, %v1049
      %v1058 = vsub.f32 %v1018, %v1050
      %v1059 = vsub.f32 %v1019, %v1051
      %v1060 = vsub.f32 %v1020, %v1052
      %v1061 = vmul.f32 %v1053, 1.442695
      %v1062 = vpow.pop %v1061
      %v1063 = vmul.f32 %v1054, 1.442695
      %v1064 = vpow.pop %v1063
      %v1065 = vmul.f32 %v1055, 1.442695
      %v1066 = vpow.pop %v1065
      %v1067 = vmul.f32 %v1056, 1.442695
      %v1068 = vpow.pop %v1067
      %v1069 = vmul.f32 %v1057, 1.442695
      %v1070 = vpow.pop %v1069
      %v1071 = vmul.f32 %v1058, 1.442695
      %v1072 = vpow.pop %v1071
      %v1073 = vmul.f32 %v1059, 1.442695
      %v1074 = vpow.pop %v1073
      %v1075 = vmul.f32 %v1060, 1.442695
      %v1076 = vpow.pop %v1075
      %1078 = vset.pattern.permute.xlu0 1
      %1079 = vperm.xlu0 %1078, %v1045
      %v1080 = vpop.permute.xlu0 %1079
      %1083 = vset.pattern.permute.xlu0 1
      %1084 = vperm.xlu0 %1083, %v1046
      %v1085 = vpop.permute.xlu0 %1084
      %1088 = vset.pattern.permute.xlu0 1
      %1089 = vperm.xlu0 %1088, %v1047
      %v1090 = vpop.permute.xlu0 %1089
      %1093 = vset.pattern.permute.xlu0 1
      %1094 = vperm.xlu0 %1093, %v1048
      %v1095 = vpop.permute.xlu0 %1094
      %1098 = vset.pattern.permute.xlu0 1
      %1099 = vperm.xlu0 %1098, %v1049
      %v1100 = vpop.permute.xlu0 %1099
      %1103 = vset.pattern.permute.xlu0 1
      %1104 = vperm.xlu0 %1103, %v1050
      %v1105 = vpop.permute.xlu0 %1104
      %1108 = vset.pattern.permute.xlu0 1
      %1109 = vperm.xlu0 %1108, %v1051
      %v1110 = vpop.permute.xlu0 %1109
      %1113 = vset.pattern.permute.xlu0 1
      %1114 = vperm.xlu0 %1113, %v1052
      %v1115 = vpop.permute.xlu0 %1114
      %v1117 = vsub.f32 %v990, %v1080
      %v1118 = vsub.f32 %v993, %v1085
      %v1119 = vsub.f32 %v996, %v1090
      %v1120 = vsub.f32 %v999, %v1095
      %v1121 = vsub.f32 %v1002, %v1100
      %v1122 = vsub.f32 %v1005, %v1105
      %v1123 = vsub.f32 %v1008, %v1110
      %v1124 = vsub.f32 %v1011, %v1115
      %v1125 = vmul.f32 %v1117, 1.442695
      %v1126 = vpow.pop %v1125
      %v1127 = vmul.f32 %v1118, 1.442695
      %v1128 = vpow.pop %v1127
      %v1129 = vmul.f32 %v1119, 1.442695
      %v1130 = vpow.pop %v1129
      %v1131 = vmul.f32 %v1120, 1.442695
      %v1132 = vpow.pop %v1131
      %v1133 = vmul.f32 %v1121, 1.442695
      %v1134 = vpow.pop %v1133
      %v1135 = vmul.f32 %v1122, 1.442695
      %v1136 = vpow.pop %v1135
      %v1137 = vmul.f32 %v1123, 1.442695
      %v1138 = vpow.pop %v1137
      %v1139 = vmul.f32 %v1124, 1.442695
      %v1140 = vpow.pop %v1139
      %v1141 = vld [vmem:[#allocation3] sm:$0xff]
      %v1142 = vld [vmem:[#allocation3 + $0x8] sm:$0xff]
      %v1143 = vld [vmem:[#allocation3 + $0x10] sm:$0xff]
      %v1144 = vld [vmem:[#allocation3 + $0x18] sm:$0xff]
      %v1145 = vld [vmem:[#allocation3 + $0x20] sm:$0xff]
      %v1146 = vld [vmem:[#allocation3 + $0x28] sm:$0xff]
      %v1147 = vld [vmem:[#allocation3 + $0x30] sm:$0xff]
      %v1148 = vld [vmem:[#allocation3 + $0x38] sm:$0xff]
      %1150 = vset.pattern.permute.xlu0 1
      %1151 = vperm.xlu0 %1150, %v1062
      %v1152 = vpop.permute.xlu0 %1151
      %1155 = vset.pattern.permute.xlu0 1
      %1156 = vperm.xlu0 %1155, %v1064
      %v1157 = vpop.permute.xlu0 %1156
      %1160 = vset.pattern.permute.xlu0 1
      %1161 = vperm.xlu0 %1160, %v1066
      %v1162 = vpop.permute.xlu0 %1161
      %1165 = vset.pattern.permute.xlu0 1
      %1166 = vperm.xlu0 %1165, %v1068
      %v1167 = vpop.permute.xlu0 %1166
      %1170 = vset.pattern.permute.xlu0 1
      %1171 = vperm.xlu0 %1170, %v1070
      %v1172 = vpop.permute.xlu0 %1171
      %1175 = vset.pattern.permute.xlu0 1
      %1176 = vperm.xlu0 %1175, %v1072
      %v1177 = vpop.permute.xlu0 %1176
      %1180 = vset.pattern.permute.xlu0 1
      %1181 = vperm.xlu0 %1180, %v1074
      %v1182 = vpop.permute.xlu0 %1181
      %1185 = vset.pattern.permute.xlu0 1
      %1186 = vperm.xlu0 %1185, %v1076
      %v1187 = vpop.permute.xlu0 %1186
      %v1189 = vmul.f32 %v1152, %v1141
      %v1190 = vmul.f32 %v1157, %v1142
      %v1191 = vmul.f32 %v1162, %v1143
      %v1192 = vmul.f32 %v1167, %v1144
      %v1193 = vmul.f32 %v1172, %v1145
      %v1194 = vmul.f32 %v1177, %v1146
      %v1195 = vmul.f32 %v1182, %v1147
      %v1196 = vmul.f32 %v1187, %v1148
      %v1197 = vsel %vm585, %v1126, 0.0
      %1198 = vadd.xlane.f32.xlu0 %v1197
      %v1199 = vpop.xlane.xlu0 %1198
      %v1200 = vsel %vm585, %v1128, 0.0
      %1201 = vadd.xlane.f32.xlu0 %v1200
      %v1202 = vpop.xlane.xlu0 %1201
      %v1203 = vsel %vm585, %v1130, 0.0
      %1204 = vadd.xlane.f32.xlu0 %v1203
      %v1205 = vpop.xlane.xlu0 %1204
      %v1206 = vsel %vm585, %v1132, 0.0
      %1207 = vadd.xlane.f32.xlu0 %v1206
      %v1208 = vpop.xlane.xlu0 %1207
      %v1209 = vsel %vm585, %v1134, 0.0
      %1210 = vadd.xlane.f32.xlu0 %v1209
      %v1211 = vpop.xlane.xlu0 %1210
      %v1212 = vsel %vm585, %v1136, 0.0
      %1213 = vadd.xlane.f32.xlu0 %v1212
      %v1214 = vpop.xlane.xlu0 %1213
      %v1215 = vsel %vm585, %v1138, 0.0
      %1216 = vadd.xlane.f32.xlu0 %v1215
      %v1217 = vpop.xlane.xlu0 %1216
      %v1218 = vsel %vm585, %v1140, 0.0
      %1219 = vadd.xlane.f32.xlu0 %v1218
      %v1220 = vpop.xlane.xlu0 %1219
      %v1221 = vadd.f32 %v1189, %v1199
      %v1222 = vadd.f32 %v1190, %v1202
      %v1223 = vadd.f32 %v1191, %v1205
      %v1224 = vadd.f32 %v1192, %v1208
      %v1225 = vadd.f32 %v1193, %v1211
      %v1226 = vadd.f32 %v1194, %v1214
      %v1227 = vadd.f32 %v1195, %v1217
      %v1228 = vadd.f32 %v1196, %v1220
      %vm1229 = vcmask 31760
      %1230 = vst.msk [vmem:[#allocation3] sm:$0xff] %vm1229, %v1221
      %1231 = vst.msk [vmem:[#allocation3 + $0x8] sm:$0xff] %vm1229, %v1222
      %1232 = vst.msk [vmem:[#allocation3 + $0x10] sm:$0xff] %vm1229, %v1223
      %1233 = vst.msk [vmem:[#allocation3 + $0x18] sm:$0xff] %vm1229, %v1224
      %1234 = vst.msk [vmem:[#allocation3 + $0x20] sm:$0xff] %vm1229, %v1225
      %1235 = vst.msk [vmem:[#allocation3 + $0x28] sm:$0xff] %vm1229, %v1226
      %1236 = vst.msk [vmem:[#allocation3 + $0x30] sm:$0xff] %vm1229, %v1227
      %1237 = vst.msk [vmem:[#allocation3 + $0x38] sm:$0xff] %vm1229, %v1228
      %v1238 = vld [vmem:[#allocation4] sm:$0xff]
      %v1239 = vld [vmem:[#allocation4 + $0x8] sm:$0xff]
      %v1240 = vld [vmem:[#allocation4 + $0x10] sm:$0xff]
      %v1241 = vld [vmem:[#allocation4 + $0x18] sm:$0xff]
      %v1242 = vld [vmem:[#allocation4 + $0x20] sm:$0xff]
      %v1243 = vld [vmem:[#allocation4 + $0x28] sm:$0xff]
      %v1244 = vld [vmem:[#allocation4 + $0x30] sm:$0xff]
      %v1245 = vld [vmem:[#allocation4 + $0x38] sm:$0xff]
      %v1246 = vmul.f32 %v1152, %v1238
      %v1247 = vmul.f32 %v1157, %v1239
      %v1248 = vmul.f32 %v1162, %v1240
      %v1249 = vmul.f32 %v1167, %v1241
      %v1250 = vmul.f32 %v1172, %v1242
      %v1251 = vmul.f32 %v1177, %v1243
      %v1252 = vmul.f32 %v1182, %v1244
      %v1253 = vmul.f32 %v1187, %v1245
      %1262 = vrot.lane.b32.xlu0 %v479, 126
      %v1263 = vpop.permute.xlu0 %1262
      %1264 = vrot.lane.b32.xlu0 %v480, 126
      %v1265 = vpop.permute.xlu0 %1264
      %1266 = vrot.lane.b32.xlu0 %v481, 126
      %v1267 = vpop.permute.xlu0 %1266
      %1268 = vrot.lane.b32.xlu0 %v482, 126
      %v1269 = vpop.permute.xlu0 %1268
      %1270 = vrot.lane.b32.xlu0 %v483, 126
      %v1271 = vpop.permute.xlu0 %1270
      %1272 = vrot.lane.b32.xlu0 %v484, 126
      %v1273 = vpop.permute.xlu0 %1272
      %1274 = vrot.lane.b32.xlu0 %v485, 126
      %v1275 = vpop.permute.xlu0 %1274
      %1276 = vrot.lane.b32.xlu0 %v486, 126
      %v1277 = vpop.permute.xlu0 %1276
      %v1287 = vsel %vm585, %v1126, 0
      %v1290 = vsel %vm585, %v1128, 0
      %v1293 = vsel %vm585, %v1130, 0
      %v1296 = vsel %vm585, %v1132, 0
      %v1299 = vsel %vm585, %v1134, 0
      %v1302 = vsel %vm585, %v1136, 0
      %v1305 = vsel %vm585, %v1138, 0
      %v1308 = vsel %vm585, %v1140, 0
      %1310 = vmatpush.msra.mxu0 0.0
      %1311 = vmatpush.msra.mxu0 0.0
      %1312 = vmatpush.msra.mxu0 0.0
      %1313 = vmatpush.msra.mxu0 0.0
      %1314 = vmatpush.msra.mxu0 0.0
      %1315 = vmatpush.msra.mxu0 0.0
      %1316 = vmatpush.msra.mxu0 0.0
      %1317 = vmatpush.msra.mxu0 0.0
      %1318 = vmatpush.msra.mxu0 %v1277
      %1319 = vmatpush.msra.mxu0 %v1275
      %1320 = vmatpush.msra.mxu0 %v1273
      %1321 = vmatpush.msra.mxu0 %v1271
      %1322 = vmatpush.msra.mxu0 %v1269
      %1323 = vmatpush.msra.mxu0 %v1267
      %1324 = vmatpush.msra.mxu0 %v1265
      %1325 = vmatpush.msra.mxu0 %v1263
      %1326 = vmatmul.f32.gmra.mxu0 %v1287
      %v1327 = vpop.f32.mrf.mxu0
      %v1328 = vadd.f32 0.0, %v1327
      %1329 = vmatmul.f32.gmra.mxu0 %v1290
      %v1330 = vpop.f32.mrf.mxu0
      %v1331 = vadd.f32 0.0, %v1330
      %1332 = vmatmul.f32.gmra.mxu0 %v1293
      %v1333 = vpop.f32.mrf.mxu0
      %v1334 = vadd.f32 0.0, %v1333
      %1335 = vmatmul.f32.gmra.mxu0 %v1296
      %v1336 = vpop.f32.mrf.mxu0
      %v1337 = vadd.f32 0.0, %v1336
      %1338 = vmatmul.f32.gmra.mxu0 %v1299
      %v1339 = vpop.f32.mrf.mxu0
      %v1340 = vadd.f32 0.0, %v1339
      %1341 = vmatmul.f32.gmra.mxu0 %v1302
      %v1342 = vpop.f32.mrf.mxu0
      %v1343 = vadd.f32 0.0, %v1342
      %1344 = vmatmul.f32.gmra.mxu0 %v1305
      %v1345 = vpop.f32.mrf.mxu0
      %v1346 = vadd.f32 0.0, %v1345
      %1347 = vmatmul.f32.gmra.mxu0 %v1308
      %v1348 = vpop.f32.mrf.mxu0
      %v1349 = vadd.f32 0.0, %v1348
      %1350 = vdwg.mxu0
      %1359 = vrot.lane.b32.xlu0 %v1328, 2
      %v1360 = vpop.permute.xlu0 %1359
      %1361 = vrot.lane.b32.xlu0 %v1331, 2
      %v1362 = vpop.permute.xlu0 %1361
      %1363 = vrot.lane.b32.xlu0 %v1334, 2
      %v1364 = vpop.permute.xlu0 %1363
      %1365 = vrot.lane.b32.xlu0 %v1337, 2
      %v1366 = vpop.permute.xlu0 %1365
      %1367 = vrot.lane.b32.xlu0 %v1340, 2
      %v1368 = vpop.permute.xlu0 %1367
      %1369 = vrot.lane.b32.xlu0 %v1343, 2
      %v1370 = vpop.permute.xlu0 %1369
      %1371 = vrot.lane.b32.xlu0 %v1346, 2
      %v1372 = vpop.permute.xlu0 %1371
      %1373 = vrot.lane.b32.xlu0 %v1349, 2
      %v1374 = vpop.permute.xlu0 %1373
      %v1383 = vadd.f32 %v1246, %v1360
      %v1384 = vadd.f32 %v1247, %v1362
      %v1385 = vadd.f32 %v1248, %v1364
      %v1386 = vadd.f32 %v1249, %v1366
      %v1387 = vadd.f32 %v1250, %v1368
      %v1388 = vadd.f32 %v1251, %v1370
      %v1389 = vadd.f32 %v1252, %v1372
      %v1390 = vadd.f32 %v1253, %v1374
      %1391 = vst.msk [vmem:[#allocation4] sm:$0xff] %vm1229, %v1383
      %1392 = vst.msk [vmem:[#allocation4 + $0x8] sm:$0xff] %vm1229, %v1384
      %1393 = vst.msk [vmem:[#allocation4 + $0x10] sm:$0xff] %vm1229, %v1385
      %1394 = vst.msk [vmem:[#allocation4 + $0x18] sm:$0xff] %vm1229, %v1386
      %1395 = vst.msk [vmem:[#allocation4 + $0x20] sm:$0xff] %vm1229, %v1387
      %1396 = vst.msk [vmem:[#allocation4 + $0x28] sm:$0xff] %vm1229, %v1388
      %1397 = vst.msk [vmem:[#allocation4 + $0x30] sm:$0xff] %vm1229, %v1389
      %1398 = vst.msk [vmem:[#allocation4 + $0x38] sm:$0xff] %vm1229, %v1390
      %vm1399 = vcmask 15368
      %1400 = vst.msk [vmem:[#allocation2] sm:$0xff] %vm1399, %v1045
      %1401 = vst.msk [vmem:[#allocation2 + $0x8] sm:$0xff] %vm1399, %v1046
      %1402 = vst.msk [vmem:[#allocation2 + $0x10] sm:$0xff] %vm1399, %v1047
      %1403 = vst.msk [vmem:[#allocation2 + $0x18] sm:$0xff] %vm1399, %v1048
      %1404 = vst.msk [vmem:[#allocation2 + $0x20] sm:$0xff] %vm1399, %v1049
      %1405 = vst.msk [vmem:[#allocation2 + $0x28] sm:$0xff] %vm1399, %v1050
      %1406 = vst.msk [vmem:[#allocation2 + $0x30] sm:$0xff] %vm1399, %v1051
      %1407 = vst.msk [vmem:[#allocation2 + $0x38] sm:$0xff] %vm1399, %v1052
      // Predicated region
      $region53: #{nonlocal_block_forward.6} parent=47 // pred_check
        %p1408 = pneg %p433
      $region54: #{nonlocal_block_forward.6} parent=47 // pred_check_branch
        %1410 = sbr.rel (%p1408) target = $region56
      $region55: #{nonlocal_block_forward.6} parent=47 // pred_region
        %v1411 = vld [vmem:[#allocation4] sm:$0xff]
        %v1412 = vld [vmem:[#allocation4 + $0x8] sm:$0xff]
        %v1413 = vld [vmem:[#allocation4 + $0x10] sm:$0xff]
        %v1414 = vld [vmem:[#allocation4 + $0x18] sm:$0xff]
        %v1415 = vld [vmem:[#allocation4 + $0x20] sm:$0xff]
        %v1416 = vld [vmem:[#allocation4 + $0x28] sm:$0xff]
        %v1417 = vld [vmem:[#allocation4 + $0x30] sm:$0xff]
        %v1418 = vld [vmem:[#allocation4 + $0x38] sm:$0xff]
        %v1419 = vld [vmem:[#allocation3] sm:$0xff]
        %v1420 = vld [vmem:[#allocation3 + $0x8] sm:$0xff]
        %v1421 = vld [vmem:[#allocation3 + $0x10] sm:$0xff]
        %v1422 = vld [vmem:[#allocation3 + $0x18] sm:$0xff]
        %v1423 = vld [vmem:[#allocation3 + $0x20] sm:$0xff]
        %v1424 = vld [vmem:[#allocation3 + $0x28] sm:$0xff]
        %v1425 = vld [vmem:[#allocation3 + $0x30] sm:$0xff]
        %v1426 = vld [vmem:[#allocation3 + $0x38] sm:$0xff]
        %v1427 = vrcp.pop %v1419
        %v1428 = vrcp.pop %v1420
        %v1429 = vrcp.pop %v1421
        %v1430 = vrcp.pop %v1422
        %v1431 = vrcp.pop %v1423
        %v1432 = vrcp.pop %v1424
        %v1433 = vrcp.pop %v1425
        %v1434 = vrcp.pop %v1426
        %v1435 = vmul.f32 %v1411, %v1427
        %v1436 = vmul.f32 %v1412, %v1428
        %v1437 = vmul.f32 %v1413, %v1429
        %v1438 = vmul.f32 %v1414, %v1430
        %v1439 = vmul.f32 %v1415, %v1431
        %v1440 = vmul.f32 %v1416, %v1432
        %v1441 = vmul.f32 %v1417, %v1433
        %v1442 = vmul.f32 %v1418, %v1434
        %v1443 = vld [vmem:[%s4] sm:$0xf]
        %vm1444 = vcmask 31744
        %v1446 = vsel %vm1444, %v1435, 0
        %v1449 = vsel %vm1444, %v1436, 0
        %v1452 = vsel %vm1444, %v1437, 0
        %v1455 = vsel %vm1444, %v1438, 0
        %v1458 = vsel %vm1444, %v1439, 0
        %v1461 = vsel %vm1444, %v1440, 0
        %v1464 = vsel %vm1444, %v1441, 0
        %v1467 = vsel %vm1444, %v1442, 0
        %vm1469 = vcmask 1043456
        %v1471 = vsel %vm1469, %v1443, 0
        %1473 = vmatpush.msra.mxu0 0.0
        %1474 = vmatpush.msra.mxu0 0.0
        %1475 = vmatpush.msra.mxu0 0.0
        %1476 = vmatpush.msra.mxu0 0.0
        %1477 = vmatpush.msra.mxu0 0.0
        %1478 = vmatpush.msra.mxu0 0.0
        %1479 = vmatpush.msra.mxu0 0.0
        %1480 = vmatpush.msra.mxu0 0.0
        %1481 = vmatpush.msra.mxu0 0.0
        %1482 = vmatpush.msra.mxu0 0.0
        %1483 = vmatpush.msra.mxu0 0.0
        %1484 = vmatpush.msra.mxu0 0.0
        %1485 = vmatpush.msra.mxu0 0.0
        %1486 = vmatpush.msra.mxu0 0.0
        %1487 = vmatpush.msra.mxu0 0.0
        %1488 = vmatpush.msra.mxu0 %v1471
        %1489 = vmatmul.f32.gmra.mxu0 %v1446
        %v1490 = vpop.f32.mrf.mxu0
        %v1491 = vadd.f32 0.0, %v1490
        %1492 = vmatmul.f32.gmra.mxu0 %v1449
        %v1493 = vpop.f32.mrf.mxu0
        %v1494 = vadd.f32 0.0, %v1493
        %1495 = vmatmul.f32.gmra.mxu0 %v1452
        %v1496 = vpop.f32.mrf.mxu0
        %v1497 = vadd.f32 0.0, %v1496
        %1498 = vmatmul.f32.gmra.mxu0 %v1455
        %v1499 = vpop.f32.mrf.mxu0
        %v1500 = vadd.f32 0.0, %v1499
        %1501 = vmatmul.f32.gmra.mxu0 %v1458
        %v1502 = vpop.f32.mrf.mxu0
        %v1503 = vadd.f32 0.0, %v1502
        %1504 = vmatmul.f32.gmra.mxu0 %v1461
        %v1505 = vpop.f32.mrf.mxu0
        %v1506 = vadd.f32 0.0, %v1505
        %1507 = vmatmul.f32.gmra.mxu0 %v1464
        %v1508 = vpop.f32.mrf.mxu0
        %v1509 = vadd.f32 0.0, %v1508
        %1510 = vmatmul.f32.gmra.mxu0 %v1467
        %v1511 = vpop.f32.mrf.mxu0
        %v1512 = vadd.f32 0.0, %v1511
        %1513 = vdwg.mxu0
        %v1514 = vld [vmem:[%s5] sm:$0x1]
        %v1516 = vperm.slane %v1514, 0
        %v1518 = vmul.f32 %v1491, %v1516
        %v1519 = vmul.f32 %v1494, %v1516
        %v1520 = vmul.f32 %v1497, %v1516
        %v1521 = vmul.f32 %v1500, %v1516
        %v1522 = vmul.f32 %v1503, %v1516
        %v1523 = vmul.f32 %v1506, %v1516
        %v1524 = vmul.f32 %v1509, %v1516
        %v1525 = vmul.f32 %v1512, %v1516
        %v1526 = vld [vmem:[%s6] sm:$0x1]
        %v1528 = vperm.slane %v1526, 0
        %v1530 = vadd.f32 %v1518, %v1528
        %v1531 = vadd.f32 %v1519, %v1528
        %v1532 = vadd.f32 %v1520, %v1528
        %v1533 = vadd.f32 %v1521, %v1528
        %v1534 = vadd.f32 %v1522, %v1528
        %v1535 = vadd.f32 %v1523, %v1528
        %v1536 = vadd.f32 %v1524, %v1528
        %v1537 = vadd.f32 %v1525, %v1528
        %v1538 = vld [vmem:[%s421] sm:$0xff]
        %v1539 = vld [vmem:[%s421 + $0x8] sm:$0xff]
        %v1540 = vld [vmem:[%s421 + $0x10] sm:$0xff]
        %v1541 = vld [vmem:[%s421 + $0x18] sm:$0xff]
        %v1542 = vld [vmem:[%s421 + $0x20] sm:$0xff]
        %v1543 = vld [vmem:[%s421 + $0x28] sm:$0xff]
        %v1544 = vld [vmem:[%s421 + $0x30] sm:$0xff]
        %v1545 = vld [vmem:[%s421 + $0x38] sm:$0xff]
        %v1546 = vadd.f32 %v1530, %v1538
        %v1547 = vadd.f32 %v1531, %v1539
        %v1548 = vadd.f32 %v1532, %v1540
        %v1549 = vadd.f32 %v1533, %v1541
        %v1550 = vadd.f32 %v1534, %v1542
        %v1551 = vadd.f32 %v1535, %v1543
        %v1552 = vadd.f32 %v1536, %v1544
        %v1553 = vadd.f32 %v1537, %v1545
        %v1554 = vmax.f32 %v1546, 0.0
        %v1555 = vmax.f32 %v1547, 0.0
        %v1556 = vmax.f32 %v1548, 0.0
        %v1557 = vmax.f32 %v1549, 0.0
        %v1558 = vmax.f32 %v1550, 0.0
        %v1559 = vmax.f32 %v1551, 0.0
        %v1560 = vmax.f32 %v1552, 0.0
        %v1561 = vmax.f32 %v1553, 0.0
        %vm1562 = vcmask 64512
        %1563 = vst.msk [vmem:[%s431] sm:$0xff] %vm1562, %v1554
        %1564 = vst.msk [vmem:[%s431 + $0x8] sm:$0xff] %vm1562, %v1555
        %1565 = vst.msk [vmem:[%s431 + $0x10] sm:$0xff] %vm1562, %v1556
        %1566 = vst.msk [vmem:[%s431 + $0x18] sm:$0xff] %vm1562, %v1557
        %1567 = vst.msk [vmem:[%s431 + $0x20] sm:$0xff] %vm1562, %v1558
        %1568 = vst.msk [vmem:[%s431 + $0x28] sm:$0xff] %vm1562, %v1559
        %1569 = vst.msk [vmem:[%s431 + $0x30] sm:$0xff] %vm1562, %v1560
        %1570 = vst.msk [vmem:[%s431 + $0x38] sm:$0xff] %vm1562, %v1561
      $region56: #{nonlocal_block_forward.6} parent=47 // pred_fallthru
        _
      %s1571 = smul.u32 8, %s24
      %p1572 = scmp.lt.s32.totalorder %s23, 1
      %s1573 = scalar_select %p1572, %s23, 1
      %p1574 = scmp.lt.s32.totalorder %s1571, 7
      %s1575 = scalar_select %p1574, %s1571, 7
      %s1576 = smul.addr %s1573, 8
      %s1577 = sadd.s32 %s1575, %s1576
      %s1578 = smul.addr %s1577, 8
      %s1579 = scalar_lea.vmem %s7, %s1578
      // Predicated region
      $region57: #{nonlocal_block_forward.6} parent=47 // pred_check
        %p1580 = pneg %p232
      $region58: #{nonlocal_block_forward.6} parent=47 // pred_check_branch
        %1582 = sbr.rel (%p1580) target = $region60
      $region59: #{nonlocal_block_forward.6} parent=47 // pred_region
        %s1583 = smul.u32 8, %s24
      $region60: #{nonlocal_block_forward.6} parent=47 // pred_fallthru
        _
    $region48: #{nonlocal_block_forward.6} parent=5 // pred_fallthru
      _
    %p1584 = scmp.le.s32.totalorder 2, %s13
    // Predicated region
    $region61: #{nonlocal_block_forward.6} parent=5 // pred_check
      %p1585 = pneg %p1584
    $region62: #{nonlocal_block_forward.6} parent=5 // pred_check_branch
      %1587 = sbr.rel (%p1585) target = $region64
    $region63: #{nonlocal_block_forward.6} parent=5 // pred_region
      %s1588 = ssub.s32 %s13, 2
      // Predicated region
      $region65: #{nonlocal_block_forward.6} parent=63 // pred_check
        %p1589 = pneg %p238
      $region66: #{nonlocal_block_forward.6} parent=63 // pred_check_branch
        %1591 = sbr.rel (%p1589) target = $region68
      $region67: #{nonlocal_block_forward.6} parent=63 // pred_region
        %s1592 = smul.u32 8, %s27
        %p1593 = scmp.lt.s32.totalorder %s26, 1
        %s1594 = scalar_select %p1593, %s26, 1
        %p1595 = scmp.lt.s32.totalorder %s1592, 7
        %s1596 = scalar_select %p1595, %s1592, 7
        %s1597 = smul.addr %s1594, 8
        %s1598 = sadd.s32 %s1596, %s1597
        %s1599 = smul.addr %s1598, 8
        %s1600 = scalar_lea.vmem %s7, %s1599
      $region68: #{nonlocal_block_forward.6} parent=63 // pred_fallthru
        _
    $region64: #{nonlocal_block_forward.6} parent=5 // pred_fallthru
      _
  $region6: #{nonlocal_block_forward.6} parent=0 // loop_footer
    %s17 = sadd.s32 1, %s13
  $region7: #{nonlocal_block_forward.6} parent=0 // loop_footer_branch
    %12 = sbr.rel target = $region3
  $region8: #{nonlocal_block_forward.6} parent=0 // loop_exit
    _

// kernel: nonlocal_block_forward.9
$region0: #{nonlocal_block_forward.9}
  #allocation0 [shape = 'u32[]', space=smem, size = 0x4, offset = 0x4, fixed_abs, tag = 'smem constant byte address 0x4 - core index']
  #allocation1 [shape = 'u32[72,128]{1,0:T(1,128)}', space=vmem, size = 0x9000, scoped, tag = 'internal scratch']
  %s0 = inlined_call_operand.vmem [shape: f32[128,2], index: 0, kind: input, shape index: {}]
  %s1 = inlined_call_operand.vmem [shape: f32[2,8], index: 1, kind: input, shape index: {}]
  %s2 = inlined_call_operand.vmem [shape: f32[1,8], index: 2, kind: input, shape index: {}]
  %s3 = inlined_call_operand.vmem [shape: f32[1,8], index: 3, kind: input, shape index: {}]
  %s4 = inlined_call_operand.vmem [shape: f32[128,8], index: 4, kind: input, shape index: {}]
  %s5 = inlined_call_operand.vmem [shape: f32[128,8], index: 5, kind: output, shape index: {}]
  %s6 = sld [smem:[#allocation0]]
  $region30: #{nonlocal_block_forward.9} parent=0
    _
  %s8 = ssub.s32 1, %s6
  %s9 = scalar_select 0, %s8, %s6
  // Predicated region
  $region2: #{nonlocal_block_forward.9} parent=0 // pred_check
    _
  $region3: #{nonlocal_block_forward.9} parent=0 // pred_check_branch
    %11 = sbr.rel (0) target = $region5
  $region4: #{nonlocal_block_forward.9} parent=0 // pred_region
    _
  $region5: #{nonlocal_block_forward.9} parent=0 // pred_fallthru
    _
  // Predicated region
  $region6: #{nonlocal_block_forward.9} parent=0 // pred_check
    _
  $region7: #{nonlocal_block_forward.9} parent=0 // pred_check_branch
    %13 = sbr.rel (0) target = $region9
  $region8: #{nonlocal_block_forward.9} parent=0 // pred_region
    _
  $region9: #{nonlocal_block_forward.9} parent=0 // pred_fallthru
    _
  // Predicated region
  $region10: #{nonlocal_block_forward.9} parent=0 // pred_check
    _
  $region11: #{nonlocal_block_forward.9} parent=0 // pred_check_branch
    %15 = sbr.rel (0) target = $region13
  $region12: #{nonlocal_block_forward.9} parent=0 // pred_region
    _
  $region13: #{nonlocal_block_forward.9} parent=0 // pred_fallthru
    _
  // Predicated region
  $region14: #{nonlocal_block_forward.9} parent=0 // pred_check
    _
  $region15: #{nonlocal_block_forward.9} parent=0 // pred_check_branch
    %17 = sbr.rel (0) target = $region17
  $region16: #{nonlocal_block_forward.9} parent=0 // pred_region
    _
  $region17: #{nonlocal_block_forward.9} parent=0 // pred_fallthru
    _
  // Predicated region
  $region18: #{nonlocal_block_forward.9} parent=0 // pred_check
    _
  $region19: #{nonlocal_block_forward.9} parent=0 // pred_check_branch
    %19 = sbr.rel (0) target = $region21
  $region20: #{nonlocal_block_forward.9} parent=0 // pred_region
    _
  $region21: #{nonlocal_block_forward.9} parent=0 // pred_fallthru
    _
  %v20 = vld [vmem:[%s0] sm:$0xff]
  %v21 = vld [vmem:[%s0 + $0x8] sm:$0xff]
  %v22 = vld [vmem:[%s0 + $0x10] sm:$0xff]
  %v23 = vld [vmem:[%s0 + $0x18] sm:$0xff]
  %v24 = vld [vmem:[%s0 + $0x20] sm:$0xff]
  %v25 = vld [vmem:[%s0 + $0x28] sm:$0xff]
  %v26 = vld [vmem:[%s0 + $0x30] sm:$0xff]
  %v27 = vld [vmem:[%s0 + $0x38] sm:$0xff]
  %v28 = vld [vmem:[%s0 + $0x40] sm:$0xff]
  %v29 = vld [vmem:[%s0 + $0x48] sm:$0xff]
  %v30 = vld [vmem:[%s0 + $0x50] sm:$0xff]
  %v31 = vld [vmem:[%s0 + $0x58] sm:$0xff]
  %v32 = vld [vmem:[%s0 + $0x60] sm:$0xff]
  %v33 = vld [vmem:[%s0 + $0x68] sm:$0xff]
  %v34 = vld [vmem:[%s0 + $0x70] sm:$0xff]
  %v35 = vld [vmem:[%s0 + $0x78] sm:$0xff]
  %v36 = vld [vmem:[%s1] sm:$0x3]
  %vm37 = vcmask 15360
  %v39 = vsel %vm37, %v20, 0
  %v42 = vsel %vm37, %v21, 0
  %v45 = vsel %vm37, %v22, 0
  %v48 = vsel %vm37, %v23, 0
  %v51 = vsel %vm37, %v24, 0
  %v54 = vsel %vm37, %v25, 0
  %v57 = vsel %vm37, %v26, 0
  %v60 = vsel %vm37, %v27, 0
  %v63 = vsel %vm37, %v28, 0
  %v66 = vsel %vm37, %v29, 0
  %v69 = vsel %vm37, %v30, 0
  %v72 = vsel %vm37, %v31, 0
  %v75 = vsel %vm37, %v32, 0
  %v78 = vsel %vm37, %v33, 0
  %v81 = vsel %vm37, %v34, 0
  %v84 = vsel %vm37, %v35, 0
  %vm86 = vcmask 1041408
  %v88 = vsel %vm86, %v36, 0
  %90 = vmatpush.msra.mxu0 0.0
  %91 = vmatpush.msra.mxu0 0.0
  %92 = vmatpush.msra.mxu0 0.0
  %93 = vmatpush.msra.mxu0 0.0
  %94 = vmatpush.msra.mxu0 0.0
  %95 = vmatpush.msra.mxu0 0.0
  %96 = vmatpush.msra.mxu0 0.0
  %97 = vmatpush.msra.mxu0 0.0
  %98 = vmatpush.msra.mxu0 0.0
  %99 = vmatpush.msra.mxu0 0.0
  %100 = vmatpush.msra.mxu0 0.0
  %101 = vmatpush.msra.mxu0 0.0
  %102 = vmatpush.msra.mxu0 0.0
  %103 = vmatpush.msra.mxu0 0.0
  %104 = vmatpush.msra.mxu0 0.0
  %105 = vmatpush.msra.mxu0 %v88
  %106 = vmatmul.f32.gmra.mxu0 %v39
  %v107 = vpop.f32.mrf.mxu0
  %v108 = vadd.f32 0.0, %v107
  %109 = vmatmul.f32.gmra.mxu0 %v42
  %v110 = vpop.f32.mrf.mxu0
  %v111 = vadd.f32 0.0, %v110
  %112 = vmatmul.f32.gmra.mxu0 %v45
  %v113 = vpop.f32.mrf.mxu0
  %v114 = vadd.f32 0.0, %v113
  %115 = vmatmul.f32.gmra.mxu0 %v48
  %v116 = vpop.f32.mrf.mxu0
  %v117 = vadd.f32 0.0, %v116
  %118 = vmatmul.f32.gmra.mxu0 %v51
  %v119 = vpop.f32.mrf.mxu0
  %v120 = vadd.f32 0.0, %v119
  %121 = vmatmul.f32.gmra.mxu0 %v54
  %v122 = vpop.f32.mrf.mxu0
  %v123 = vadd.f32 0.0, %v122
  %124 = vmatmul.f32.gmra.mxu0 %v57
  %v125 = vpop.f32.mrf.mxu0
  %v126 = vadd.f32 0.0, %v125
  %127 = vmatmul.f32.gmra.mxu0 %v60
  %v128 = vpop.f32.mrf.mxu0
  %v129 = vadd.f32 0.0, %v128
  %130 = vmatmul.f32.gmra.mxu0 %v63
  %v131 = vpop.f32.mrf.mxu0
  %v132 = vadd.f32 0.0, %v131
  %133 = vmatmul.f32.gmra.mxu0 %v66
  %v134 = vpop.f32.mrf.mxu0
  %v135 = vadd.f32 0.0, %v134
  %136 = vmatmul.f32.gmra.mxu0 %v69
  %v137 = vpop.f32.mrf.mxu0
  %v138 = vadd.f32 0.0, %v137
  %139 = vmatmul.f32.gmra.mxu0 %v72
  %v140 = vpop.f32.mrf.mxu0
  %v141 = vadd.f32 0.0, %v140
  %142 = vmatmul.f32.gmra.mxu0 %v75
  %v143 = vpop.f32.mrf.mxu0
  %v144 = vadd.f32 0.0, %v143
  %145 = vmatmul.f32.gmra.mxu0 %v78
  %v146 = vpop.f32.mrf.mxu0
  %v147 = vadd.f32 0.0, %v146
  %148 = vmatmul.f32.gmra.mxu0 %v81
  %v149 = vpop.f32.mrf.mxu0
  %v150 = vadd.f32 0.0, %v149
  %151 = vmatmul.f32.gmra.mxu0 %v84
  %v152 = vpop.f32.mrf.mxu0
  %v153 = vadd.f32 0.0, %v152
  %154 = vdwg.mxu0
  %v155 = vld [vmem:[%s2] sm:$0x1]
  %v157 = vperm.slane %v155, 0
  %v159 = vmul.f32 %v108, %v157
  %v160 = vmul.f32 %v111, %v157
  %v161 = vmul.f32 %v114, %v157
  %v162 = vmul.f32 %v117, %v157
  %v163 = vmul.f32 %v120, %v157
  %v164 = vmul.f32 %v123, %v157
  %v165 = vmul.f32 %v126, %v157
  %v166 = vmul.f32 %v129, %v157
  %v167 = vmul.f32 %v132, %v157
  %v168 = vmul.f32 %v135, %v157
  %v169 = vmul.f32 %v138, %v157
  %v170 = vmul.f32 %v141, %v157
  %v171 = vmul.f32 %v144, %v157
  %v172 = vmul.f32 %v147, %v157
  %v173 = vmul.f32 %v150, %v157
  %v174 = vmul.f32 %v153, %v157
  %v175 = vld [vmem:[%s3] sm:$0x1]
  %v177 = vperm.slane %v175, 0
  %v179 = vadd.f32 %v159, %v177
  %v180 = vadd.f32 %v160, %v177
  %v181 = vadd.f32 %v161, %v177
  %v182 = vadd.f32 %v162, %v177
  %v183 = vadd.f32 %v163, %v177
  %v184 = vadd.f32 %v164, %v177
  %v185 = vadd.f32 %v165, %v177
  %v186 = vadd.f32 %v166, %v177
  %v187 = vadd.f32 %v167, %v177
  %v188 = vadd.f32 %v168, %v177
  %v189 = vadd.f32 %v169, %v177
  %v190 = vadd.f32 %v170, %v177
  %v191 = vadd.f32 %v171, %v177
  %v192 = vadd.f32 %v172, %v177
  %v193 = vadd.f32 %v173, %v177
  %v194 = vadd.f32 %v174, %v177
  %v195 = vld [vmem:[%s4] sm:$0xff]
  %v196 = vld [vmem:[%s4 + $0x8] sm:$0xff]
  %v197 = vld [vmem:[%s4 + $0x10] sm:$0xff]
  %v198 = vld [vmem:[%s4 + $0x18] sm:$0xff]
  %v199 = vld [vmem:[%s4 + $0x20] sm:$0xff]
  %v200 = vld [vmem:[%s4 + $0x28] sm:$0xff]
  %v201 = vld [vmem:[%s4 + $0x30] sm:$0xff]
  %v202 = vld [vmem:[%s4 + $0x38] sm:$0xff]
  %v203 = vld [vmem:[%s4 + $0x40] sm:$0xff]
  %v204 = vld [vmem:[%s4 + $0x48] sm:$0xff]
  %v205 = vld [vmem:[%s4 + $0x50] sm:$0xff]
  %v206 = vld [vmem:[%s4 + $0x58] sm:$0xff]
  %v207 = vld [vmem:[%s4 + $0x60] sm:$0xff]
  %v208 = vld [vmem:[%s4 + $0x68] sm:$0xff]
  %v209 = vld [vmem:[%s4 + $0x70] sm:$0xff]
  %v210 = vld [vmem:[%s4 + $0x78] sm:$0xff]
  %v211 = vadd.f32 %v179, %v195
  %v212 = vadd.f32 %v180, %v196
  %v213 = vadd.f32 %v181, %v197
  %v214 = vadd.f32 %v182, %v198
  %v215 = vadd.f32 %v183, %v199
  %v216 = vadd.f32 %v184, %v200
  %v217 = vadd.f32 %v185, %v201
  %v218 = vadd.f32 %v186, %v202
  %v219 = vadd.f32 %v187, %v203
  %v220 = vadd.f32 %v188, %v204
  %v221 = vadd.f32 %v189, %v205
  %v222 = vadd.f32 %v190, %v206
  %v223 = vadd.f32 %v191, %v207
  %v224 = vadd.f32 %v192, %v208
  %v225 = vadd.f32 %v193, %v209
  %v226 = vadd.f32 %v194, %v210
  %v227 = vmax.f32 %v211, 0.0
  %v228 = vmax.f32 %v212, 0.0
  %v229 = vmax.f32 %v213, 0.0
  %v230 = vmax.f32 %v214, 0.0
  %v231 = vmax.f32 %v215, 0.0
  %v232 = vmax.f32 %v216, 0.0
  %v233 = vmax.f32 %v217, 0.0
  %v234 = vmax.f32 %v218, 0.0
  %v235 = vmax.f32 %v219, 0.0
  %v236 = vmax.f32 %v220, 0.0
  %v237 = vmax.f32 %v221, 0.0
  %v238 = vmax.f32 %v222, 0.0
  %v239 = vmax.f32 %v223, 0.0
  %v240 = vmax.f32 %v224, 0.0
  %v241 = vmax.f32 %v225, 0.0
  %v242 = vmax.f32 %v226, 0.0
  %vm243 = vcmask 64512
  %244 = vst.msk [vmem:[%s5] sm:$0xff] %vm243, %v227
  %245 = vst.msk [vmem:[%s5 + $0x8] sm:$0xff] %vm243, %v228
  %246 = vst.msk [vmem:[%s5 + $0x10] sm:$0xff] %vm243, %v229
  %247 = vst.msk [vmem:[%s5 + $0x18] sm:$0xff] %vm243, %v230
  %248 = vst.msk [vmem:[%s5 + $0x20] sm:$0xff] %vm243, %v231
  %249 = vst.msk [vmem:[%s5 + $0x28] sm:$0xff] %vm243, %v232
  %250 = vst.msk [vmem:[%s5 + $0x30] sm:$0xff] %vm243, %v233
  %251 = vst.msk [vmem:[%s5 + $0x38] sm:$0xff] %vm243, %v234
  %252 = vst.msk [vmem:[%s5 + $0x40] sm:$0xff] %vm243, %v235
  %253 = vst.msk [vmem:[%s5 + $0x48] sm:$0xff] %vm243, %v236
  %254 = vst.msk [vmem:[%s5 + $0x50] sm:$0xff] %vm243, %v237
  %255 = vst.msk [vmem:[%s5 + $0x58] sm:$0xff] %vm243, %v238
  %256 = vst.msk [vmem:[%s5 + $0x60] sm:$0xff] %vm243, %v239
  %257 = vst.msk [vmem:[%s5 + $0x68] sm:$0xff] %vm243, %v240
  %258 = vst.msk [vmem:[%s5 + $0x70] sm:$0xff] %vm243, %v241
  %259 = vst.msk [vmem:[%s5 + $0x78] sm:$0xff] %vm243, %v242
  // Predicated region
  $region22: #{nonlocal_block_forward.9} parent=0 // pred_check
    _
  $region23: #{nonlocal_block_forward.9} parent=0 // pred_check_branch
    %261 = sbr.rel (0) target = $region25
  $region24: #{nonlocal_block_forward.9} parent=0 // pred_region
    _
  $region25: #{nonlocal_block_forward.9} parent=0 // pred_fallthru
    _
  // Predicated region
  $region26: #{nonlocal_block_forward.9} parent=0 // pred_check
    _
  $region27: #{nonlocal_block_forward.9} parent=0 // pred_check_branch
    %263 = sbr.rel (0) target = $region29
  $region28: #{nonlocal_block_forward.9} parent=0 // pred_region
    _
  $region29: #{nonlocal_block_forward.9} parent=0 // pred_fallthru
    _

// kernel: nonlocal_block_forward.8
$region0: #{nonlocal_block_forward.8}
  #allocation0 [shape = 'u32[]', space=smem, size = 0x4, offset = 0x4, fixed_abs, tag = 'smem constant byte address 0x4 - core index']
  #allocation1 [shape = 'u32[72,128]{1,0:T(1,128)}', space=vmem, size = 0x9000, scoped, tag = 'internal scratch']
  %s0 = inlined_call_operand.vmem [shape: f32[2,110,2], index: 0, kind: input, shape index: {}]
  %s1 = inlined_call_operand.vmem [shape: f32[9,2,2], index: 1, kind: input, shape index: {}]
  %s2 = inlined_call_operand.vmem [shape: f32[1,2], index: 2, kind: input, shape index: {}]
  %s3 = inlined_call_operand.vmem [shape: f32[1,2], index: 3, kind: input, shape index: {}]
  %s4 = inlined_call_operand.vmem [shape: f32[2,80,2], index: 4, kind: output, shape index: {}]
  %s5 = sld [smem:[#allocation0]]
  $region49: #{nonlocal_block_forward.8} parent=0
    _
  %s7 = ssub.s32 1, %s5
  %s8 = scalar_select 0, %s7, %s5
  loop: start=0, step=1, limit=4
  $region2: #{nonlocal_block_forward.8} parent=0 // loop_pre_header
    _
  $region3: #{nonlocal_block_forward.8} parent=0 // loop_header
    %s10 = sphi 0, %s14
    %p11 = scmp.ge.s32.totalorder %s10, 4
    %s20 = sphi 0, %s22
    %s23 = sphi 0, %s20
    %s24 = sphi 0, %s23
    %s40 = sphi 0, %s24
    %s44 = sphi 0, %s44
    %s46 = sphi 0, %s44
    %s47 = sphi 0, %s46
    %s61 = sphi 0, %s47
    %s65 = sphi 0, %s65
    %s67 = sphi 0, %s65
    %s68 = sphi 0, %s67
    %s82 = sphi 0, %s68
    %s86 = sphi 0, %s86
    %s88 = sphi 0, %s86
    %s89 = sphi 0, %s88
    %s103 = sphi 0, %s89
    %s109 = sphi 0, %s111
    %s112 = sphi 0, %s109
    %s113 = sphi 0, %s112
    %s129 = sphi 0, %s113
  $region4: #{nonlocal_block_forward.8} parent=0 // loop_header_branch
    %13 = sbr.rel (%p11) target = $region8
  $region5: #{nonlocal_block_forward.8} parent=0 // loop_body
    %s15 = ssub.s32 %s10, 1
    %s16 = ssub.s32 %s10, 2
    %s17 = sadd.s32 %s10, 1
    %s18 = ssub.s32 %s10, %s17
    %p19 = scmp.eq.s32.totalorder %s18, 0
    %s21 = sadd.s32 %s20, 1
    %s22 = scalar_select %p19, %s20, %s21
    %p25 = pneg %p19
    %p26 = scmp.eq.s32.totalorder %s10, 1
    %p27 = por %p25, %p26
    %p28 = scmp.ne.s32.totalorder %s20, %s23
    %p29 = scmp.eq.s32.totalorder %s10, 0
    %p30 = por %p28, %p29
    %p31 = scmp.ne.s32.totalorder %s20, %s23
    %p32 = scmp.eq.s32.totalorder %s15, 1
    %p33 = por %p31, %p32
    %p34 = scmp.ne.s32.totalorder %s23, %s24
    %p35 = scmp.eq.s32.totalorder %s15, 0
    %p36 = por %p34, %p35
    %p37 = scmp.ne.s32.totalorder %s23, %s24
    %p38 = scmp.eq.s32.totalorder %s16, 1
    %p39 = por %p37, %p38
    %p41 = scmp.ne.s32.totalorder %s24, %s40
    %p42 = scmp.eq.s32.totalorder %s16, 0
    %p43 = por %p41, %p42
    %s45 = sadd.s32 %s44, 1
    %p48 = scmp.eq.s32.totalorder %s10, 1
    %p49 = scmp.ne.s32.totalorder %s44, %s46
    %p50 = scmp.eq.s32.totalorder %s10, 0
    %p51 = por %p49, %p50
    %p52 = scmp.ne.s32.totalorder %s44, %s46
    %p53 = scmp.eq.s32.totalorder %s15, 1
    %p54 = por %p52, %p53
    %p55 = scmp.ne.s32.totalorder %s46, %s47
    %p56 = scmp.eq.s32.totalorder %s15, 0
    %p57 = por %p55, %p56
    %p58 = scmp.ne.s32.totalorder %s46, %s47
    %p59 = scmp.eq.s32.totalorder %s16, 1
    %p60 = por %p58, %p59
    %p62 = scmp.ne.s32.totalorder %s47, %s61
    %p63 = scmp.eq.s32.totalorder %s16, 0
    %p64 = por %p62, %p63
    %s66 = sadd.s32 %s65, 1
    %p69 = scmp.eq.s32.totalorder %s10, 1
    %p70 = scmp.ne.s32.totalorder %s65, %s67
    %p71 = scmp.eq.s32.totalorder %s10, 0
    %p72 = por %p70, %p71
    %p73 = scmp.ne.s32.totalorder %s65, %s67
    %p74 = scmp.eq.s32.totalorder %s15, 1
    %p75 = por %p73, %p74
    %p76 = scmp.ne.s32.totalorder %s67, %s68
    %p77 = scmp.eq.s32.totalorder %s15, 0
    %p78 = por %p76, %p77
    %p79 = scmp.ne.s32.totalorder %s67, %s68
    %p80 = scmp.eq.s32.totalorder %s16, 1
    %p81 = por %p79, %p80
    %p83 = scmp.ne.s32.totalorder %s68, %s82
    %p84 = scmp.eq.s32.totalorder %s16, 0
    %p85 = por %p83, %p84
    %s87 = sadd.s32 %s86, 1
    %p90 = scmp.eq.s32.totalorder %s10, 1
    %p91 = scmp.ne.s32.totalorder %s86, %s88
    %p92 = scmp.eq.s32.totalorder %s10, 0
    %p93 = por %p91, %p92
    %p94 = scmp.ne.s32.totalorder %s86, %s88
    %p95 = scmp.eq.s32.totalorder %s15, 1
    %p96 = por %p94, %p95
    %p97 = scmp.ne.s32.totalorder %s88, %s89
    %p98 = scmp.eq.s32.totalorder %s15, 0
    %p99 = por %p97, %p98
    %p100 = scmp.ne.s32.totalorder %s88, %s89
    %p101 = scmp.eq.s32.totalorder %s16, 1
    %p102 = por %p100, %p101
    %p104 = scmp.ne.s32.totalorder %s89, %s103
    %p105 = scmp.eq.s32.totalorder %s16, 0
    %p106 = por %p104, %p105
    %s107 = ssub.s32 %s10, %s17
    %p108 = scmp.eq.s32.totalorder %s107, 0
    %s110 = sadd.s32 %s109, 1
    %s111 = scalar_select %p108, %s109, %s110
    %p114 = pneg %p108
    %p115 = scmp.eq.s32.totalorder %s10, 1
    %p116 = por %p114, %p115
    %p117 = scmp.ne.s32.totalorder %s109, %s112
    %p118 = scmp.eq.s32.totalorder %s10, 0
    %p119 = por %p117, %p118
    %p120 = scmp.ne.s32.totalorder %s109, %s112
    %p121 = scmp.eq.s32.totalorder %s15, 1
    %p122 = por %p120, %p121
    %p123 = scmp.ne.s32.totalorder %s112, %s113
    %p124 = scmp.eq.s32.totalorder %s15, 0
    %p125 = por %p123, %p124
    %p126 = scmp.ne.s32.totalorder %s112, %s113
    %p127 = scmp.eq.s32.totalorder %s16, 1
    %p128 = por %p126, %p127
    %p130 = scmp.ne.s32.totalorder %s113, %s129
    %p131 = scmp.eq.s32.totalorder %s16, 0
    %p132 = por %p130, %p131
    %p133 = scmp.le.s32.totalorder 1, %s10
    %p134 = scmp.lt.s32.totalorder %s10, 3
    %p135 = pnand %p133, %p134
    %p136 = pneg %p135
    // Predicated region
    $region9: #{nonlocal_block_forward.8} parent=5 // pred_check
      _
    $region10: #{nonlocal_block_forward.8} parent=5 // pred_check_branch
      %138 = sbr.rel (%p135) target = $region12
    $region11: #{nonlocal_block_forward.8} parent=5 // pred_region
      %s139 = ssub.s32 %s10, 1
      // Predicated region
      $region13: #{nonlocal_block_forward.8} parent=11 // pred_check
        %p140 = pneg %p57
      $region14: #{nonlocal_block_forward.8} parent=11 // pred_check_branch
        %142 = sbr.rel (%p140) target = $region16
      $region15: #{nonlocal_block_forward.8} parent=11 // pred_region
        _
      $region16: #{nonlocal_block_forward.8} parent=11 // pred_fallthru
        _
      // Predicated region
      $region17: #{nonlocal_block_forward.8} parent=11 // pred_check
        %p143 = pneg %p78
      $region18: #{nonlocal_block_forward.8} parent=11 // pred_check_branch
        %145 = sbr.rel (%p143) target = $region20
      $region19: #{nonlocal_block_forward.8} parent=11 // pred_region
        _
      $region20: #{nonlocal_block_forward.8} parent=11 // pred_fallthru
        _
      // Predicated region
      $region21: #{nonlocal_block_forward.8} parent=11 // pred_check
        %p146 = pneg %p99
      $region22: #{nonlocal_block_forward.8} parent=11 // pred_check_branch
        %148 = sbr.rel (%p146) target = $region24
      $region23: #{nonlocal_block_forward.8} parent=11 // pred_region
        _
      $region24: #{nonlocal_block_forward.8} parent=11 // pred_fallthru
        _
    $region12: #{nonlocal_block_forward.8} parent=5 // pred_fallthru
      _
    %p149 = scmp.lt.s32.totalorder %s10, 2
    // Predicated region
    $region25: #{nonlocal_block_forward.8} parent=5 // pred_check
      %p150 = pneg %p149
    $region26: #{nonlocal_block_forward.8} parent=5 // pred_check_branch
      %152 = sbr.rel (%p150) target = $region28
    $region27: #{nonlocal_block_forward.8} parent=5 // pred_region
      // Predicated region
      $region29: #{nonlocal_block_forward.8} parent=27 // pred_check
        %p153 = pneg %p30
      $region30: #{nonlocal_block_forward.8} parent=27 // pred_check_branch
        %155 = sbr.rel (%p153) target = $region32
      $region31: #{nonlocal_block_forward.8} parent=27 // pred_region
        %p156 = scmp.lt.s32.totalorder %s10, 1
        %s157 = scalar_select %p156, %s10, 1
        %s158 = smul.addr %s157, 14
        %s159 = smul.addr %s158, 8
        %s160 = scalar_lea.vmem %s0, %s159
      $region32: #{nonlocal_block_forward.8} parent=27 // pred_fallthru
        _
    $region28: #{nonlocal_block_forward.8} parent=5 // pred_fallthru
      _
    %p161 = scmp.le.s32.totalorder 1, %s10
    %p162 = scmp.lt.s32.totalorder %s10, 3
    %p163 = pnand %p161, %p162
    %p164 = pneg %p163
    // Predicated region
    $region33: #{nonlocal_block_forward.8} parent=5 // pred_check
      _
    $region34: #{nonlocal_block_forward.8} parent=5 // pred_check_branch
      %166 = sbr.rel (%p163) target = $region36
    $region35: #{nonlocal_block_forward.8} parent=5 // pred_region
      %s167 = ssub.s32 %s10, 1
      %p168 = scmp.lt.s32.totalorder %s15, 1
      %s169 = scalar_select %p168, %s15, 1
      %s170 = smul.addr %s169, 14
      %s171 = smul.addr %s170, 8
      %s172 = scalar_lea.vmem %s0, %s171
      %p173 = pneg %p36
      %p174 = pneg %p33
      %p175 = pneg %p57
      %p176 = pneg %p54
      %p177 = pneg %p78
      %p178 = pneg %p75
      %p179 = pneg %p99
      %p180 = pneg %p96
      %p181 = pneg %p125
      %p182 = pneg %p122
      %p183 = scmp.lt.s32.totalorder %s15, 1
      %s184 = scalar_select %p183, %s15, 1
      %s185 = smul.addr %s184, 10
      %s186 = smul.addr %s185, 8
      %s187 = scalar_lea.vmem %s4, %s186
      %p188 = scmp.lt.s32.totalorder %s15, 1
      %s189 = scalar_select %p188, %s15, 1
      %s190 = smul.addr %s189, 14
      %s191 = smul.addr %s190, 8
      %s192 = scalar_lea.vmem %s0, %s191
      %p193 = scmp.lt.s32.totalorder %s15, 1
      %s194 = scalar_select %p193, %s15, 1
      %s195 = smul.addr %s194, 10
      %s196 = smul.addr %s195, 8
      %s197 = scalar_lea.vmem %s4, %s196
      %v198 = vld [vmem:[%s192] sm:$0xff]
      %v199 = vld [vmem:[%s192 + $0x8] sm:$0xff]
      %v200 = vld [vmem:[%s192 + $0x10] sm:$0xff]
      %v201 = vld [vmem:[%s192 + $0x18] sm:$0xff]
      %v202 = vld [vmem:[%s192 + $0x20] sm:$0xff]
      %v203 = vld [vmem:[%s192 + $0x28] sm:$0xff]
      %v204 = vld [vmem:[%s192 + $0x30] sm:$0xff]
      %v205 = vld [vmem:[%s192 + $0x38] sm:$0xff]
      %v206 = vld [vmem:[%s192 + $0x40] sm:$0xff]
      %v207 = vld [vmem:[%s192 + $0x48] sm:$0xff]
      %v208 = vld [vmem:[%s1] sm:$0x3]
      %v209 = vld [vmem:[%s192 + $0x1] sm:$0xff]
      %v210 = vld [vmem:[%s192 + $0x9] sm:$0xff]
      %v211 = vld [vmem:[%s192 + $0x11] sm:$0xff]
      %v212 = vld [vmem:[%s192 + $0x19] sm:$0xff]
      %v213 = vld [vmem:[%s192 + $0x21] sm:$0xff]
      %v214 = vld [vmem:[%s192 + $0x29] sm:$0xff]
      %v215 = vld [vmem:[%s192 + $0x31] sm:$0xff]
      %v216 = vld [vmem:[%s192 + $0x39] sm:$0xff]
      %v217 = vld [vmem:[%s192 + $0x41] sm:$0xff]
      %v218 = vld [vmem:[%s192 + $0x49] sm:$0xff]
      %s219 = scalar_lea.vmem %s1, 2
      %v220 = vld [vmem:[%s219] sm:$0x3]
      %vm221 = vcmask 15360
      %v223 = vsel %vm221, %v209, 0
      %v226 = vsel %vm221, %v210, 0
      %v229 = vsel %vm221, %v211, 0
      %v232 = vsel %vm221, %v212, 0
      %v235 = vsel %vm221, %v213, 0
      %v238 = vsel %vm221, %v214, 0
      %v241 = vsel %vm221, %v215, 0
      %v244 = vsel %vm221, %v216, 0
      %v247 = vsel %vm221, %v217, 0
      %v250 = vsel %vm221, %v218, 0
      %vm252 = vcmask 1041408
      %v254 = vsel %vm252, %v220, 0
      %256 = vmatpush.msra.mxu0 0.0
      %257 = vmatpush.msra.mxu0 0.0
      %258 = vmatpush.msra.mxu0 0.0
      %259 = vmatpush.msra.mxu0 0.0
      %260 = vmatpush.msra.mxu0 0.0
      %261 = vmatpush.msra.mxu0 0.0
      %262 = vmatpush.msra.mxu0 0.0
      %263 = vmatpush.msra.mxu0 0.0
      %264 = vmatpush.msra.mxu0 0.0
      %265 = vmatpush.msra.mxu0 0.0
      %266 = vmatpush.msra.mxu0 0.0
      %267 = vmatpush.msra.mxu0 0.0
      %268 = vmatpush.msra.mxu0 0.0
      %269 = vmatpush.msra.mxu0 0.0
      %270 = vmatpush.msra.mxu0 0.0
      %271 = vmatpush.msra.mxu0 %v254
      %272 = vmatmul.f32.gmra.mxu0 %v223
      %v273 = vpop.f32.mrf.mxu0
      %v274 = vadd.f32 0.0, %v273
      %275 = vmatmul.f32.gmra.mxu0 %v226
      %v276 = vpop.f32.mrf.mxu0
      %v277 = vadd.f32 0.0, %v276
      %278 = vmatmul.f32.gmra.mxu0 %v229
      %v279 = vpop.f32.mrf.mxu0
      %v280 = vadd.f32 0.0, %v279
      %281 = vmatmul.f32.gmra.mxu0 %v232
      %v282 = vpop.f32.mrf.mxu0
      %v283 = vadd.f32 0.0, %v282
      %284 = vmatmul.f32.gmra.mxu0 %v235
      %v285 = vpop.f32.mrf.mxu0
      %v286 = vadd.f32 0.0, %v285
      %287 = vmatmul.f32.gmra.mxu0 %v238
      %v288 = vpop.f32.mrf.mxu0
      %v289 = vadd.f32 0.0, %v288
      %290 = vmatmul.f32.gmra.mxu0 %v241
      %v291 = vpop.f32.mrf.mxu0
      %v292 = vadd.f32 0.0, %v291
      %293 = vmatmul.f32.gmra.mxu0 %v244
      %v294 = vpop.f32.mrf.mxu0
      %v295 = vadd.f32 0.0, %v294
      %296 = vmatmul.f32.gmra.mxu0 %v247
      %v297 = vpop.f32.mrf.mxu0
      %v298 = vadd.f32 0.0, %v297
      %299 = vmatmul.f32.gmra.mxu0 %v250
      %v300 = vpop.f32.mrf.mxu0
      %v301 = vadd.f32 0.0, %v300
      %302 = vdwg.mxu0
      %v304 = vsel %vm221, %v198, 0
      %v307 = vsel %vm221, %v199, 0
      %v310 = vsel %vm221, %v200, 0
      %v313 = vsel %vm221, %v201, 0
      %v316 = vsel %vm221, %v202, 0
      %v319 = vsel %vm221, %v203, 0
      %v322 = vsel %vm221, %v204, 0
      %v325 = vsel %vm221, %v205, 0
      %v328 = vsel %vm221, %v206, 0
      %v331 = vsel %vm221, %v207, 0
      %v334 = vsel %vm252, %v208, 0
      %336 = vmatpush.msra.mxu0 0.0
      %337 = vmatpush.msra.mxu0 0.0
      %338 = vmatpush.msra.mxu0 0.0
      %339 = vmatpush.msra.mxu0 0.0
      %340 = vmatpush.msra.mxu0 0.0
      %341 = vmatpush.msra.mxu0 0.0
      %342 = vmatpush.msra.mxu0 0.0
      %343 = vmatpush.msra.mxu0 0.0
      %344 = vmatpush.msra.mxu0 0.0
      %345 = vmatpush.msra.mxu0 0.0
      %346 = vmatpush.msra.mxu0 0.0
      %347 = vmatpush.msra.mxu0 0.0
      %348 = vmatpush.msra.mxu0 0.0
      %349 = vmatpush.msra.mxu0 0.0
      %350 = vmatpush.msra.mxu0 0.0
      %351 = vmatpush.msra.mxu0 %v334
      %352 = vmatmul.f32.gmra.mxu0 %v304
      %v353 = vpop.f32.mrf.mxu0
      %v354 = vadd.f32 %v274, %v353
      %355 = vmatmul.f32.gmra.mxu0 %v307
      %v356 = vpop.f32.mrf.mxu0
      %v357 = vadd.f32 %v277, %v356
      %358 = vmatmul.f32.gmra.mxu0 %v310
      %v359 = vpop.f32.mrf.mxu0
      %v360 = vadd.f32 %v280, %v359
      %361 = vmatmul.f32.gmra.mxu0 %v313
      %v362 = vpop.f32.mrf.mxu0
      %v363 = vadd.f32 %v283, %v362
      %364 = vmatmul.f32.gmra.mxu0 %v316
      %v365 = vpop.f32.mrf.mxu0
      %v366 = vadd.f32 %v286, %v365
      %367 = vmatmul.f32.gmra.mxu0 %v319
      %v368 = vpop.f32.mrf.mxu0
      %v369 = vadd.f32 %v289, %v368
      %370 = vmatmul.f32.gmra.mxu0 %v322
      %v371 = vpop.f32.mrf.mxu0
      %v372 = vadd.f32 %v292, %v371
      %373 = vmatmul.f32.gmra.mxu0 %v325
      %v374 = vpop.f32.mrf.mxu0
      %v375 = vadd.f32 %v295, %v374
      %376 = vmatmul.f32.gmra.mxu0 %v328
      %v377 = vpop.f32.mrf.mxu0
      %v378 = vadd.f32 %v298, %v377
      %379 = vmatmul.f32.gmra.mxu0 %v331
      %v380 = vpop.f32.mrf.mxu0
      %v381 = vadd.f32 %v301, %v380
      %382 = vdwg.mxu0
      %v383 = vld [vmem:[%s192 + $0x2] sm:$0xff]
      %v384 = vld [vmem:[%s192 + $0xa] sm:$0xff]
      %v385 = vld [vmem:[%s192 + $0x12] sm:$0xff]
      %v386 = vld [vmem:[%s192 + $0x1a] sm:$0xff]
      %v387 = vld [vmem:[%s192 + $0x22] sm:$0xff]
      %v388 = vld [vmem:[%s192 + $0x2a] sm:$0xff]
      %v389 = vld [vmem:[%s192 + $0x32] sm:$0xff]
      %v390 = vld [vmem:[%s192 + $0x3a] sm:$0xff]
      %v391 = vld [vmem:[%s192 + $0x42] sm:$0xff]
      %v392 = vld [vmem:[%s192 + $0x4a] sm:$0xff]
      %s393 = scalar_lea.vmem %s1, 4
      %v394 = vld [vmem:[%s393] sm:$0x3]
      %v396 = vsel %vm221, %v383, 0
      %v399 = vsel %vm221, %v384, 0
      %v402 = vsel %vm221, %v385, 0
      %v405 = vsel %vm221, %v386, 0
      %v408 = vsel %vm221, %v387, 0
      %v411 = vsel %vm221, %v388, 0
      %v414 = vsel %vm221, %v389, 0
      %v417 = vsel %vm221, %v390, 0
      %v420 = vsel %vm221, %v391, 0
      %v423 = vsel %vm221, %v392, 0
      %v426 = vsel %vm252, %v394, 0
      %428 = vmatpush.msra.mxu0 0.0
      %429 = vmatpush.msra.mxu0 0.0
      %430 = vmatpush.msra.mxu0 0.0
      %431 = vmatpush.msra.mxu0 0.0
      %432 = vmatpush.msra.mxu0 0.0
      %433 = vmatpush.msra.mxu0 0.0
      %434 = vmatpush.msra.mxu0 0.0
      %435 = vmatpush.msra.mxu0 0.0
      %436 = vmatpush.msra.mxu0 0.0
      %437 = vmatpush.msra.mxu0 0.0
      %438 = vmatpush.msra.mxu0 0.0
      %439 = vmatpush.msra.mxu0 0.0
      %440 = vmatpush.msra.mxu0 0.0
      %441 = vmatpush.msra.mxu0 0.0
      %442 = vmatpush.msra.mxu0 0.0
      %443 = vmatpush.msra.mxu0 %v426
      %444 = vmatmul.f32.gmra.mxu0 %v396
      %v445 = vpop.f32.mrf.mxu0
      %v446 = vadd.f32 0.0, %v445
      %447 = vmatmul.f32.gmra.mxu0 %v399
      %v448 = vpop.f32.mrf.mxu0
      %v449 = vadd.f32 0.0, %v448
      %450 = vmatmul.f32.gmra.mxu0 %v402
      %v451 = vpop.f32.mrf.mxu0
      %v452 = vadd.f32 0.0, %v451
      %453 = vmatmul.f32.gmra.mxu0 %v405
      %v454 = vpop.f32.mrf.mxu0
      %v455 = vadd.f32 0.0, %v454
      %456 = vmatmul.f32.gmra.mxu0 %v408
      %v457 = vpop.f32.mrf.mxu0
      %v458 = vadd.f32 0.0, %v457
      %459 = vmatmul.f32.gmra.mxu0 %v411
      %v460 = vpop.f32.mrf.mxu0
      %v461 = vadd.f32 0.0, %v460
      %462 = vmatmul.f32.gmra.mxu0 %v414
      %v463 = vpop.f32.mrf.mxu0
      %v464 = vadd.f32 0.0, %v463
      %465 = vmatmul.f32.gmra.mxu0 %v417
      %v466 = vpop.f32.mrf.mxu0
      %v467 = vadd.f32 0.0, %v466
      %468 = vmatmul.f32.gmra.mxu0 %v420
      %v469 = vpop.f32.mrf.mxu0
      %v470 = vadd.f32 0.0, %v469
      %471 = vmatmul.f32.gmra.mxu0 %v423
      %v472 = vpop.f32.mrf.mxu0
      %v473 = vadd.f32 0.0, %v472
      %474 = vdwg.mxu0
      %v475 = vadd.f32 %v354, %v446
      %v476 = vadd.f32 %v357, %v449
      %v477 = vadd.f32 %v360, %v452
      %v478 = vadd.f32 %v363, %v455
      %v479 = vadd.f32 %v366, %v458
      %v480 = vadd.f32 %v369, %v461
      %v481 = vadd.f32 %v372, %v464
      %v482 = vadd.f32 %v375, %v467
      %v483 = vadd.f32 %v378, %v470
      %v484 = vadd.f32 %v381, %v473
      %v485 = vld [vmem:[%s192 + $0xa] sm:$0xff]
      %v486 = vld [vmem:[%s192 + $0x12] sm:$0xff]
      %v487 = vld [vmem:[%s192 + $0x1a] sm:$0xff]
      %v488 = vld [vmem:[%s192 + $0x22] sm:$0xff]
      %v489 = vld [vmem:[%s192 + $0x2a] sm:$0xff]
      %v490 = vld [vmem:[%s192 + $0x32] sm:$0xff]
      %v491 = vld [vmem:[%s192 + $0x3a] sm:$0xff]
      %v492 = vld [vmem:[%s192 + $0x42] sm:$0xff]
      %v493 = vld [vmem:[%s192 + $0x4a] sm:$0xff]
      %v494 = vld [vmem:[%s192 + $0x52] sm:$0xff]
      %s495 = scalar_lea.vmem %s1, 6
      %v496 = vld [vmem:[%s495] sm:$0x3]
      %v498 = vsel %vm221, %v485, 0
      %v501 = vsel %vm221, %v486, 0
      %v504 = vsel %vm221, %v487, 0
      %v507 = vsel %vm221, %v488, 0
      %v510 = vsel %vm221, %v489, 0
      %v513 = vsel %vm221, %v490, 0
      %v516 = vsel %vm221, %v491, 0
      %v519 = vsel %vm221, %v492, 0
      %v522 = vsel %vm221, %v493, 0
      %v525 = vsel %vm221, %v494, 0
      %v528 = vsel %vm252, %v496, 0
      %530 = vmatpush.msra.mxu0 0.0
      %531 = vmatpush.msra.mxu0 0.0
      %532 = vmatpush.msra.mxu0 0.0
      %533 = vmatpush.msra.mxu0 0.0
      %534 = vmatpush.msra.mxu0 0.0
      %535 = vmatpush.msra.mxu0 0.0
      %536 = vmatpush.msra.mxu0 0.0
      %537 = vmatpush.msra.mxu0 0.0
      %538 = vmatpush.msra.mxu0 0.0
      %539 = vmatpush.msra.mxu0 0.0
      %540 = vmatpush.msra.mxu0 0.0
      %541 = vmatpush.msra.mxu0 0.0
      %542 = vmatpush.msra.mxu0 0.0
      %543 = vmatpush.msra.mxu0 0.0
      %544 = vmatpush.msra.mxu0 0.0
      %545 = vmatpush.msra.mxu0 %v528
      %546 = vmatmul.f32.gmra.mxu0 %v498
      %v547 = vpop.f32.mrf.mxu0
      %v548 = vadd.f32 0.0, %v547
      %549 = vmatmul.f32.gmra.mxu0 %v501
      %v550 = vpop.f32.mrf.mxu0
      %v551 = vadd.f32 0.0, %v550
      %552 = vmatmul.f32.gmra.mxu0 %v504
      %v553 = vpop.f32.mrf.mxu0
      %v554 = vadd.f32 0.0, %v553
      %555 = vmatmul.f32.gmra.mxu0 %v507
      %v556 = vpop.f32.mrf.mxu0
      %v557 = vadd.f32 0.0, %v556
      %558 = vmatmul.f32.gmra.mxu0 %v510
      %v559 = vpop.f32.mrf.mxu0
      %v560 = vadd.f32 0.0, %v559
      %561 = vmatmul.f32.gmra.mxu0 %v513
      %v562 = vpop.f32.mrf.mxu0
      %v563 = vadd.f32 0.0, %v562
      %564 = vmatmul.f32.gmra.mxu0 %v516
      %v565 = vpop.f32.mrf.mxu0
      %v566 = vadd.f32 0.0, %v565
      %567 = vmatmul.f32.gmra.mxu0 %v519
      %v568 = vpop.f32.mrf.mxu0
      %v569 = vadd.f32 0.0, %v568
      %570 = vmatmul.f32.gmra.mxu0 %v522
      %v571 = vpop.f32.mrf.mxu0
      %v572 = vadd.f32 0.0, %v571
      %573 = vmatmul.f32.gmra.mxu0 %v525
      %v574 = vpop.f32.mrf.mxu0
      %v575 = vadd.f32 0.0, %v574
      %576 = vdwg.mxu0
      %v577 = vadd.f32 %v475, %v548
      %v578 = vadd.f32 %v476, %v551
      %v579 = vadd.f32 %v477, %v554
      %v580 = vadd.f32 %v478, %v557
      %v581 = vadd.f32 %v479, %v560
      %v582 = vadd.f32 %v480, %v563
      %v583 = vadd.f32 %v481, %v566
      %v584 = vadd.f32 %v482, %v569
      %v585 = vadd.f32 %v483, %v572
      %v586 = vadd.f32 %v484, %v575
      %v587 = vld [vmem:[%s192 + $0xb] sm:$0xff]
      %v588 = vld [vmem:[%s192 + $0x13] sm:$0xff]
      %v589 = vld [vmem:[%s192 + $0x1b] sm:$0xff]
      %v590 = vld [vmem:[%s192 + $0x23] sm:$0xff]
      %v591 = vld [vmem:[%s192 + $0x2b] sm:$0xff]
      %v592 = vld [vmem:[%s192 + $0x33] sm:$0xff]
      %v593 = vld [vmem:[%s192 + $0x3b] sm:$0xff]
      %v594 = vld [vmem:[%s192 + $0x43] sm:$0xff]
      %v595 = vld [vmem:[%s192 + $0x4b] sm:$0xff]
      %v596 = vld [vmem:[%s192 + $0x53] sm:$0xff]
      %s597 = scalar_lea.vmem %s1, 8
      %v598 = vld [vmem:[%s597] sm:$0x3]
      %v600 = vsel %vm221, %v587, 0
      %v603 = vsel %vm221, %v588, 0
      %v606 = vsel %vm221, %v589, 0
      %v609 = vsel %vm221, %v590, 0
      %v612 = vsel %vm221, %v591, 0
      %v615 = vsel %vm221, %v592, 0
      %v618 = vsel %vm221, %v593, 0
      %v621 = vsel %vm221, %v594, 0
      %v624 = vsel %vm221, %v595, 0
      %v627 = vsel %vm221, %v596, 0
      %v630 = vsel %vm252, %v598, 0
      %632 = vmatpush.msra.mxu0 0.0
      %633 = vmatpush.msra.mxu0 0.0
      %634 = vmatpush.msra.mxu0 0.0
      %635 = vmatpush.msra.mxu0 0.0
      %636 = vmatpush.msra.mxu0 0.0
      %637 = vmatpush.msra.mxu0 0.0
      %638 = vmatpush.msra.mxu0 0.0
      %639 = vmatpush.msra.mxu0 0.0
      %640 = vmatpush.msra.mxu0 0.0
      %641 = vmatpush.msra.mxu0 0.0
      %642 = vmatpush.msra.mxu0 0.0
      %643 = vmatpush.msra.mxu0 0.0
      %644 = vmatpush.msra.mxu0 0.0
      %645 = vmatpush.msra.mxu0 0.0
      %646 = vmatpush.msra.mxu0 0.0
      %647 = vmatpush.msra.mxu0 %v630
      %648 = vmatmul.f32.gmra.mxu0 %v600
      %v649 = vpop.f32.mrf.mxu0
      %v650 = vadd.f32 0.0, %v649
      %651 = vmatmul.f32.gmra.mxu0 %v603
      %v652 = vpop.f32.mrf.mxu0
      %v653 = vadd.f32 0.0, %v652
      %654 = vmatmul.f32.gmra.mxu0 %v606
      %v655 = vpop.f32.mrf.mxu0
      %v656 = vadd.f32 0.0, %v655
      %657 = vmatmul.f32.gmra.mxu0 %v609
      %v658 = vpop.f32.mrf.mxu0
      %v659 = vadd.f32 0.0, %v658
      %660 = vmatmul.f32.gmra.mxu0 %v612
      %v661 = vpop.f32.mrf.mxu0
      %v662 = vadd.f32 0.0, %v661
      %663 = vmatmul.f32.gmra.mxu0 %v615
      %v664 = vpop.f32.mrf.mxu0
      %v665 = vadd.f32 0.0, %v664
      %666 = vmatmul.f32.gmra.mxu0 %v618
      %v667 = vpop.f32.mrf.mxu0
      %v668 = vadd.f32 0.0, %v667
      %669 = vmatmul.f32.gmra.mxu0 %v621
      %v670 = vpop.f32.mrf.mxu0
      %v671 = vadd.f32 0.0, %v670
      %672 = vmatmul.f32.gmra.mxu0 %v624
      %v673 = vpop.f32.mrf.mxu0
      %v674 = vadd.f32 0.0, %v673
      %675 = vmatmul.f32.gmra.mxu0 %v627
      %v676 = vpop.f32.mrf.mxu0
      %v677 = vadd.f32 0.0, %v676
      %678 = vdwg.mxu0
      %v679 = vadd.f32 %v577, %v650
      %v680 = vadd.f32 %v578, %v653
      %v681 = vadd.f32 %v579, %v656
      %v682 = vadd.f32 %v580, %v659
      %v683 = vadd.f32 %v581, %v662
      %v684 = vadd.f32 %v582, %v665
      %v685 = vadd.f32 %v583, %v668
      %v686 = vadd.f32 %v584, %v671
      %v687 = vadd.f32 %v585, %v674
      %v688 = vadd.f32 %v586, %v677
      %v689 = vld [vmem:[%s192 + $0xc] sm:$0xff]
      %v690 = vld [vmem:[%s192 + $0x14] sm:$0xff]
      %v691 = vld [vmem:[%s192 + $0x1c] sm:$0xff]
      %v692 = vld [vmem:[%s192 + $0x24] sm:$0xff]
      %v693 = vld [vmem:[%s192 + $0x2c] sm:$0xff]
      %v694 = vld [vmem:[%s192 + $0x34] sm:$0xff]
      %v695 = vld [vmem:[%s192 + $0x3c] sm:$0xff]
      %v696 = vld [vmem:[%s192 + $0x44] sm:$0xff]
      %v697 = vld [vmem:[%s192 + $0x4c] sm:$0xff]
      %v698 = vld [vmem:[%s192 + $0x54] sm:$0xff]
      %s699 = scalar_lea.vmem %s1, 10
      %v700 = vld [vmem:[%s699] sm:$0x3]
      %v702 = vsel %vm221, %v689, 0
      %v705 = vsel %vm221, %v690, 0
      %v708 = vsel %vm221, %v691, 0
      %v711 = vsel %vm221, %v692, 0
      %v714 = vsel %vm221, %v693, 0
      %v717 = vsel %vm221, %v694, 0
      %v720 = vsel %vm221, %v695, 0
      %v723 = vsel %vm221, %v696, 0
      %v726 = vsel %vm221, %v697, 0
      %v729 = vsel %vm221, %v698, 0
      %v732 = vsel %vm252, %v700, 0
      %734 = vmatpush.msra.mxu0 0.0
      %735 = vmatpush.msra.mxu0 0.0
      %736 = vmatpush.msra.mxu0 0.0
      %737 = vmatpush.msra.mxu0 0.0
      %738 = vmatpush.msra.mxu0 0.0
      %739 = vmatpush.msra.mxu0 0.0
      %740 = vmatpush.msra.mxu0 0.0
      %741 = vmatpush.msra.mxu0 0.0
      %742 = vmatpush.msra.mxu0 0.0
      %743 = vmatpush.msra.mxu0 0.0
      %744 = vmatpush.msra.mxu0 0.0
      %745 = vmatpush.msra.mxu0 0.0
      %746 = vmatpush.msra.mxu0 0.0
      %747 = vmatpush.msra.mxu0 0.0
      %748 = vmatpush.msra.mxu0 0.0
      %749 = vmatpush.msra.mxu0 %v732
      %750 = vmatmul.f32.gmra.mxu0 %v702
      %v751 = vpop.f32.mrf.mxu0
      %v752 = vadd.f32 0.0, %v751
      %753 = vmatmul.f32.gmra.mxu0 %v705
      %v754 = vpop.f32.mrf.mxu0
      %v755 = vadd.f32 0.0, %v754
      %756 = vmatmul.f32.gmra.mxu0 %v708
      %v757 = vpop.f32.mrf.mxu0
      %v758 = vadd.f32 0.0, %v757
      %759 = vmatmul.f32.gmra.mxu0 %v711
      %v760 = vpop.f32.mrf.mxu0
      %v761 = vadd.f32 0.0, %v760
      %762 = vmatmul.f32.gmra.mxu0 %v714
      %v763 = vpop.f32.mrf.mxu0
      %v764 = vadd.f32 0.0, %v763
      %765 = vmatmul.f32.gmra.mxu0 %v717
      %v766 = vpop.f32.mrf.mxu0
      %v767 = vadd.f32 0.0, %v766
      %768 = vmatmul.f32.gmra.mxu0 %v720
      %v769 = vpop.f32.mrf.mxu0
      %v770 = vadd.f32 0.0, %v769
      %771 = vmatmul.f32.gmra.mxu0 %v723
      %v772 = vpop.f32.mrf.mxu0
      %v773 = vadd.f32 0.0, %v772
      %774 = vmatmul.f32.gmra.mxu0 %v726
      %v775 = vpop.f32.mrf.mxu0
      %v776 = vadd.f32 0.0, %v775
      %777 = vmatmul.f32.gmra.mxu0 %v729
      %v778 = vpop.f32.mrf.mxu0
      %v779 = vadd.f32 0.0, %v778
      %780 = vdwg.mxu0
      %v781 = vadd.f32 %v679, %v752
      %v782 = vadd.f32 %v680, %v755
      %v783 = vadd.f32 %v681, %v758
      %v784 = vadd.f32 %v682, %v761
      %v785 = vadd.f32 %v683, %v764
      %v786 = vadd.f32 %v684, %v767
      %v787 = vadd.f32 %v685, %v770
      %v788 = vadd.f32 %v686, %v773
      %v789 = vadd.f32 %v687, %v776
      %v790 = vadd.f32 %v688, %v779
      %v791 = vld [vmem:[%s192 + $0x14] sm:$0xff]
      %v792 = vld [vmem:[%s192 + $0x1c] sm:$0xff]
      %v793 = vld [vmem:[%s192 + $0x24] sm:$0xff]
      %v794 = vld [vmem:[%s192 + $0x2c] sm:$0xff]
      %v795 = vld [vmem:[%s192 + $0x34] sm:$0xff]
      %v796 = vld [vmem:[%s192 + $0x3c] sm:$0xff]
      %v797 = vld [vmem:[%s192 + $0x44] sm:$0xff]
      %v798 = vld [vmem:[%s192 + $0x4c] sm:$0xff]
      %v799 = vld [vmem:[%s192 + $0x54] sm:$0xff]
      %v800 = vld [vmem:[%s192 + $0x5c] sm:$0xff]
      %s801 = scalar_lea.vmem %s1, 12
      %v802 = vld [vmem:[%s801] sm:$0x3]
      %v804 = vsel %vm221, %v791, 0
      %v807 = vsel %vm221, %v792, 0
      %v810 = vsel %vm221, %v793, 0
      %v813 = vsel %vm221, %v794, 0
      %v816 = vsel %vm221, %v795, 0
      %v819 = vsel %vm221, %v796, 0
      %v822 = vsel %vm221, %v797, 0
      %v825 = vsel %vm221, %v798, 0
      %v828 = vsel %vm221, %v799, 0
      %v831 = vsel %vm221, %v800, 0
      %v834 = vsel %vm252, %v802, 0
      %836 = vmatpush.msra.mxu0 0.0
      %837 = vmatpush.msra.mxu0 0.0
      %838 = vmatpush.msra.mxu0 0.0
      %839 = vmatpush.msra.mxu0 0.0
      %840 = vmatpush.msra.mxu0 0.0
      %841 = vmatpush.msra.mxu0 0.0
      %842 = vmatpush.msra.mxu0 0.0
      %843 = vmatpush.msra.mxu0 0.0
      %844 = vmatpush.msra.mxu0 0.0
      %845 = vmatpush.msra.mxu0 0.0
      %846 = vmatpush.msra.mxu0 0.0
      %847 = vmatpush.msra.mxu0 0.0
      %848 = vmatpush.msra.mxu0 0.0
      %849 = vmatpush.msra.mxu0 0.0
      %850 = vmatpush.msra.mxu0 0.0
      %851 = vmatpush.msra.mxu0 %v834
      %852 = vmatmul.f32.gmra.mxu0 %v804
      %v853 = vpop.f32.mrf.mxu0
      %v854 = vadd.f32 0.0, %v853
      %855 = vmatmul.f32.gmra.mxu0 %v807
      %v856 = vpop.f32.mrf.mxu0
      %v857 = vadd.f32 0.0, %v856
      %858 = vmatmul.f32.gmra.mxu0 %v810
      %v859 = vpop.f32.mrf.mxu0
      %v860 = vadd.f32 0.0, %v859
      %861 = vmatmul.f32.gmra.mxu0 %v813
      %v862 = vpop.f32.mrf.mxu0
      %v863 = vadd.f32 0.0, %v862
      %864 = vmatmul.f32.gmra.mxu0 %v816
      %v865 = vpop.f32.mrf.mxu0
      %v866 = vadd.f32 0.0, %v865
      %867 = vmatmul.f32.gmra.mxu0 %v819
      %v868 = vpop.f32.mrf.mxu0
      %v869 = vadd.f32 0.0, %v868
      %870 = vmatmul.f32.gmra.mxu0 %v822
      %v871 = vpop.f32.mrf.mxu0
      %v872 = vadd.f32 0.0, %v871
      %873 = vmatmul.f32.gmra.mxu0 %v825
      %v874 = vpop.f32.mrf.mxu0
      %v875 = vadd.f32 0.0, %v874
      %876 = vmatmul.f32.gmra.mxu0 %v828
      %v877 = vpop.f32.mrf.mxu0
      %v878 = vadd.f32 0.0, %v877
      %879 = vmatmul.f32.gmra.mxu0 %v831
      %v880 = vpop.f32.mrf.mxu0
      %v881 = vadd.f32 0.0, %v880
      %882 = vdwg.mxu0
      %v883 = vadd.f32 %v781, %v854
      %v884 = vadd.f32 %v782, %v857
      %v885 = vadd.f32 %v783, %v860
      %v886 = vadd.f32 %v784, %v863
      %v887 = vadd.f32 %v785, %v866
      %v888 = vadd.f32 %v786, %v869
      %v889 = vadd.f32 %v787, %v872
      %v890 = vadd.f32 %v788, %v875
      %v891 = vadd.f32 %v789, %v878
      %v892 = vadd.f32 %v790, %v881
      %v893 = vld [vmem:[%s192 + $0x15] sm:$0xff]
      %v894 = vld [vmem:[%s192 + $0x1d] sm:$0xff]
      %v895 = vld [vmem:[%s192 + $0x25] sm:$0xff]
      %v896 = vld [vmem:[%s192 + $0x2d] sm:$0xff]
      %v897 = vld [vmem:[%s192 + $0x35] sm:$0xff]
      %v898 = vld [vmem:[%s192 + $0x3d] sm:$0xff]
      %v899 = vld [vmem:[%s192 + $0x45] sm:$0xff]
      %v900 = vld [vmem:[%s192 + $0x4d] sm:$0xff]
      %v901 = vld [vmem:[%s192 + $0x55] sm:$0xff]
      %v902 = vld [vmem:[%s192 + $0x5d] sm:$0xff]
      %s903 = scalar_lea.vmem %s1, 14
      %v904 = vld [vmem:[%s903] sm:$0x3]
      %v906 = vsel %vm221, %v893, 0
      %v909 = vsel %vm221, %v894, 0
      %v912 = vsel %vm221, %v895, 0
      %v915 = vsel %vm221, %v896, 0
      %v918 = vsel %vm221, %v897, 0
      %v921 = vsel %vm221, %v898, 0
      %v924 = vsel %vm221, %v899, 0
      %v927 = vsel %vm221, %v900, 0
      %v930 = vsel %vm221, %v901, 0
      %v933 = vsel %vm221, %v902, 0
      %v936 = vsel %vm252, %v904, 0
      %938 = vmatpush.msra.mxu0 0.0
      %939 = vmatpush.msra.mxu0 0.0
      %940 = vmatpush.msra.mxu0 0.0
      %941 = vmatpush.msra.mxu0 0.0
      %942 = vmatpush.msra.mxu0 0.0
      %943 = vmatpush.msra.mxu0 0.0
      %944 = vmatpush.msra.mxu0 0.0
      %945 = vmatpush.msra.mxu0 0.0
      %946 = vmatpush.msra.mxu0 0.0
      %947 = vmatpush.msra.mxu0 0.0
      %948 = vmatpush.msra.mxu0 0.0
      %949 = vmatpush.msra.mxu0 0.0
      %950 = vmatpush.msra.mxu0 0.0
      %951 = vmatpush.msra.mxu0 0.0
      %952 = vmatpush.msra.mxu0 0.0
      %953 = vmatpush.msra.mxu0 %v936
      %954 = vmatmul.f32.gmra.mxu0 %v906
      %v955 = vpop.f32.mrf.mxu0
      %v956 = vadd.f32 0.0, %v955
      %957 = vmatmul.f32.gmra.mxu0 %v909
      %v958 = vpop.f32.mrf.mxu0
      %v959 = vadd.f32 0.0, %v958
      %960 = vmatmul.f32.gmra.mxu0 %v912
      %v961 = vpop.f32.mrf.mxu0
      %v962 = vadd.f32 0.0, %v961
      %963 = vmatmul.f32.gmra.mxu0 %v915
      %v964 = vpop.f32.mrf.mxu0
      %v965 = vadd.f32 0.0, %v964
      %966 = vmatmul.f32.gmra.mxu0 %v918
      %v967 = vpop.f32.mrf.mxu0
      %v968 = vadd.f32 0.0, %v967
      %969 = vmatmul.f32.gmra.mxu0 %v921
      %v970 = vpop.f32.mrf.mxu0
      %v971 = vadd.f32 0.0, %v970
      %972 = vmatmul.f32.gmra.mxu0 %v924
      %v973 = vpop.f32.mrf.mxu0
      %v974 = vadd.f32 0.0, %v973
      %975 = vmatmul.f32.gmra.mxu0 %v927
      %v976 = vpop.f32.mrf.mxu0
      %v977 = vadd.f32 0.0, %v976
      %978 = vmatmul.f32.gmra.mxu0 %v930
      %v979 = vpop.f32.mrf.mxu0
      %v980 = vadd.f32 0.0, %v979
      %981 = vmatmul.f32.gmra.mxu0 %v933
      %v982 = vpop.f32.mrf.mxu0
      %v983 = vadd.f32 0.0, %v982
      %984 = vdwg.mxu0
      %v985 = vadd.f32 %v883, %v956
      %v986 = vadd.f32 %v884, %v959
      %v987 = vadd.f32 %v885, %v962
      %v988 = vadd.f32 %v886, %v965
      %v989 = vadd.f32 %v887, %v968
      %v990 = vadd.f32 %v888, %v971
      %v991 = vadd.f32 %v889, %v974
      %v992 = vadd.f32 %v890, %v977
      %v993 = vadd.f32 %v891, %v980
      %v994 = vadd.f32 %v892, %v983
      %v995 = vld [vmem:[%s192 + $0x16] sm:$0xff]
      %v996 = vld [vmem:[%s192 + $0x1e] sm:$0xff]
      %v997 = vld [vmem:[%s192 + $0x26] sm:$0xff]
      %v998 = vld [vmem:[%s192 + $0x2e] sm:$0xff]
      %v999 = vld [vmem:[%s192 + $0x36] sm:$0xff]
      %v1000 = vld [vmem:[%s192 + $0x3e] sm:$0xff]
      %v1001 = vld [vmem:[%s192 + $0x46] sm:$0xff]
      %v1002 = vld [vmem:[%s192 + $0x4e] sm:$0xff]
      %v1003 = vld [vmem:[%s192 + $0x56] sm:$0xff]
      %v1004 = vld [vmem:[%s192 + $0x5e] sm:$0xff]
      %s1005 = scalar_lea.vmem %s1, 16
      %v1006 = vld [vmem:[%s1005] sm:$0x3]
      %v1008 = vsel %vm221, %v995, 0
      %v1011 = vsel %vm221, %v996, 0
      %v1014 = vsel %vm221, %v997, 0
      %v1017 = vsel %vm221, %v998, 0
      %v1020 = vsel %vm221, %v999, 0
      %v1023 = vsel %vm221, %v1000, 0
      %v1026 = vsel %vm221, %v1001, 0
      %v1029 = vsel %vm221, %v1002, 0
      %v1032 = vsel %vm221, %v1003, 0
      %v1035 = vsel %vm221, %v1004, 0
      %v1038 = vsel %vm252, %v1006, 0
      %1040 = vmatpush.msra.mxu0 0.0
      %1041 = vmatpush.msra.mxu0 0.0
      %1042 = vmatpush.msra.mxu0 0.0
      %1043 = vmatpush.msra.mxu0 0.0
      %1044 = vmatpush.msra.mxu0 0.0
      %1045 = vmatpush.msra.mxu0 0.0
      %1046 = vmatpush.msra.mxu0 0.0
      %1047 = vmatpush.msra.mxu0 0.0
      %1048 = vmatpush.msra.mxu0 0.0
      %1049 = vmatpush.msra.mxu0 0.0
      %1050 = vmatpush.msra.mxu0 0.0
      %1051 = vmatpush.msra.mxu0 0.0
      %1052 = vmatpush.msra.mxu0 0.0
      %1053 = vmatpush.msra.mxu0 0.0
      %1054 = vmatpush.msra.mxu0 0.0
      %1055 = vmatpush.msra.mxu0 %v1038
      %1056 = vmatmul.f32.gmra.mxu0 %v1008
      %v1057 = vpop.f32.mrf.mxu0
      %v1058 = vadd.f32 0.0, %v1057
      %1059 = vmatmul.f32.gmra.mxu0 %v1011
      %v1060 = vpop.f32.mrf.mxu0
      %v1061 = vadd.f32 0.0, %v1060
      %1062 = vmatmul.f32.gmra.mxu0 %v1014
      %v1063 = vpop.f32.mrf.mxu0
      %v1064 = vadd.f32 0.0, %v1063
      %1065 = vmatmul.f32.gmra.mxu0 %v1017
      %v1066 = vpop.f32.mrf.mxu0
      %v1067 = vadd.f32 0.0, %v1066
      %1068 = vmatmul.f32.gmra.mxu0 %v1020
      %v1069 = vpop.f32.mrf.mxu0
      %v1070 = vadd.f32 0.0, %v1069
      %1071 = vmatmul.f32.gmra.mxu0 %v1023
      %v1072 = vpop.f32.mrf.mxu0
      %v1073 = vadd.f32 0.0, %v1072
      %1074 = vmatmul.f32.gmra.mxu0 %v1026
      %v1075 = vpop.f32.mrf.mxu0
      %v1076 = vadd.f32 0.0, %v1075
      %1077 = vmatmul.f32.gmra.mxu0 %v1029
      %v1078 = vpop.f32.mrf.mxu0
      %v1079 = vadd.f32 0.0, %v1078
      %1080 = vmatmul.f32.gmra.mxu0 %v1032
      %v1081 = vpop.f32.mrf.mxu0
      %v1082 = vadd.f32 0.0, %v1081
      %1083 = vmatmul.f32.gmra.mxu0 %v1035
      %v1084 = vpop.f32.mrf.mxu0
      %v1085 = vadd.f32 0.0, %v1084
      %1086 = vdwg.mxu0
      %v1087 = vadd.f32 %v985, %v1058
      %v1088 = vadd.f32 %v986, %v1061
      %v1089 = vadd.f32 %v987, %v1064
      %v1090 = vadd.f32 %v988, %v1067
      %v1091 = vadd.f32 %v989, %v1070
      %v1092 = vadd.f32 %v990, %v1073
      %v1093 = vadd.f32 %v991, %v1076
      %v1094 = vadd.f32 %v992, %v1079
      %v1095 = vadd.f32 %v993, %v1082
      %v1096 = vadd.f32 %v994, %v1085
      %v1097 = vld [vmem:[%s2] sm:$0x1]
      %v1099 = vperm.slane %v1097, 0
      %v1101 = vmul.f32 %v1087, %v1099
      %v1102 = vmul.f32 %v1088, %v1099
      %v1103 = vmul.f32 %v1089, %v1099
      %v1104 = vmul.f32 %v1090, %v1099
      %v1105 = vmul.f32 %v1091, %v1099
      %v1106 = vmul.f32 %v1092, %v1099
      %v1107 = vmul.f32 %v1093, %v1099
      %v1108 = vmul.f32 %v1094, %v1099
      %v1109 = vmul.f32 %v1095, %v1099
      %v1110 = vmul.f32 %v1096, %v1099
      %v1111 = vld [vmem:[%s3] sm:$0x1]
      %v1113 = vperm.slane %v1111, 0
      %v1115 = vadd.f32 %v1101, %v1113
      %v1116 = vadd.f32 %v1102, %v1113
      %v1117 = vadd.f32 %v1103, %v1113
      %v1118 = vadd.f32 %v1104, %v1113
      %v1119 = vadd.f32 %v1105, %v1113
      %v1120 = vadd.f32 %v1106, %v1113
      %v1121 = vadd.f32 %v1107, %v1113
      %v1122 = vadd.f32 %v1108, %v1113
      %v1123 = vadd.f32 %v1109, %v1113
      %v1124 = vadd.f32 %v1110, %v1113
      %v1125 = vmax.f32 %v1115, 0.0
      %v1126 = vmax.f32 %v1116, 0.0
      %v1127 = vmax.f32 %v1117, 0.0
      %v1128 = vmax.f32 %v1118, 0.0
      %v1129 = vmax.f32 %v1119, 0.0
      %v1130 = vmax.f32 %v1120, 0.0
      %v1131 = vmax.f32 %v1121, 0.0
      %v1132 = vmax.f32 %v1122, 0.0
      %v1133 = vmax.f32 %v1123, 0.0
      %v1134 = vmax.f32 %v1124, 0.0
      %1135 = vst.msk [vmem:[%s197] sm:$0xff] %vm221, %v1125
      %1136 = vst.msk [vmem:[%s197 + $0x8] sm:$0xff] %vm221, %v1126
      %1137 = vst.msk [vmem:[%s197 + $0x10] sm:$0xff] %vm221, %v1127
      %1138 = vst.msk [vmem:[%s197 + $0x18] sm:$0xff] %vm221, %v1128
      %1139 = vst.msk [vmem:[%s197 + $0x20] sm:$0xff] %vm221, %v1129
      %1140 = vst.msk [vmem:[%s197 + $0x28] sm:$0xff] %vm221, %v1130
      %1141 = vst.msk [vmem:[%s197 + $0x30] sm:$0xff] %vm221, %v1131
      %1142 = vst.msk [vmem:[%s197 + $0x38] sm:$0xff] %vm221, %v1132
      %1143 = vst.msk [vmem:[%s197 + $0x40] sm:$0xff] %vm221, %v1133
      %1144 = vst.msk [vmem:[%s197 + $0x48] sm:$0xff] %vm221, %v1134
      %p1145 = scmp.lt.s32.totalorder %s15, 1
      %s1146 = scalar_select %p1145, %s15, 1
      %s1147 = smul.addr %s1146, 10
      %s1148 = smul.addr %s1147, 8
      %s1149 = scalar_lea.vmem %s4, %s1148
      // Predicated region
      $region37: #{nonlocal_block_forward.8} parent=35 // pred_check
        %p1150 = pneg %p122
      $region38: #{nonlocal_block_forward.8} parent=35 // pred_check_branch
        %1152 = sbr.rel (%p1150) target = $region40
      $region39: #{nonlocal_block_forward.8} parent=35 // pred_region
        _
      $region40: #{nonlocal_block_forward.8} parent=35 // pred_fallthru
        _
    $region36: #{nonlocal_block_forward.8} parent=5 // pred_fallthru
      _
    %p1153 = scmp.le.s32.totalorder 2, %s10
    // Predicated region
    $region41: #{nonlocal_block_forward.8} parent=5 // pred_check
      %p1154 = pneg %p1153
    $region42: #{nonlocal_block_forward.8} parent=5 // pred_check_branch
      %1156 = sbr.rel (%p1154) target = $region44
    $region43: #{nonlocal_block_forward.8} parent=5 // pred_region
      %s1157 = ssub.s32 %s10, 2
      // Predicated region
      $region45: #{nonlocal_block_forward.8} parent=43 // pred_check
        %p1158 = pneg %p128
      $region46: #{nonlocal_block_forward.8} parent=43 // pred_check_branch
        %1160 = sbr.rel (%p1158) target = $region48
      $region47: #{nonlocal_block_forward.8} parent=43 // pred_region
        %p1161 = scmp.lt.s32.totalorder %s16, 1
        %s1162 = scalar_select %p1161, %s16, 1
        %s1163 = smul.addr %s1162, 10
        %s1164 = smul.addr %s1163, 8
        %s1165 = scalar_lea.vmem %s4, %s1164
      $region48: #{nonlocal_block_forward.8} parent=43 // pred_fallthru
        _
    $region44: #{nonlocal_block_forward.8} parent=5 // pred_fallthru
      _
  $region6: #{nonlocal_block_forward.8} parent=0 // loop_footer
    %s14 = sadd.s32 1, %s10
  $region7: #{nonlocal_block_forward.8} parent=0 // loop_footer_branch
    %9 = sbr.rel target = $region3
  $region8: #{nonlocal_block_forward.8} parent=0 // loop_exit
    _

</llo_original>
